<compile_context>
chip_gen: v7x
topology: tpu7x:2x2x1
jax: 0.10.0
libtpu: 0.0.40
codegen_flags: <defaults>
</compile_context>

<pallas_src>
import numpy as np
import jax
import jax.numpy as jnp
from jax.experimental import pallas as pl
from jax.experimental.pallas import tpu as pltpu

_BN_EPS = 1e-5


def _round_up(x, m):
    return ((x + m - 1) // m) * m


# ----------------------------------------------------------------------------
# Tile selection
# ----------------------------------------------------------------------------
def _pick_tm_convblk(HW, N):
    """M-tile for the fused convblk kernel.  Returns (TM, pool_fused).
    pool_fused=True means TM divides H*W (tiles never straddle a batch image) and M needs no
    padding, so the fused per-tile column sums give the exact per-image pooled sum."""
    M = N * HW
    if HW % 8 == 0:
        tm = 8
        for cand in range(8, min(HW, 512) + 1, 8):   # largest divisor of HW, multiple of 8
            if HW % cand == 0:
                tm = cand
        while (M // tm) < 2 and tm % 16 == 0:        # >=2 parallel tiles (v7x dual TensorCore)
            tm //= 2
        return tm, True
    # Ragged spatial size: pad M, compute the pool from feat in XLA instead.
    return min(512, _round_up(M, 8)), False


def _pick_tm_atten(HW, N):
    """Spatial tile for the attention/residual kernel (lane dim of the transposed output)."""
    if HW % 128 == 0:
        tm = 128
        for cand in range(128, min(HW, 512) + 1, 128):
            if HW % cand == 0:
                tm = cand
        while N * (HW // tm) < 2 and tm % 256 == 0:  # >=2 parallel steps (v7x)
            tm //= 2
        return tm
    return HW   # full-spatial block (block dim == full array dim is always legal)


# ----------------------------------------------------------------------------
# Pallas kernel 1: fused concat + 1x1 conv (bf16 MXU, f32 acc) + BN bias + ReLU
#                  + global-average-pool partial sums
# ----------------------------------------------------------------------------
def _convblk_kernel(a0, a1, a2, a3, w0, w1, w2, w3, b_ref, feat_ref, psum_ref):
    # Concat is fused: sum of 4 partial dots == dot of the concatenated activations.
    acc = jnp.dot(a0[...], w0[...], preferred_element_type=jnp.float32)
    acc = acc + jnp.dot(a1[...], w1[...], preferred_element_type=jnp.float32)
    acc = acc + jnp.dot(a2[...], w2[...], preferred_element_type=jnp.float32)
    acc = acc + jnp.dot(a3[...], w3[...], preferred_element_type=jnp.float32)
    acc = jnp.maximum(acc + b_ref[...], 0.0)          # folded BN bias + ReLU (scale in weights)
    feat_ref[...] = acc.astype(feat_ref.dtype)        # bf16 activation stream
    # Fused global-average-pool partial sums: per-tile column sum in f32 (XLU reduce).
    col = jnp.sum(acc, axis=0, keepdims=True)         # (1, Np)
    psum_ref[...] = jnp.broadcast_to(col, psum_ref.shape)


def convblk_fused(a_list, w_slices, bias_p, TM, num_tiles):
    """a_list: 4x (Mp, C_i) bf16; w_slices: 4x (C_i, Np) bf16 (BN-scale folded);
    bias_p: (1, Np) f32.  Returns feat (Mp, Np) bf16 and psum (num_tiles, 8, Np) f32."""
    Mp = num_tiles * TM
    Np = bias_p.shape[1]
    cins = [a.shape[1] for a in a_list]
    in_specs = ([pl.BlockSpec((TM, c), lambda i: (i, 0)) for c in cins] +
                [pl.BlockSpec((c, Np), lambda i: (0, 0)) for c in cins] +
                [pl.BlockSpec((1, Np), lambda i: (0, 0))])
    k_total = sum(cins)
    flops = 2 * Mp * k_total * Np
    bytes_acc = (Mp * k_total * 2 + k_total * Np * 2 + Np * 4
                 + Mp * Np * 2 + num_tiles * 8 * Np * 4)

    feat, psum = pl.pallas_call(
        _convblk_kernel,
        out_shape=(jax.ShapeDtypeStruct((Mp, Np), jnp.bfloat16),
                   jax.ShapeDtypeStruct((num_tiles, 8, Np), jnp.float32)),
        grid=(num_tiles,),
        in_specs=in_specs,
        out_specs=(pl.BlockSpec((TM, Np), lambda i: (i, 0)),
                   pl.BlockSpec((1, 8, Np), lambda i: (i, 0, 0))),
        compiler_params=pltpu.CompilerParams(dimension_semantics=("parallel",)),
        cost_estimate=pl.CostEstimate(flops=flops, transcendentals=0,
                                      bytes_accessed=bytes_acc),
    )(*a_list, *w_slices, bias_p)
    return feat, psum


# ----------------------------------------------------------------------------
# Pallas kernel 2: channel attention + residual + fused NHWC->NCHW transpose
#                  out[c, hw] = feat[hw, c] * (1 + atten[c])
# ----------------------------------------------------------------------------
def _atten_residual_kernel(f_ref, a_ref, o_ref):
    f = f_ref[...][0].astype(jnp.float32)      # (TM, Cp)
    scale = a_ref[...][0] + 1.0                # (1, Cp): feat*atten + feat == feat*(1+atten)
    o_ref[...] = jnp.transpose(f * scale)[None]   # (1, Cp, TM): layout transform in-kernel (XLU)


def atten_residual_nchw(feat3, atten_p, TM):
    """feat3: (N, HW, Np) bf16; atten_p: (N, 1, Np) f32 (post-sigmoid, padded).
    Returns (N, Np, HW) f32 -- already channel-major (NCHW once reshaped)."""
    N, HW, Np = feat3.shape
    flops = 2 * N * HW * Np
    bytes_acc = N * HW * Np * 2 + N * Np * 4 + N * Np * HW * 4
    return pl.pallas_call(
        _atten_residual_kernel,
        out_shape=jax.ShapeDtypeStruct((N, Np, HW), jnp.float32),
        grid=(N, HW // TM),
        in_specs=[pl.BlockSpec((1, TM, Np), lambda b, m: (b, m, 0)),
                  pl.BlockSpec((1, 1, Np), lambda b, m: (b, 0, 0))],
        out_specs=pl.BlockSpec((1, Np, TM), lambda b, m: (b, 0, m)),
        compiler_params=pltpu.CompilerParams(
            dimension_semantics=("parallel", "parallel")),
        cost_estimate=pl.CostEstimate(flops=flops, transcendentals=0,
                                      bytes_accessed=bytes_acc),
    )(feat3, atten_p)


# ----------------------------------------------------------------------------
# Parameter init (kaiming_normal_ with a=1 -> std = 1/sqrt(fan_in)) + weight pre-packing
# ----------------------------------------------------------------------------
def _kaiming_1x1(key, cout, cin):
    std = 1.0 / np.sqrt(cin)     # a=1 => gain=1; fan_in = cin*1*1
    return std * jax.random.normal(key, (cout, cin, 1, 1), jnp.float32)


def init_ffm(key, in_chan_splits, out_chan):
    """in_chan_splits: per-source channel counts (fsp, fcp_seg, fcp_depth, fcp_normal)."""
    in_chan = int(sum(in_chan_splits))
    k1, k2, k3 = jax.random.split(key, 3)
    w_blk = _kaiming_1x1(k1, out_chan, in_chan)
    w1 = _kaiming_1x1(k2, out_chan // 4, out_chan).reshape(out_chan // 4, out_chan)
    w2 = _kaiming_1x1(k3, out_chan, out_chan // 4).reshape(out_chan, out_chan // 4)

    # Eval-mode BatchNorm with default running stats: scale = 1/sqrt(1+eps), bias = 0.
    # Fold the scale into the conv weight at init -> one fewer VMEM operand / epilogue mul.
    bn_scale = 1.0 / np.sqrt(1.0 + _BN_EPS)
    Np = _round_up(out_chan, 128)
    w2d = (w_blk.reshape(out_chan, in_chan) * bn_scale).T            # (Cin, Cout), BN folded
    w_pad = jnp.pad(w2d, ((0, 0), (0, Np - out_chan))).astype(jnp.bfloat16)
    offs = np.cumsum([0] + list(in_chan_splits))
    w_slices = tuple(w_pad[int(offs[i]):int(offs[i + 1])] for i in range(4))
    bias_p = jnp.zeros((1, Np), jnp.float32)                          # folded BN bias (=0)

    return {"w_blk": w_blk, "w1": w1, "w2": w2,            # raw f32 (reference / SE-MLP)
            "w_slices": w_slices, "bias_p": bias_p}        # pre-packed bf16 kernel operands


# ----------------------------------------------------------------------------
# FeatureFusionModule forward (inputs / output in NCHW like the PyTorch module)
# ----------------------------------------------------------------------------
def ffm_forward(params, fsp, fcp_seg, fcp_depth, fcp_normal):
    inputs = (fsp, fcp_seg, fcp_depth, fcp_normal)
    N, _, H, W = fsp.shape
    HW = H * W
    M = N * HW
    Cout = params["w2"].shape[0]
    Np = params["bias_p"].shape[1]

    # NCHW -> (N*H*W, C_i) per source, cast to bf16 FIRST (halves transpose bytes); the
    # channel concat itself is fused into the matmul kernel, so `fcat` never exists.
    a_list = [jnp.transpose(x.astype(jnp.bfloat16), (0, 2, 3, 1)).reshape(M, x.shape[1])
              for x in inputs]

    TM, pool_fused = _pick_tm_convblk(HW, N)
    Mp = _round_up(M, TM)
    if Mp != M:                                   # only for ragged shapes; no-op in common case
        a_list = [jnp.pad(a, ((0, Mp - M), (0, 0))) for a in a_list]
    num_tiles = Mp // TM

    # convblk: fused concat + 1x1 conv + BN + ReLU + pooled partial sums (Pallas)
    feat, psum = convblk_fused(a_list, params["w_slices"], params["bias_p"], TM, num_tiles)

    # Finish the global average pool.
    if pool_fused:
        tiles_per_img = HW // TM
        pooled = psum[:, 0, :].reshape(N, tiles_per_img, Np).sum(axis=1) / float(HW)
    else:
        pooled = jnp.mean(feat[:M].astype(jnp.float32).reshape(N, HW, Np), axis=1)

    # Squeeze/excite 1x1 convs on (N, Cout): tiny (M == batch), stays in XLA per perf review.
    atten = pooled[:, :Cout]
    atten = jnp.maximum(atten @ params["w1"].T, 0.0)
    atten = jax.nn.sigmoid(atten @ params["w2"].T)          # (N, Cout) f32
    if Np != Cout:
        atten = jnp.pad(atten, ((0, 0), (0, Np - Cout)))
    atten_p = atten.reshape(N, 1, Np)

    # feat * atten + feat  with the NHWC->NCHW transpose fused into the kernel.
    feat3 = feat[:M].reshape(N, HW, Np)
    TMa = _pick_tm_atten(HW, N)
    out = atten_residual_nchw(feat3, atten_p, TMa)          # (N, Np, HW) f32
    if Np != Cout:
        out = out[:, :Cout, :]
    return out.reshape(N, Cout, H, W)


def ffm_reference(params, fsp, fcp_seg, fcp_depth, fcp_normal):
    """Pure-JAX f32 reference (NCHW) for correctness checking."""
    fcat = jnp.concatenate([fsp, fcp_seg, fcp_depth, fcp_normal], axis=1)
    w = params["w_blk"]
    feat = jnp.einsum("nchw,oc->nohw", fcat, w.reshape(w.shape[0], w.shape[1]))
    feat = jnp.maximum(feat / np.sqrt(1.0 + _BN_EPS), 0.0)
    atten = jnp.mean(feat, axis=(2, 3))
    atten = jnp.maximum(atten @ params["w1"].T, 0.0)
    atten = jax.nn.sigmoid(atten @ params["w2"].T)[:, :, None, None]
    return feat * atten + feat


# ----------------------------------------------------------------------------
if __name__ == "__main__":
    key = jax.random.PRNGKey(0)
    k_p, k1, k2, k3, k4 = jax.random.split(key, 5)

    N, H, W = 2, 16, 16
    c_sp, c_cp = 64, 64
    out_chan = 256

    params = init_ffm(k_p, (c_sp, c_cp, c_cp, c_cp), out_chan)
    fsp = jax.random.normal(k1, (N, c_sp, H, W), jnp.float32)
    fcp_seg = jax.random.normal(k2, (N, c_cp, H, W), jnp.float32)
    fcp_depth = jax.random.normal(k3, (N, c_cp, H, W), jnp.float32)
    fcp_normal = jax.random.normal(k4, (N, c_cp, H, W), jnp.float32)

    fwd = jax.jit(ffm_forward)
    out = jax.block_until_ready(fwd(params, fsp, fcp_seg, fcp_depth, fcp_normal))
    assert out.shape == (N, out_chan, H, W), out.shape

    ref = jax.block_until_ready(ffm_reference(params, fsp, fcp_seg, fcp_depth, fcp_normal))
    # bf16 activations/weights and bf16 feat storage -> allow a few bf16 ulps (rel) + small atol.
    np.testing.assert_allclose(np.asarray(out), np.asarray(ref), atol=4e-2, rtol=4e-2)

    print("KERNEL_OK")
</pallas_src>

<mosaic_0001>
module attributes {stable_mosaic.version = 11 : i64} {
  func.func @_convblk_kernel(%arg0: i32, %arg1: memref<256x64xbf16, #tpu.memory_space<vmem>>, %arg2: memref<256x64xbf16, #tpu.memory_space<vmem>>, %arg3: memref<256x64xbf16, #tpu.memory_space<vmem>>, %arg4: memref<256x64xbf16, #tpu.memory_space<vmem>>, %arg5: memref<64x256xbf16, #tpu.memory_space<vmem>>, %arg6: memref<64x256xbf16, #tpu.memory_space<vmem>>, %arg7: memref<64x256xbf16, #tpu.memory_space<vmem>>, %arg8: memref<64x256xbf16, #tpu.memory_space<vmem>>, %arg9: memref<1x256xf32, #tpu.memory_space<vmem>>, %arg10: memref<256x256xbf16, #tpu.memory_space<vmem>>, %arg11: memref<1x8x256xf32, #tpu.memory_space<vmem>>) attributes {dimension_semantics = [#tpu.dimension_semantics<parallel>], iteration_bounds = array<i64: 2>, scalar_prefetch = 0 : i64, scratch_operands = 0 : i64, tpu.core_type = #tpu.core_type<tc>, window_params = [{transform_indices = @transform_0, window_bounds = array<i64: 256, 64>}, {transform_indices = @transform_1, window_bounds = array<i64: 256, 64>}, {transform_indices = @transform_2, window_bounds = array<i64: 256, 64>}, {transform_indices = @transform_3, window_bounds = array<i64: 256, 64>}, {pipeline_mode = #tpu.pipeline_mode<synchronous>, transform_indices = @transform_4, window_bounds = array<i64: 64, 256>}, {pipeline_mode = #tpu.pipeline_mode<synchronous>, transform_indices = @transform_5, window_bounds = array<i64: 64, 256>}, {pipeline_mode = #tpu.pipeline_mode<synchronous>, transform_indices = @transform_6, window_bounds = array<i64: 64, 256>}, {pipeline_mode = #tpu.pipeline_mode<synchronous>, transform_indices = @transform_7, window_bounds = array<i64: 64, 256>}, {pipeline_mode = #tpu.pipeline_mode<synchronous>, transform_indices = @transform_8, window_bounds = array<i64: 1, 256>}, {transform_indices = @transform_9, window_bounds = array<i64: 256, 256>}, {transform_indices = @transform_10, window_bounds = array<i64: 1, 8, 256>}]} {
    %c0 = arith.constant 0 : index
    %c0_0 = arith.constant 0 : index
    %0 = vector.load %arg1[%c0, %c0_0] : memref<256x64xbf16, #tpu.memory_space<vmem>>, vector<256x64xbf16>
    %c0_1 = arith.constant 0 : index
    %c0_2 = arith.constant 0 : index
    %1 = vector.load %arg5[%c0_1, %c0_2] : memref<64x256xbf16, #tpu.memory_space<vmem>>, vector<64x256xbf16>
    %cst = arith.constant dense<0.000000e+00> : vector<256x256xf32>
    %2 = tpu.matmul %0, %1, %cst {dimension_numbers = #tpu.dot_dimension_numbers<[1], [0], [0], [1], [0, 0, 1, 1], [], []>} : vector<256x64xbf16>, vector<64x256xbf16>, vector<256x256xf32> -> vector<256x256xf32>
    %c0_3 = arith.constant 0 : index
    %c0_4 = arith.constant 0 : index
    %3 = vector.load %arg2[%c0_3, %c0_4] : memref<256x64xbf16, #tpu.memory_space<vmem>>, vector<256x64xbf16>
    %c0_5 = arith.constant 0 : index
    %c0_6 = arith.constant 0 : index
    %4 = vector.load %arg6[%c0_5, %c0_6] : memref<64x256xbf16, #tpu.memory_space<vmem>>, vector<64x256xbf16>
    %cst_7 = arith.constant dense<0.000000e+00> : vector<256x256xf32>
    %5 = tpu.matmul %3, %4, %cst_7 {dimension_numbers = #tpu.dot_dimension_numbers<[1], [0], [0], [1], [0, 0, 1, 1], [], []>} : vector<256x64xbf16>, vector<64x256xbf16>, vector<256x256xf32> -> vector<256x256xf32>
    %6 = arith.addf %2, %5 : vector<256x256xf32>
    %c0_8 = arith.constant 0 : index
    %c0_9 = arith.constant 0 : index
    %7 = vector.load %arg3[%c0_8, %c0_9] : memref<256x64xbf16, #tpu.memory_space<vmem>>, vector<256x64xbf16>
    %c0_10 = arith.constant 0 : index
    %c0_11 = arith.constant 0 : index
    %8 = vector.load %arg7[%c0_10, %c0_11] : memref<64x256xbf16, #tpu.memory_space<vmem>>, vector<64x256xbf16>
    %cst_12 = arith.constant dense<0.000000e+00> : vector<256x256xf32>
    %9 = tpu.matmul %7, %8, %cst_12 {dimension_numbers = #tpu.dot_dimension_numbers<[1], [0], [0], [1], [0, 0, 1, 1], [], []>} : vector<256x64xbf16>, vector<64x256xbf16>, vector<256x256xf32> -> vector<256x256xf32>
    %10 = arith.addf %6, %9 : vector<256x256xf32>
    %c0_13 = arith.constant 0 : index
    %c0_14 = arith.constant 0 : index
    %11 = vector.load %arg4[%c0_13, %c0_14] : memref<256x64xbf16, #tpu.memory_space<vmem>>, vector<256x64xbf16>
    %c0_15 = arith.constant 0 : index
    %c0_16 = arith.constant 0 : index
    %12 = vector.load %arg8[%c0_15, %c0_16] : memref<64x256xbf16, #tpu.memory_space<vmem>>, vector<64x256xbf16>
    %cst_17 = arith.constant dense<0.000000e+00> : vector<256x256xf32>
    %13 = tpu.matmul %11, %12, %cst_17 {dimension_numbers = #tpu.dot_dimension_numbers<[1], [0], [0], [1], [0, 0, 1, 1], [], []>} : vector<256x64xbf16>, vector<64x256xbf16>, vector<256x256xf32> -> vector<256x256xf32>
    %14 = arith.addf %10, %13 : vector<256x256xf32>
    %c0_18 = arith.constant 0 : index
    %c0_19 = arith.constant 0 : index
    %15 = vector.load %arg9[%c0_18, %c0_19] : memref<1x256xf32, #tpu.memory_space<vmem>>, vector<1x256xf32>
    %16 = vector.broadcast %15 : vector<1x256xf32> to vector<256x256xf32>
    %17 = arith.addf %14, %16 : vector<256x256xf32>
    %cst_20 = arith.constant 0.000000e+00 : f32
    %18 = vector.broadcast %cst_20 : f32 to vector<256x256xf32>
    %19 = arith.maximumf %17, %18 : vector<256x256xf32>
    %20 = arith.truncf %19 : vector<256x256xf32> to vector<256x256xbf16>
    %c0_21 = arith.constant 0 : index
    %c0_22 = arith.constant 0 : index
    %21 = vector.load %arg10[%c0_21, %c0_22] : memref<256x256xbf16, #tpu.memory_space<vmem>>, vector<256x256xbf16>
    tpu.vector_store %arg10[%c0_21, %c0_22], %20 {strides = array<i32>} : memref<256x256xbf16, #tpu.memory_space<vmem>>, vector<256x256xbf16>,
    %cst_23 = arith.constant dense<0.000000e+00> : vector<256xf32>
    %22 = vector.multi_reduction <add>, %19, %cst_23 [0] : vector<256x256xf32> to vector<256xf32>
    %23 = vector.shape_cast %22 : vector<256xf32> to vector<1x256xf32>
    %24 = vector.shape_cast %23 : vector<1x256xf32> to vector<1x1x256xf32>
    %25 = vector.broadcast %24 : vector<1x1x256xf32> to vector<1x8x256xf32>
    %c0_24 = arith.constant 0 : index
    %c0_25 = arith.constant 0 : index
    %c0_26 = arith.constant 0 : index
    %26 = vector.load %arg11[%c0_24, %c0_25, %c0_26] : memref<1x8x256xf32, #tpu.memory_space<vmem>>, vector<1x8x256xf32>
    tpu.vector_store %arg11[%c0_24, %c0_25, %c0_26], %25 {strides = array<i32>} : memref<1x8x256xf32, #tpu.memory_space<vmem>>, vector<1x8x256xf32>,
    return
  }
  func.func @transform_0(%arg0: i32) -> (i32, i32) {
    %c0_i32 = arith.constant 0 : i32
    %c0_i32_0 = arith.constant 0 : i32
    return %arg0, %c0_i32 : i32, i32
  }
  func.func @transform_1(%arg0: i32) -> (i32, i32) {
    %c0_i32 = arith.constant 0 : i32
    %c0_i32_0 = arith.constant 0 : i32
    return %arg0, %c0_i32 : i32, i32
  }
  func.func @transform_2(%arg0: i32) -> (i32, i32) {
    %c0_i32 = arith.constant 0 : i32
    %c0_i32_0 = arith.constant 0 : i32
    return %arg0, %c0_i32 : i32, i32
  }
  func.func @transform_3(%arg0: i32) -> (i32, i32) {
    %c0_i32 = arith.constant 0 : i32
    %c0_i32_0 = arith.constant 0 : i32
    return %arg0, %c0_i32 : i32, i32
  }
  func.func @transform_4(%arg0: i32) -> (i32, i32) {
    %c0_i32 = arith.constant 0 : i32
    %c0_i32_0 = arith.constant 0 : i32
    %c0_i32_1 = arith.constant 0 : i32
    return %c0_i32, %c0_i32_0 : i32, i32
  }
  func.func @transform_5(%arg0: i32) -> (i32, i32) {
    %c0_i32 = arith.constant 0 : i32
    %c0_i32_0 = arith.constant 0 : i32
    %c0_i32_1 = arith.constant 0 : i32
    return %c0_i32, %c0_i32_0 : i32, i32
  }
  func.func @transform_6(%arg0: i32) -> (i32, i32) {
    %c0_i32 = arith.constant 0 : i32
    %c0_i32_0 = arith.constant 0 : i32
    %c0_i32_1 = arith.constant 0 : i32
    return %c0_i32, %c0_i32_0 : i32, i32
  }
  func.func @transform_7(%arg0: i32) -> (i32, i32) {
    %c0_i32 = arith.constant 0 : i32
    %c0_i32_0 = arith.constant 0 : i32
    %c0_i32_1 = arith.constant 0 : i32
    return %c0_i32, %c0_i32_0 : i32, i32
  }
  func.func @transform_8(%arg0: i32) -> (i32, i32) {
    %c0_i32 = arith.constant 0 : i32
    %c0_i32_0 = arith.constant 0 : i32
    %c0_i32_1 = arith.constant 0 : i32
    return %c0_i32, %c0_i32_0 : i32, i32
  }
  func.func @transform_9(%arg0: i32) -> (i32, i32) {
    %c0_i32 = arith.constant 0 : i32
    %c0_i32_0 = arith.constant 0 : i32
    return %arg0, %c0_i32 : i32, i32
  }
  func.func @transform_10(%arg0: i32) -> (i32, i32, i32) {
    %c0_i32 = arith.constant 0 : i32
    %c0_i32_0 = arith.constant 0 : i32
    %c0_i32_1 = arith.constant 0 : i32
    return %arg0, %c0_i32, %c0_i32_0 : i32, i32, i32
  }
}

module attributes {stable_mosaic.version = 11 : i64} {
  func.func @_atten_residual_kernel(%arg0: i32, %arg1: i32, %arg2: memref<1x256x256xbf16, #tpu.memory_space<vmem>>, %arg3: memref<1x1x256xf32, #tpu.memory_space<vmem>>, %arg4: memref<1x256x256xf32, #tpu.memory_space<vmem>>) attributes {dimension_semantics = [#tpu.dimension_semantics<parallel>, #tpu.dimension_semantics<parallel>], iteration_bounds = array<i64: 2, 1>, scalar_prefetch = 0 : i64, scratch_operands = 0 : i64, tpu.core_type = #tpu.core_type<tc>, window_params = [{transform_indices = @transform_0, window_bounds = array<i64: 1, 256, 256>}, {transform_indices = @transform_1, window_bounds = array<i64: 1, 1, 256>}, {transform_indices = @transform_2, window_bounds = array<i64: 1, 256, 256>}]} {
    %c0 = arith.constant 0 : index
    %c0_0 = arith.constant 0 : index
    %c0_1 = arith.constant 0 : index
    %0 = vector.load %arg2[%c0, %c0_0, %c0_1] : memref<1x256x256xbf16, #tpu.memory_space<vmem>>, vector<1x256x256xbf16>
    %1 = vector.shape_cast %0 : vector<1x256x256xbf16> to vector<256x256xbf16>
    %2 = arith.extf %1 : vector<256x256xbf16> to vector<256x256xf32>
    %c0_2 = arith.constant 0 : index
    %c0_3 = arith.constant 0 : index
    %c0_4 = arith.constant 0 : index
    %3 = vector.load %arg3[%c0_2, %c0_3, %c0_4] : memref<1x1x256xf32, #tpu.memory_space<vmem>>, vector<1x1x256xf32>
    %4 = vector.shape_cast %3 : vector<1x1x256xf32> to vector<1x256xf32>
    %cst = arith.constant 1.000000e+00 : f32
    %5 = vector.broadcast %cst : f32 to vector<1x256xf32>
    %6 = arith.addf %4, %5 : vector<1x256xf32>
    %7 = vector.broadcast %6 : vector<1x256xf32> to vector<256x256xf32>
    %8 = arith.mulf %2, %7 : vector<256x256xf32>
    %9 = tpu.transpose %8, [1, 0] : vector<256x256xf32> -> vector<256x256xf32>
    %10 = vector.shape_cast %9 : vector<256x256xf32> to vector<1x256x256xf32>
    %c0_5 = arith.constant 0 : index
    %c0_6 = arith.constant 0 : index
    %c0_7 = arith.constant 0 : index
    %11 = vector.load %arg4[%c0_5, %c0_6, %c0_7] : memref<1x256x256xf32, #tpu.memory_space<vmem>>, vector<1x256x256xf32>
    tpu.vector_store %arg4[%c0_5, %c0_6, %c0_7], %10 {strides = array<i32>} : memref<1x256x256xf32, #tpu.memory_space<vmem>>, vector<1x256x256xf32>,
    return
  }
  func.func @transform_0(%arg0: i32, %arg1: i32) -> (i32, i32, i32) {
    %c0_i32 = arith.constant 0 : i32
    %c0_i32_0 = arith.constant 0 : i32
    return %arg0, %arg1, %c0_i32 : i32, i32, i32
  }
  func.func @transform_1(%arg0: i32, %arg1: i32) -> (i32, i32, i32) {
    %c0_i32 = arith.constant 0 : i32
    %c0_i32_0 = arith.constant 0 : i32
    %c0_i32_1 = arith.constant 0 : i32
    return %arg0, %c0_i32, %c0_i32_0 : i32, i32, i32
  }
  func.func @transform_2(%arg0: i32, %arg1: i32) -> (i32, i32, i32) {
    %c0_i32 = arith.constant 0 : i32
    %c0_i32_0 = arith.constant 0 : i32
    return %arg0, %c0_i32, %arg1 : i32, i32, i32
  }
}

</mosaic_0001>

<llo_original>
// kernel: ffm_forward.3
$region0: #{ffm_forward.3}
  #allocation0 [shape = 'u32[]', space=smem, size = 0x4, offset = 0x4, fixed_abs, tag = 'smem constant byte address 0x4 - core index']
  #allocation1 [shape = 'u32[144,128]{1,0:T(1,128)}', space=vmem, size = 0x12000, scoped, tag = 'internal scratch']
  %s0 = inlined_call_operand.vmem [shape: bf16[2,256,256], index: 0, kind: input, shape index: {}]
  %s1 = inlined_call_operand.vmem [shape: f32[2,1,256], index: 1, kind: input, shape index: {}]
  %s2 = inlined_call_operand.vmem [shape: f32[2,256,256], index: 2, kind: output, shape index: {}]
  %s3 = sld [smem:[#allocation0]]
  $region41: #{ffm_forward.3} parent=0
    _
  %s5 = ssub.s32 1, %s3
  %s6 = scalar_select 0, %s5, %s3
  loop: start=0, step=1, limit=4
  $region2: #{ffm_forward.3} parent=0 // loop_pre_header
    _
  $region3: #{ffm_forward.3} parent=0 // loop_header
    %s8 = sphi 0, %s12
    %p9 = scmp.ge.s32.totalorder %s8, 4
    %s15 = sphi 0, %s27
    %s16 = sphi 0, %s23
    %s17 = sphi 0, %s15
    %s18 = sphi 0, %s16
    %s19 = sphi 0, %s17
    %s20 = sphi 0, %s18
    %s32 = sphi 0, %s34
    %s35 = sphi 0, %s32
    %s36 = sphi 0, %s35
    %s52 = sphi 0, %s36
    %s58 = sphi 0, %s60
    %s61 = sphi 0, %s58
    %s62 = sphi 0, %s61
    %s78 = sphi 0, %s62
    %s86 = sphi 0, %s88
    %s89 = sphi 0, %s86
    %s90 = sphi 0, %s89
    %s106 = sphi 0, %s90
  $region4: #{ffm_forward.3} parent=0 // loop_header_branch
    %11 = sbr.rel (%p9) target = $region8
  $region5: #{ffm_forward.3} parent=0 // loop_body
    %s13 = ssub.s32 %s8, 1
    %s14 = ssub.s32 %s8, 2
    %s21 = sadd.s32 1, %s16
    %p22 = scmp.ge.s32.totalorder %s21, 1
    %s23 = scalar_select %p22, 0, %s21
    %s24 = sadd.s32 1, %s15
    %s25 = scalar_select %p22, %s24, %s15
    %p26 = scmp.ge.s32.totalorder %s25, 2
    %s27 = scalar_select %p26, 0, %s25
    %s28 = ssub.s32 %s15, %s27
    %s29 = ssub.s32 %s16, %s23
    %s30 = sor.u32 %s28, %s29
    %p31 = scmp.eq.s32.totalorder %s30, 0
    %s33 = sadd.s32 %s32, 1
    %s34 = scalar_select %p31, %s32, %s33
    %p37 = pneg %p31
    %p38 = scmp.eq.s32.totalorder %s8, 1
    %p39 = por %p37, %p38
    %p40 = scmp.ne.s32.totalorder %s32, %s35
    %p41 = scmp.eq.s32.totalorder %s8, 0
    %p42 = por %p40, %p41
    %p43 = scmp.ne.s32.totalorder %s32, %s35
    %p44 = scmp.eq.s32.totalorder %s13, 1
    %p45 = por %p43, %p44
    %p46 = scmp.ne.s32.totalorder %s35, %s36
    %p47 = scmp.eq.s32.totalorder %s13, 0
    %p48 = por %p46, %p47
    %p49 = scmp.ne.s32.totalorder %s35, %s36
    %p50 = scmp.eq.s32.totalorder %s14, 1
    %p51 = por %p49, %p50
    %p53 = scmp.ne.s32.totalorder %s36, %s52
    %p54 = scmp.eq.s32.totalorder %s14, 0
    %p55 = por %p53, %p54
    %s56 = ssub.s32 %s15, %s27
    %p57 = scmp.eq.s32.totalorder %s56, 0
    %s59 = sadd.s32 %s58, 1
    %s60 = scalar_select %p57, %s58, %s59
    %p63 = pneg %p57
    %p64 = scmp.eq.s32.totalorder %s8, 1
    %p65 = por %p63, %p64
    %p66 = scmp.ne.s32.totalorder %s58, %s61
    %p67 = scmp.eq.s32.totalorder %s8, 0
    %p68 = por %p66, %p67
    %p69 = scmp.ne.s32.totalorder %s58, %s61
    %p70 = scmp.eq.s32.totalorder %s13, 1
    %p71 = por %p69, %p70
    %p72 = scmp.ne.s32.totalorder %s61, %s62
    %p73 = scmp.eq.s32.totalorder %s13, 0
    %p74 = por %p72, %p73
    %p75 = scmp.ne.s32.totalorder %s61, %s62
    %p76 = scmp.eq.s32.totalorder %s14, 1
    %p77 = por %p75, %p76
    %p79 = scmp.ne.s32.totalorder %s62, %s78
    %p80 = scmp.eq.s32.totalorder %s14, 0
    %p81 = por %p79, %p80
    %s82 = ssub.s32 %s15, %s27
    %s83 = ssub.s32 %s16, %s23
    %s84 = sor.u32 %s82, %s83
    %p85 = scmp.eq.s32.totalorder %s84, 0
    %s87 = sadd.s32 %s86, 1
    %s88 = scalar_select %p85, %s86, %s87
    %p91 = pneg %p85
    %p92 = scmp.eq.s32.totalorder %s8, 1
    %p93 = por %p91, %p92
    %p94 = scmp.ne.s32.totalorder %s86, %s89
    %p95 = scmp.eq.s32.totalorder %s8, 0
    %p96 = por %p94, %p95
    %p97 = scmp.ne.s32.totalorder %s86, %s89
    %p98 = scmp.eq.s32.totalorder %s13, 1
    %p99 = por %p97, %p98
    %p100 = scmp.ne.s32.totalorder %s89, %s90
    %p101 = scmp.eq.s32.totalorder %s13, 0
    %p102 = por %p100, %p101
    %p103 = scmp.ne.s32.totalorder %s89, %s90
    %p104 = scmp.eq.s32.totalorder %s14, 1
    %p105 = por %p103, %p104
    %p107 = scmp.ne.s32.totalorder %s90, %s106
    %p108 = scmp.eq.s32.totalorder %s14, 0
    %p109 = por %p107, %p108
    %p110 = scmp.le.s32.totalorder 1, %s8
    %p111 = scmp.lt.s32.totalorder %s8, 3
    %p112 = pnand %p110, %p111
    %p113 = pneg %p112
    // Predicated region
    $region9: #{ffm_forward.3} parent=5 // pred_check
      _
    $region10: #{ffm_forward.3} parent=5 // pred_check_branch
      %115 = sbr.rel (%p112) target = $region12
    $region11: #{ffm_forward.3} parent=5 // pred_region
      %s116 = ssub.s32 %s8, 1
    $region12: #{ffm_forward.3} parent=5 // pred_fallthru
      _
    %p117 = scmp.lt.s32.totalorder %s8, 2
    // Predicated region
    $region13: #{ffm_forward.3} parent=5 // pred_check
      %p118 = pneg %p117
    $region14: #{ffm_forward.3} parent=5 // pred_check_branch
      %120 = sbr.rel (%p118) target = $region16
    $region15: #{ffm_forward.3} parent=5 // pred_region
      // Predicated region
      $region17: #{ffm_forward.3} parent=15 // pred_check
        %p121 = pneg %p42
      $region18: #{ffm_forward.3} parent=15 // pred_check_branch
        %123 = sbr.rel (%p121) target = $region20
      $region19: #{ffm_forward.3} parent=15 // pred_region
        %s124 = smul.u32 32, %s16
        %p125 = scmp.lt.s32.totalorder %s15, 1
        %s126 = scalar_select %p125, %s15, 1
        %p127 = scmp.lt.s32.totalorder %s124, 31
        %s128 = scalar_select %p127, %s124, 31
        %s129 = smul.addr %s128, 2
        %s130 = smul.addr %s126, 64
        %s131 = sadd.s32 %s129, %s130
        %s132 = smul.addr %s131, 4
        %s133 = scalar_lea.vmem %s0, %s132
        %s134 = smul.u32 32, %s16
      $region20: #{ffm_forward.3} parent=15 // pred_fallthru
        _
      // Predicated region
      $region21: #{ffm_forward.3} parent=15 // pred_check
        %p135 = pneg %p68
      $region22: #{ffm_forward.3} parent=15 // pred_check_branch
        %137 = sbr.rel (%p135) target = $region24
      $region23: #{ffm_forward.3} parent=15 // pred_region
        %p138 = scmp.lt.s32.totalorder %s15, 1
        %s139 = scalar_select %p138, %s15, 1
        %s140 = smul.addr %s139, 2
        %s141 = scalar_lea.vmem %s1, %s140
      $region24: #{ffm_forward.3} parent=15 // pred_fallthru
        _
    $region16: #{ffm_forward.3} parent=5 // pred_fallthru
      _
    %p142 = scmp.le.s32.totalorder 1, %s8
    %p143 = scmp.lt.s32.totalorder %s8, 3
    %p144 = pnand %p142, %p143
    %p145 = pneg %p144
    // Predicated region
    $region25: #{ffm_forward.3} parent=5 // pred_check
      _
    $region26: #{ffm_forward.3} parent=5 // pred_check_branch
      %147 = sbr.rel (%p144) target = $region28
    $region27: #{ffm_forward.3} parent=5 // pred_region
      %s148 = ssub.s32 %s8, 1
      %s149 = smul.u32 32, %s18
      %p150 = scmp.lt.s32.totalorder %s17, 1
      %s151 = scalar_select %p150, %s17, 1
      %p152 = scmp.lt.s32.totalorder %s149, 31
      %s153 = scalar_select %p152, %s149, 31
      %s154 = smul.addr %s153, 2
      %s155 = smul.addr %s151, 64
      %s156 = sadd.s32 %s154, %s155
      %s157 = smul.addr %s156, 4
      %s158 = scalar_lea.vmem %s0, %s157
      %p159 = pneg %p48
      %p160 = pneg %p45
      %p161 = scmp.lt.s32.totalorder %s17, 1
      %s162 = scalar_select %p161, %s17, 1
      %s163 = smul.addr %s162, 2
      %s164 = scalar_lea.vmem %s1, %s163
      %p165 = pneg %p74
      %p166 = pneg %p71
      %p167 = pneg %p102
      %p168 = pneg %p99
      %s169 = smul.u32 2, %s18
      %p170 = scmp.lt.s32.totalorder %s17, 1
      %s171 = scalar_select %p170, %s17, 1
      %p172 = scmp.lt.s32.totalorder %s169, 1
      %s173 = scalar_select %p172, %s169, 1
      %s174 = smul.addr %s171, 64
      %s175 = sadd.s32 %s173, %s174
      %s176 = smul.addr %s175, 8
      %s177 = scalar_lea.vmem %s2, %s176
      %s178 = smul.u32 32, %s18
      %p179 = scmp.lt.s32.totalorder %s17, 1
      %s180 = scalar_select %p179, %s17, 1
      %p181 = scmp.lt.s32.totalorder %s178, 31
      %s182 = scalar_select %p181, %s178, 31
      %s183 = smul.addr %s182, 2
      %s184 = smul.addr %s180, 64
      %s185 = sadd.s32 %s183, %s184
      %s186 = smul.addr %s185, 4
      %s187 = scalar_lea.vmem %s0, %s186
      %s188 = smul.u32 32, %s18
      %p189 = scmp.lt.s32.totalorder %s17, 1
      %s190 = scalar_select %p189, %s17, 1
      %s191 = smul.addr %s190, 2
      %s192 = scalar_lea.vmem %s1, %s191
      %s193 = smul.u32 2, %s18
      %p194 = scmp.lt.s32.totalorder %s17, 1
      %s195 = scalar_select %p194, %s17, 1
      %p196 = scmp.lt.s32.totalorder %s193, 1
      %s197 = scalar_select %p196, %s193, 1
      %s198 = smul.addr %s195, 64
      %s199 = sadd.s32 %s197, %s198
      %s200 = smul.addr %s199, 8
      %s201 = scalar_lea.vmem %s2, %s200
      %s202 = smul.u32 2, %s18
      %v203 = vld [vmem:[%s187] sm:$0xff]
      %v204 = vld [vmem:[%s187 + $0x8] sm:$0xff]
      %v205 = vld [vmem:[%s187 + $0x10] sm:$0xff]
      %v206 = vld [vmem:[%s187 + $0x18] sm:$0xff]
      %v207 = vld [vmem:[%s187 + $0x20] sm:$0xff]
      %v208 = vld [vmem:[%s187 + $0x28] sm:$0xff]
      %v209 = vld [vmem:[%s187 + $0x30] sm:$0xff]
      %v210 = vld [vmem:[%s187 + $0x38] sm:$0xff]
      %v211 = vld [vmem:[%s187 + $0x40] sm:$0xff]
      %v212 = vld [vmem:[%s187 + $0x48] sm:$0xff]
      %v213 = vld [vmem:[%s187 + $0x50] sm:$0xff]
      %v214 = vld [vmem:[%s187 + $0x58] sm:$0xff]
      %v215 = vld [vmem:[%s187 + $0x60] sm:$0xff]
      %v216 = vld [vmem:[%s187 + $0x68] sm:$0xff]
      %v217 = vld [vmem:[%s187 + $0x70] sm:$0xff]
      %v218 = vld [vmem:[%s187 + $0x78] sm:$0xff]
      %v219 = vld [vmem:[%s187 + $0x80] sm:$0xff]
      %v220 = vld [vmem:[%s187 + $0x88] sm:$0xff]
      %v221 = vld [vmem:[%s187 + $0x90] sm:$0xff]
      %v222 = vld [vmem:[%s187 + $0x98] sm:$0xff]
      %v223 = vld [vmem:[%s187 + $0xa0] sm:$0xff]
      %v224 = vld [vmem:[%s187 + $0xa8] sm:$0xff]
      %v225 = vld [vmem:[%s187 + $0xb0] sm:$0xff]
      %v226 = vld [vmem:[%s187 + $0xb8] sm:$0xff]
      %v227 = vld [vmem:[%s187 + $0xc0] sm:$0xff]
      %v228 = vld [vmem:[%s187 + $0xc8] sm:$0xff]
      %v229 = vld [vmem:[%s187 + $0xd0] sm:$0xff]
      %v230 = vld [vmem:[%s187 + $0xd8] sm:$0xff]
      %v231 = vld [vmem:[%s187 + $0xe0] sm:$0xff]
      %v232 = vld [vmem:[%s187 + $0xe8] sm:$0xff]
      %v233 = vld [vmem:[%s187 + $0xf0] sm:$0xff]
      %v234 = vld [vmem:[%s187 + $0xf8] sm:$0xff]
      %v235 = vunpack.c.l.bf16 %v203
      %v236 = vunpack.c.h.bf16 %v203
      %v237 = vunpack.c.l.bf16 %v204
      %v238 = vunpack.c.h.bf16 %v204
      %v239 = vunpack.c.l.bf16 %v205
      %v240 = vunpack.c.h.bf16 %v205
      %v241 = vunpack.c.l.bf16 %v206
      %v242 = vunpack.c.h.bf16 %v206
      %v243 = vunpack.c.l.bf16 %v207
      %v244 = vunpack.c.h.bf16 %v207
      %v245 = vunpack.c.l.bf16 %v208
      %v246 = vunpack.c.h.bf16 %v208
      %v247 = vunpack.c.l.bf16 %v209
      %v248 = vunpack.c.h.bf16 %v209
      %v249 = vunpack.c.l.bf16 %v210
      %v250 = vunpack.c.h.bf16 %v210
      %v251 = vunpack.c.l.bf16 %v211
      %v252 = vunpack.c.h.bf16 %v211
      %v253 = vunpack.c.l.bf16 %v212
      %v254 = vunpack.c.h.bf16 %v212
      %v255 = vunpack.c.l.bf16 %v213
      %v256 = vunpack.c.h.bf16 %v213
      %v257 = vunpack.c.l.bf16 %v214
      %v258 = vunpack.c.h.bf16 %v214
      %v259 = vunpack.c.l.bf16 %v215
      %v260 = vunpack.c.h.bf16 %v215
      %v261 = vunpack.c.l.bf16 %v216
      %v262 = vunpack.c.h.bf16 %v216
      %v263 = vunpack.c.l.bf16 %v217
      %v264 = vunpack.c.h.bf16 %v217
      %v265 = vunpack.c.l.bf16 %v218
      %v266 = vunpack.c.h.bf16 %v218
      %v267 = vunpack.c.l.bf16 %v219
      %v268 = vunpack.c.h.bf16 %v219
      %v269 = vunpack.c.l.bf16 %v220
      %v270 = vunpack.c.h.bf16 %v220
      %v271 = vunpack.c.l.bf16 %v221
      %v272 = vunpack.c.h.bf16 %v221
      %v273 = vunpack.c.l.bf16 %v222
      %v274 = vunpack.c.h.bf16 %v222
      %v275 = vunpack.c.l.bf16 %v223
      %v276 = vunpack.c.h.bf16 %v223
      %v277 = vunpack.c.l.bf16 %v224
      %v278 = vunpack.c.h.bf16 %v224
      %v279 = vunpack.c.l.bf16 %v225
      %v280 = vunpack.c.h.bf16 %v225
      %v281 = vunpack.c.l.bf16 %v226
      %v282 = vunpack.c.h.bf16 %v226
      %v283 = vunpack.c.l.bf16 %v227
      %v284 = vunpack.c.h.bf16 %v227
      %v285 = vunpack.c.l.bf16 %v228
      %v286 = vunpack.c.h.bf16 %v228
      %v287 = vunpack.c.l.bf16 %v229
      %v288 = vunpack.c.h.bf16 %v229
      %v289 = vunpack.c.l.bf16 %v230
      %v290 = vunpack.c.h.bf16 %v230
      %v291 = vunpack.c.l.bf16 %v231
      %v292 = vunpack.c.h.bf16 %v231
      %v293 = vunpack.c.l.bf16 %v232
      %v294 = vunpack.c.h.bf16 %v232
      %v295 = vunpack.c.l.bf16 %v233
      %v296 = vunpack.c.h.bf16 %v233
      %v297 = vunpack.c.l.bf16 %v234
      %v298 = vunpack.c.h.bf16 %v234
      %v299 = vld [vmem:[%s192] sm:$0x3]
      %v300 = vadd.f32 %v299, 1.0
      %v302 = vlaneseq
      %v303 = vshrl.u32 %v302, 7
      %v304 = vsub.s32 0, %v303
      %v305 = vrot.slane %v300, %v304
      %v306 = vlaneseq
      %v307 = vshrl.u32 %v306, 7
      %v308 = vsub.s32 1, %v307
      %v309 = vrot.slane %v300, %v308
      %v312 = vmul.f32 %v235, %v305
      %v313 = vmul.f32 %v236, %v309
      %v314 = vmul.f32 %v237, %v305
      %v315 = vmul.f32 %v238, %v309
      %v316 = vmul.f32 %v239, %v305
      %v317 = vmul.f32 %v240, %v309
      %v318 = vmul.f32 %v241, %v305
      %v319 = vmul.f32 %v242, %v309
      %v320 = vmul.f32 %v243, %v305
      %v321 = vmul.f32 %v244, %v309
      %v322 = vmul.f32 %v245, %v305
      %v323 = vmul.f32 %v246, %v309
      %v324 = vmul.f32 %v247, %v305
      %v325 = vmul.f32 %v248, %v309
      %v326 = vmul.f32 %v249, %v305
      %v327 = vmul.f32 %v250, %v309
      %v328 = vmul.f32 %v251, %v305
      %v329 = vmul.f32 %v252, %v309
      %v330 = vmul.f32 %v253, %v305
      %v331 = vmul.f32 %v254, %v309
      %v332 = vmul.f32 %v255, %v305
      %v333 = vmul.f32 %v256, %v309
      %v334 = vmul.f32 %v257, %v305
      %v335 = vmul.f32 %v258, %v309
      %v336 = vmul.f32 %v259, %v305
      %v337 = vmul.f32 %v260, %v309
      %v338 = vmul.f32 %v261, %v305
      %v339 = vmul.f32 %v262, %v309
      %v340 = vmul.f32 %v263, %v305
      %v341 = vmul.f32 %v264, %v309
      %v342 = vmul.f32 %v265, %v305
      %v343 = vmul.f32 %v266, %v309
      %v344 = vmul.f32 %v267, %v305
      %v345 = vmul.f32 %v268, %v309
      %v346 = vmul.f32 %v269, %v305
      %v347 = vmul.f32 %v270, %v309
      %v348 = vmul.f32 %v271, %v305
      %v349 = vmul.f32 %v272, %v309
      %v350 = vmul.f32 %v273, %v305
      %v351 = vmul.f32 %v274, %v309
      %v352 = vmul.f32 %v275, %v305
      %v353 = vmul.f32 %v276, %v309
      %v354 = vmul.f32 %v277, %v305
      %v355 = vmul.f32 %v278, %v309
      %v356 = vmul.f32 %v279, %v305
      %v357 = vmul.f32 %v280, %v309
      %v358 = vmul.f32 %v281, %v305
      %v359 = vmul.f32 %v282, %v309
      %v360 = vmul.f32 %v283, %v305
      %v361 = vmul.f32 %v284, %v309
      %v362 = vmul.f32 %v285, %v305
      %v363 = vmul.f32 %v286, %v309
      %v364 = vmul.f32 %v287, %v305
      %v365 = vmul.f32 %v288, %v309
      %v366 = vmul.f32 %v289, %v305
      %v367 = vmul.f32 %v290, %v309
      %v368 = vmul.f32 %v291, %v305
      %v369 = vmul.f32 %v292, %v309
      %v370 = vmul.f32 %v293, %v305
      %v371 = vmul.f32 %v294, %v309
      %v372 = vmul.f32 %v295, %v305
      %v373 = vmul.f32 %v296, %v309
      %v374 = vmul.f32 %v297, %v305
      %v375 = vmul.f32 %v298, %v309
      %376 = vxpose.xlu0.b32.start [1/16] %v312, 128
      %377 = vxpose.xlu0.b32.cont [2/16] %v314, 128
      %378 = vxpose.xlu0.b32.cont [3/16] %v316, 128
      %379 = vxpose.xlu0.b32.cont [4/16] %v318, 128
      %380 = vxpose.xlu0.b32.cont [5/16] %v320, 128
      %381 = vxpose.xlu0.b32.cont [6/16] %v322, 128
      %382 = vxpose.xlu0.b32.cont [7/16] %v324, 128
      %383 = vxpose.xlu0.b32.cont [8/16] %v326, 128
      %384 = vxpose.xlu0.b32.cont [9/16] %v328, 128
      %385 = vxpose.xlu0.b32.cont [10/16] %v330, 128
      %386 = vxpose.xlu0.b32.cont [11/16] %v332, 128
      %387 = vxpose.xlu0.b32.cont [12/16] %v334, 128
      %388 = vxpose.xlu0.b32.cont [13/16] %v336, 128
      %389 = vxpose.xlu0.b32.cont [14/16] %v338, 128
      %390 = vxpose.xlu0.b32.cont [15/16] %v340, 128
      %391 = vxpose.xlu0.b32.end [16/16] %v342, 128
      %v392 = vpop.trf.xlu0
      %v393 = vpop.trf.xlu0
      %v394 = vpop.trf.xlu0
      %v395 = vpop.trf.xlu0
      %v396 = vpop.trf.xlu0
      %v397 = vpop.trf.xlu0
      %v398 = vpop.trf.xlu0
      %v399 = vpop.trf.xlu0
      %v400 = vpop.trf.xlu0
      %v401 = vpop.trf.xlu0
      %v402 = vpop.trf.xlu0
      %v403 = vpop.trf.xlu0
      %v404 = vpop.trf.xlu0
      %v405 = vpop.trf.xlu0
      %v406 = vpop.trf.xlu0
      %v407 = vpop.trf.xlu0
      %408 = vxpose.xlu0.b32.start [1/16] %v313, 128
      %409 = vxpose.xlu0.b32.cont [2/16] %v315, 128
      %410 = vxpose.xlu0.b32.cont [3/16] %v317, 128
      %411 = vxpose.xlu0.b32.cont [4/16] %v319, 128
      %412 = vxpose.xlu0.b32.cont [5/16] %v321, 128
      %413 = vxpose.xlu0.b32.cont [6/16] %v323, 128
      %414 = vxpose.xlu0.b32.cont [7/16] %v325, 128
      %415 = vxpose.xlu0.b32.cont [8/16] %v327, 128
      %416 = vxpose.xlu0.b32.cont [9/16] %v329, 128
      %417 = vxpose.xlu0.b32.cont [10/16] %v331, 128
      %418 = vxpose.xlu0.b32.cont [11/16] %v333, 128
      %419 = vxpose.xlu0.b32.cont [12/16] %v335, 128
      %420 = vxpose.xlu0.b32.cont [13/16] %v337, 128
      %421 = vxpose.xlu0.b32.cont [14/16] %v339, 128
      %422 = vxpose.xlu0.b32.cont [15/16] %v341, 128
      %423 = vxpose.xlu0.b32.end [16/16] %v343, 128
      %v424 = vpop.trf.xlu0
      %v425 = vpop.trf.xlu0
      %v426 = vpop.trf.xlu0
      %v427 = vpop.trf.xlu0
      %v428 = vpop.trf.xlu0
      %v429 = vpop.trf.xlu0
      %v430 = vpop.trf.xlu0
      %v431 = vpop.trf.xlu0
      %v432 = vpop.trf.xlu0
      %v433 = vpop.trf.xlu0
      %v434 = vpop.trf.xlu0
      %v435 = vpop.trf.xlu0
      %v436 = vpop.trf.xlu0
      %v437 = vpop.trf.xlu0
      %v438 = vpop.trf.xlu0
      %v439 = vpop.trf.xlu0
      %440 = vxpose.xlu0.b32.start [1/16] %v344, 128
      %441 = vxpose.xlu0.b32.cont [2/16] %v346, 128
      %442 = vxpose.xlu0.b32.cont [3/16] %v348, 128
      %443 = vxpose.xlu0.b32.cont [4/16] %v350, 128
      %444 = vxpose.xlu0.b32.cont [5/16] %v352, 128
      %445 = vxpose.xlu0.b32.cont [6/16] %v354, 128
      %446 = vxpose.xlu0.b32.cont [7/16] %v356, 128
      %447 = vxpose.xlu0.b32.cont [8/16] %v358, 128
      %448 = vxpose.xlu0.b32.cont [9/16] %v360, 128
      %449 = vxpose.xlu0.b32.cont [10/16] %v362, 128
      %450 = vxpose.xlu0.b32.cont [11/16] %v364, 128
      %451 = vxpose.xlu0.b32.cont [12/16] %v366, 128
      %452 = vxpose.xlu0.b32.cont [13/16] %v368, 128
      %453 = vxpose.xlu0.b32.cont [14/16] %v370, 128
      %454 = vxpose.xlu0.b32.cont [15/16] %v372, 128
      %455 = vxpose.xlu0.b32.end [16/16] %v374, 128
      %v456 = vpop.trf.xlu0
      %v457 = vpop.trf.xlu0
      %v458 = vpop.trf.xlu0
      %v459 = vpop.trf.xlu0
      %v460 = vpop.trf.xlu0
      %v461 = vpop.trf.xlu0
      %v462 = vpop.trf.xlu0
      %v463 = vpop.trf.xlu0
      %v464 = vpop.trf.xlu0
      %v465 = vpop.trf.xlu0
      %v466 = vpop.trf.xlu0
      %v467 = vpop.trf.xlu0
      %v468 = vpop.trf.xlu0
      %v469 = vpop.trf.xlu0
      %v470 = vpop.trf.xlu0
      %v471 = vpop.trf.xlu0
      %472 = vxpose.xlu0.b32.start [1/16] %v345, 128
      %473 = vxpose.xlu0.b32.cont [2/16] %v347, 128
      %474 = vxpose.xlu0.b32.cont [3/16] %v349, 128
      %475 = vxpose.xlu0.b32.cont [4/16] %v351, 128
      %476 = vxpose.xlu0.b32.cont [5/16] %v353, 128
      %477 = vxpose.xlu0.b32.cont [6/16] %v355, 128
      %478 = vxpose.xlu0.b32.cont [7/16] %v357, 128
      %479 = vxpose.xlu0.b32.cont [8/16] %v359, 128
      %480 = vxpose.xlu0.b32.cont [9/16] %v361, 128
      %481 = vxpose.xlu0.b32.cont [10/16] %v363, 128
      %482 = vxpose.xlu0.b32.cont [11/16] %v365, 128
      %483 = vxpose.xlu0.b32.cont [12/16] %v367, 128
      %484 = vxpose.xlu0.b32.cont [13/16] %v369, 128
      %485 = vxpose.xlu0.b32.cont [14/16] %v371, 128
      %486 = vxpose.xlu0.b32.cont [15/16] %v373, 128
      %487 = vxpose.xlu0.b32.end [16/16] %v375, 128
      %v488 = vpop.trf.xlu0
      %v489 = vpop.trf.xlu0
      %v490 = vpop.trf.xlu0
      %v491 = vpop.trf.xlu0
      %v492 = vpop.trf.xlu0
      %v493 = vpop.trf.xlu0
      %v494 = vpop.trf.xlu0
      %v495 = vpop.trf.xlu0
      %v496 = vpop.trf.xlu0
      %v497 = vpop.trf.xlu0
      %v498 = vpop.trf.xlu0
      %v499 = vpop.trf.xlu0
      %v500 = vpop.trf.xlu0
      %v501 = vpop.trf.xlu0
      %v502 = vpop.trf.xlu0
      %v503 = vpop.trf.xlu0
      %504 = vst [vmem:[%s201] sm:$0xff] %v392
      %505 = vst [vmem:[%s201 + $0x8] sm:$0xff] %v456
      %506 = vst [vmem:[%s201 + $0x10] sm:$0xff] %v393
      %507 = vst [vmem:[%s201 + $0x18] sm:$0xff] %v457
      %508 = vst [vmem:[%s201 + $0x20] sm:$0xff] %v394
      %509 = vst [vmem:[%s201 + $0x28] sm:$0xff] %v458
      %510 = vst [vmem:[%s201 + $0x30] sm:$0xff] %v395
      %511 = vst [vmem:[%s201 + $0x38] sm:$0xff] %v459
      %512 = vst [vmem:[%s201 + $0x40] sm:$0xff] %v396
      %513 = vst [vmem:[%s201 + $0x48] sm:$0xff] %v460
      %514 = vst [vmem:[%s201 + $0x50] sm:$0xff] %v397
      %515 = vst [vmem:[%s201 + $0x58] sm:$0xff] %v461
      %516 = vst [vmem:[%s201 + $0x60] sm:$0xff] %v398
      %517 = vst [vmem:[%s201 + $0x68] sm:$0xff] %v462
      %518 = vst [vmem:[%s201 + $0x70] sm:$0xff] %v399
      %519 = vst [vmem:[%s201 + $0x78] sm:$0xff] %v463
      %520 = vst [vmem:[%s201 + $0x80] sm:$0xff] %v400
      %521 = vst [vmem:[%s201 + $0x88] sm:$0xff] %v464
      %522 = vst [vmem:[%s201 + $0x90] sm:$0xff] %v401
      %523 = vst [vmem:[%s201 + $0x98] sm:$0xff] %v465
      %524 = vst [vmem:[%s201 + $0xa0] sm:$0xff] %v402
      %525 = vst [vmem:[%s201 + $0xa8] sm:$0xff] %v466
      %526 = vst [vmem:[%s201 + $0xb0] sm:$0xff] %v403
      %527 = vst [vmem:[%s201 + $0xb8] sm:$0xff] %v467
      %528 = vst [vmem:[%s201 + $0xc0] sm:$0xff] %v404
      %529 = vst [vmem:[%s201 + $0xc8] sm:$0xff] %v468
      %530 = vst [vmem:[%s201 + $0xd0] sm:$0xff] %v405
      %531 = vst [vmem:[%s201 + $0xd8] sm:$0xff] %v469
      %532 = vst [vmem:[%s201 + $0xe0] sm:$0xff] %v406
      %533 = vst [vmem:[%s201 + $0xe8] sm:$0xff] %v470
      %534 = vst [vmem:[%s201 + $0xf0] sm:$0xff] %v407
      %535 = vst [vmem:[%s201 + $0xf8] sm:$0xff] %v471
      %536 = vst [vmem:[%s201 + $0x100] sm:$0xff] %v424
      %537 = vst [vmem:[%s201 + $0x108] sm:$0xff] %v488
      %538 = vst [vmem:[%s201 + $0x110] sm:$0xff] %v425
      %539 = vst [vmem:[%s201 + $0x118] sm:$0xff] %v489
      %540 = vst [vmem:[%s201 + $0x120] sm:$0xff] %v426
      %541 = vst [vmem:[%s201 + $0x128] sm:$0xff] %v490
      %542 = vst [vmem:[%s201 + $0x130] sm:$0xff] %v427
      %543 = vst [vmem:[%s201 + $0x138] sm:$0xff] %v491
      %544 = vst [vmem:[%s201 + $0x140] sm:$0xff] %v428
      %545 = vst [vmem:[%s201 + $0x148] sm:$0xff] %v492
      %546 = vst [vmem:[%s201 + $0x150] sm:$0xff] %v429
      %547 = vst [vmem:[%s201 + $0x158] sm:$0xff] %v493
      %548 = vst [vmem:[%s201 + $0x160] sm:$0xff] %v430
      %549 = vst [vmem:[%s201 + $0x168] sm:$0xff] %v494
      %550 = vst [vmem:[%s201 + $0x170] sm:$0xff] %v431
      %551 = vst [vmem:[%s201 + $0x178] sm:$0xff] %v495
      %552 = vst [vmem:[%s201 + $0x180] sm:$0xff] %v432
      %553 = vst [vmem:[%s201 + $0x188] sm:$0xff] %v496
      %554 = vst [vmem:[%s201 + $0x190] sm:$0xff] %v433
      %555 = vst [vmem:[%s201 + $0x198] sm:$0xff] %v497
      %556 = vst [vmem:[%s201 + $0x1a0] sm:$0xff] %v434
      %557 = vst [vmem:[%s201 + $0x1a8] sm:$0xff] %v498
      %558 = vst [vmem:[%s201 + $0x1b0] sm:$0xff] %v435
      %559 = vst [vmem:[%s201 + $0x1b8] sm:$0xff] %v499
      %560 = vst [vmem:[%s201 + $0x1c0] sm:$0xff] %v436
      %561 = vst [vmem:[%s201 + $0x1c8] sm:$0xff] %v500
      %562 = vst [vmem:[%s201 + $0x1d0] sm:$0xff] %v437
      %563 = vst [vmem:[%s201 + $0x1d8] sm:$0xff] %v501
      %564 = vst [vmem:[%s201 + $0x1e0] sm:$0xff] %v438
      %565 = vst [vmem:[%s201 + $0x1e8] sm:$0xff] %v502
      %566 = vst [vmem:[%s201 + $0x1f0] sm:$0xff] %v439
      %567 = vst [vmem:[%s201 + $0x1f8] sm:$0xff] %v503
      %s568 = smul.u32 2, %s18
      %p569 = scmp.lt.s32.totalorder %s17, 1
      %s570 = scalar_select %p569, %s17, 1
      %p571 = scmp.lt.s32.totalorder %s568, 1
      %s572 = scalar_select %p571, %s568, 1
      %s573 = smul.addr %s570, 64
      %s574 = sadd.s32 %s572, %s573
      %s575 = smul.addr %s574, 8
      %s576 = scalar_lea.vmem %s2, %s575
      // Predicated region
      $region29: #{ffm_forward.3} parent=27 // pred_check
        %p577 = pneg %p99
      $region30: #{ffm_forward.3} parent=27 // pred_check_branch
        %579 = sbr.rel (%p577) target = $region32
      $region31: #{ffm_forward.3} parent=27 // pred_region
        %s580 = smul.u32 2, %s18
      $region32: #{ffm_forward.3} parent=27 // pred_fallthru
        _
    $region28: #{ffm_forward.3} parent=5 // pred_fallthru
      _
    %p581 = scmp.le.s32.totalorder 2, %s8
    // Predicated region
    $region33: #{ffm_forward.3} parent=5 // pred_check
      %p582 = pneg %p581
    $region34: #{ffm_forward.3} parent=5 // pred_check_branch
      %584 = sbr.rel (%p582) target = $region36
    $region35: #{ffm_forward.3} parent=5 // pred_region
      %s585 = ssub.s32 %s8, 2
      // Predicated region
      $region37: #{ffm_forward.3} parent=35 // pred_check
        %p586 = pneg %p105
      $region38: #{ffm_forward.3} parent=35 // pred_check_branch
        %588 = sbr.rel (%p586) target = $region40
      $region39: #{ffm_forward.3} parent=35 // pred_region
        %s589 = smul.u32 2, %s20
        %p590 = scmp.lt.s32.totalorder %s19, 1
        %s591 = scalar_select %p590, %s19, 1
        %p592 = scmp.lt.s32.totalorder %s589, 1
        %s593 = scalar_select %p592, %s589, 1
        %s594 = smul.addr %s591, 64
        %s595 = sadd.s32 %s593, %s594
        %s596 = smul.addr %s595, 8
        %s597 = scalar_lea.vmem %s2, %s596
      $region40: #{ffm_forward.3} parent=35 // pred_fallthru
        _
    $region36: #{ffm_forward.3} parent=5 // pred_fallthru
      _
  $region6: #{ffm_forward.3} parent=0 // loop_footer
    %s12 = sadd.s32 1, %s8
  $region7: #{ffm_forward.3} parent=0 // loop_footer_branch
    %7 = sbr.rel target = $region3
  $region8: #{ffm_forward.3} parent=0 // loop_exit
    _

// kernel: ffm_forward.2
$region0: #{ffm_forward.2}
  #allocation0 [shape = 'u32[]', space=smem, size = 0x4, offset = 0x4, fixed_abs, tag = 'smem constant byte address 0x4 - core index']
  #allocation1 [shape = 'u32[144,128]{1,0:T(1,128)}', space=vmem, size = 0x12000, scoped, tag = 'internal scratch']
  %s0 = inlined_call_operand.vmem [shape: bf16[512,64], index: 0, kind: input, shape index: {}]
  %s1 = inlined_call_operand.vmem [shape: bf16[512,64], index: 1, kind: input, shape index: {}]
  %s2 = inlined_call_operand.vmem [shape: bf16[512,64], index: 2, kind: input, shape index: {}]
  %s3 = inlined_call_operand.vmem [shape: bf16[512,64], index: 3, kind: input, shape index: {}]
  %s4 = inlined_call_operand.vmem [shape: bf16[64,256], index: 4, kind: input, shape index: {}]
  %s5 = inlined_call_operand.vmem [shape: bf16[64,256], index: 5, kind: input, shape index: {}]
  %s6 = inlined_call_operand.vmem [shape: bf16[64,256], index: 6, kind: input, shape index: {}]
  %s7 = inlined_call_operand.vmem [shape: bf16[64,256], index: 7, kind: input, shape index: {}]
  %s8 = inlined_call_operand.vmem [shape: f32[1,256], index: 8, kind: input, shape index: {}]
  %s9 = inlined_call_operand.vmem [shape: bf16[512,256], index: 9, kind: output, shape index: {0}]
  %s10 = inlined_call_operand.vmem [shape: f32[2,8,256], index: 10, kind: output, shape index: {1}]
  %11 = xla_tuple %s9, %s10
  %s12 = sld [smem:[#allocation0]]
  $region77: #{ffm_forward.2} parent=0
    _
  %s14 = ssub.s32 1, %s12
  %s15 = scalar_select 0, %s14, %s12
  loop: start=0, step=1, limit=4
  $region2: #{ffm_forward.2} parent=0 // loop_pre_header
    _
  $region3: #{ffm_forward.2} parent=0 // loop_header
    %s17 = sphi 0, %s21
    %p18 = scmp.ge.s32.totalorder %s17, 4
    %s27 = sphi 0, %s29
    %s30 = sphi 0, %s27
    %s31 = sphi 0, %s30
    %s47 = sphi 0, %s31
    %s53 = sphi 0, %s55
    %s56 = sphi 0, %s53
    %s57 = sphi 0, %s56
    %s73 = sphi 0, %s57
    %s79 = sphi 0, %s81
    %s82 = sphi 0, %s79
    %s83 = sphi 0, %s82
    %s99 = sphi 0, %s83
    %s105 = sphi 0, %s107
    %s108 = sphi 0, %s105
    %s109 = sphi 0, %s108
    %s125 = sphi 0, %s109
    %s129 = sphi 0, %s129
    %s131 = sphi 0, %s129
    %s132 = sphi 0, %s131
    %s146 = sphi 0, %s132
    %s150 = sphi 0, %s150
    %s152 = sphi 0, %s150
    %s153 = sphi 0, %s152
    %s167 = sphi 0, %s153
    %s171 = sphi 0, %s171
    %s173 = sphi 0, %s171
    %s174 = sphi 0, %s173
    %s188 = sphi 0, %s174
    %s192 = sphi 0, %s192
    %s194 = sphi 0, %s192
    %s195 = sphi 0, %s194
    %s209 = sphi 0, %s195
    %s213 = sphi 0, %s213
    %s215 = sphi 0, %s213
    %s216 = sphi 0, %s215
    %s230 = sphi 0, %s216
    %s236 = sphi 0, %s238
    %s239 = sphi 0, %s236
    %s240 = sphi 0, %s239
    %s256 = sphi 0, %s240
    %s262 = sphi 0, %s264
    %s265 = sphi 0, %s262
    %s266 = sphi 0, %s265
    %s282 = sphi 0, %s266
  $region4: #{ffm_forward.2} parent=0 // loop_header_branch
    %20 = sbr.rel (%p18) target = $region8
  $region5: #{ffm_forward.2} parent=0 // loop_body
    %s22 = ssub.s32 %s17, 1
    %s23 = ssub.s32 %s17, 2
    %s24 = sadd.s32 %s17, 1
    %s25 = ssub.s32 %s17, %s24
    %p26 = scmp.eq.s32.totalorder %s25, 0
    %s28 = sadd.s32 %s27, 1
    %s29 = scalar_select %p26, %s27, %s28
    %p32 = pneg %p26
    %p33 = scmp.eq.s32.totalorder %s17, 1
    %p34 = por %p32, %p33
    %p35 = scmp.ne.s32.totalorder %s27, %s30
    %p36 = scmp.eq.s32.totalorder %s17, 0
    %p37 = por %p35, %p36
    %p38 = scmp.ne.s32.totalorder %s27, %s30
    %p39 = scmp.eq.s32.totalorder %s22, 1
    %p40 = por %p38, %p39
    %p41 = scmp.ne.s32.totalorder %s30, %s31
    %p42 = scmp.eq.s32.totalorder %s22, 0
    %p43 = por %p41, %p42
    %p44 = scmp.ne.s32.totalorder %s30, %s31
    %p45 = scmp.eq.s32.totalorder %s23, 1
    %p46 = por %p44, %p45
    %p48 = scmp.ne.s32.totalorder %s31, %s47
    %p49 = scmp.eq.s32.totalorder %s23, 0
    %p50 = por %p48, %p49
    %s51 = ssub.s32 %s17, %s24
    %p52 = scmp.eq.s32.totalorder %s51, 0
    %s54 = sadd.s32 %s53, 1
    %s55 = scalar_select %p52, %s53, %s54
    %p58 = pneg %p52
    %p59 = scmp.eq.s32.totalorder %s17, 1
    %p60 = por %p58, %p59
    %p61 = scmp.ne.s32.totalorder %s53, %s56
    %p62 = scmp.eq.s32.totalorder %s17, 0
    %p63 = por %p61, %p62
    %p64 = scmp.ne.s32.totalorder %s53, %s56
    %p65 = scmp.eq.s32.totalorder %s22, 1
    %p66 = por %p64, %p65
    %p67 = scmp.ne.s32.totalorder %s56, %s57
    %p68 = scmp.eq.s32.totalorder %s22, 0
    %p69 = por %p67, %p68
    %p70 = scmp.ne.s32.totalorder %s56, %s57
    %p71 = scmp.eq.s32.totalorder %s23, 1
    %p72 = por %p70, %p71
    %p74 = scmp.ne.s32.totalorder %s57, %s73
    %p75 = scmp.eq.s32.totalorder %s23, 0
    %p76 = por %p74, %p75
    %s77 = ssub.s32 %s17, %s24
    %p78 = scmp.eq.s32.totalorder %s77, 0
    %s80 = sadd.s32 %s79, 1
    %s81 = scalar_select %p78, %s79, %s80
    %p84 = pneg %p78
    %p85 = scmp.eq.s32.totalorder %s17, 1
    %p86 = por %p84, %p85
    %p87 = scmp.ne.s32.totalorder %s79, %s82
    %p88 = scmp.eq.s32.totalorder %s17, 0
    %p89 = por %p87, %p88
    %p90 = scmp.ne.s32.totalorder %s79, %s82
    %p91 = scmp.eq.s32.totalorder %s22, 1
    %p92 = por %p90, %p91
    %p93 = scmp.ne.s32.totalorder %s82, %s83
    %p94 = scmp.eq.s32.totalorder %s22, 0
    %p95 = por %p93, %p94
    %p96 = scmp.ne.s32.totalorder %s82, %s83
    %p97 = scmp.eq.s32.totalorder %s23, 1
    %p98 = por %p96, %p97
    %p100 = scmp.ne.s32.totalorder %s83, %s99
    %p101 = scmp.eq.s32.totalorder %s23, 0
    %p102 = por %p100, %p101
    %s103 = ssub.s32 %s17, %s24
    %p104 = scmp.eq.s32.totalorder %s103, 0
    %s106 = sadd.s32 %s105, 1
    %s107 = scalar_select %p104, %s105, %s106
    %p110 = pneg %p104
    %p111 = scmp.eq.s32.totalorder %s17, 1
    %p112 = por %p110, %p111
    %p113 = scmp.ne.s32.totalorder %s105, %s108
    %p114 = scmp.eq.s32.totalorder %s17, 0
    %p115 = por %p113, %p114
    %p116 = scmp.ne.s32.totalorder %s105, %s108
    %p117 = scmp.eq.s32.totalorder %s22, 1
    %p118 = por %p116, %p117
    %p119 = scmp.ne.s32.totalorder %s108, %s109
    %p120 = scmp.eq.s32.totalorder %s22, 0
    %p121 = por %p119, %p120
    %p122 = scmp.ne.s32.totalorder %s108, %s109
    %p123 = scmp.eq.s32.totalorder %s23, 1
    %p124 = por %p122, %p123
    %p126 = scmp.ne.s32.totalorder %s109, %s125
    %p127 = scmp.eq.s32.totalorder %s23, 0
    %p128 = por %p126, %p127
    %s130 = sadd.s32 %s129, 1
    %p133 = scmp.eq.s32.totalorder %s17, 1
    %p134 = scmp.ne.s32.totalorder %s129, %s131
    %p135 = scmp.eq.s32.totalorder %s17, 0
    %p136 = por %p134, %p135
    %p137 = scmp.ne.s32.totalorder %s129, %s131
    %p138 = scmp.eq.s32.totalorder %s22, 1
    %p139 = por %p137, %p138
    %p140 = scmp.ne.s32.totalorder %s131, %s132
    %p141 = scmp.eq.s32.totalorder %s22, 0
    %p142 = por %p140, %p141
    %p143 = scmp.ne.s32.totalorder %s131, %s132
    %p144 = scmp.eq.s32.totalorder %s23, 1
    %p145 = por %p143, %p144
    %p147 = scmp.ne.s32.totalorder %s132, %s146
    %p148 = scmp.eq.s32.totalorder %s23, 0
    %p149 = por %p147, %p148
    %s151 = sadd.s32 %s150, 1
    %p154 = scmp.eq.s32.totalorder %s17, 1
    %p155 = scmp.ne.s32.totalorder %s150, %s152
    %p156 = scmp.eq.s32.totalorder %s17, 0
    %p157 = por %p155, %p156
    %p158 = scmp.ne.s32.totalorder %s150, %s152
    %p159 = scmp.eq.s32.totalorder %s22, 1
    %p160 = por %p158, %p159
    %p161 = scmp.ne.s32.totalorder %s152, %s153
    %p162 = scmp.eq.s32.totalorder %s22, 0
    %p163 = por %p161, %p162
    %p164 = scmp.ne.s32.totalorder %s152, %s153
    %p165 = scmp.eq.s32.totalorder %s23, 1
    %p166 = por %p164, %p165
    %p168 = scmp.ne.s32.totalorder %s153, %s167
    %p169 = scmp.eq.s32.totalorder %s23, 0
    %p170 = por %p168, %p169
    %s172 = sadd.s32 %s171, 1
    %p175 = scmp.eq.s32.totalorder %s17, 1
    %p176 = scmp.ne.s32.totalorder %s171, %s173
    %p177 = scmp.eq.s32.totalorder %s17, 0
    %p178 = por %p176, %p177
    %p179 = scmp.ne.s32.totalorder %s171, %s173
    %p180 = scmp.eq.s32.totalorder %s22, 1
    %p181 = por %p179, %p180
    %p182 = scmp.ne.s32.totalorder %s173, %s174
    %p183 = scmp.eq.s32.totalorder %s22, 0
    %p184 = por %p182, %p183
    %p185 = scmp.ne.s32.totalorder %s173, %s174
    %p186 = scmp.eq.s32.totalorder %s23, 1
    %p187 = por %p185, %p186
    %p189 = scmp.ne.s32.totalorder %s174, %s188
    %p190 = scmp.eq.s32.totalorder %s23, 0
    %p191 = por %p189, %p190
    %s193 = sadd.s32 %s192, 1
    %p196 = scmp.eq.s32.totalorder %s17, 1
    %p197 = scmp.ne.s32.totalorder %s192, %s194
    %p198 = scmp.eq.s32.totalorder %s17, 0
    %p199 = por %p197, %p198
    %p200 = scmp.ne.s32.totalorder %s192, %s194
    %p201 = scmp.eq.s32.totalorder %s22, 1
    %p202 = por %p200, %p201
    %p203 = scmp.ne.s32.totalorder %s194, %s195
    %p204 = scmp.eq.s32.totalorder %s22, 0
    %p205 = por %p203, %p204
    %p206 = scmp.ne.s32.totalorder %s194, %s195
    %p207 = scmp.eq.s32.totalorder %s23, 1
    %p208 = por %p206, %p207
    %p210 = scmp.ne.s32.totalorder %s195, %s209
    %p211 = scmp.eq.s32.totalorder %s23, 0
    %p212 = por %p210, %p211
    %s214 = sadd.s32 %s213, 1
    %p217 = scmp.eq.s32.totalorder %s17, 1
    %p218 = scmp.ne.s32.totalorder %s213, %s215
    %p219 = scmp.eq.s32.totalorder %s17, 0
    %p220 = por %p218, %p219
    %p221 = scmp.ne.s32.totalorder %s213, %s215
    %p222 = scmp.eq.s32.totalorder %s22, 1
    %p223 = por %p221, %p222
    %p224 = scmp.ne.s32.totalorder %s215, %s216
    %p225 = scmp.eq.s32.totalorder %s22, 0
    %p226 = por %p224, %p225
    %p227 = scmp.ne.s32.totalorder %s215, %s216
    %p228 = scmp.eq.s32.totalorder %s23, 1
    %p229 = por %p227, %p228
    %p231 = scmp.ne.s32.totalorder %s216, %s230
    %p232 = scmp.eq.s32.totalorder %s23, 0
    %p233 = por %p231, %p232
    %s234 = ssub.s32 %s17, %s24
    %p235 = scmp.eq.s32.totalorder %s234, 0
    %s237 = sadd.s32 %s236, 1
    %s238 = scalar_select %p235, %s236, %s237
    %p241 = pneg %p235
    %p242 = scmp.eq.s32.totalorder %s17, 1
    %p243 = por %p241, %p242
    %p244 = scmp.ne.s32.totalorder %s236, %s239
    %p245 = scmp.eq.s32.totalorder %s17, 0
    %p246 = por %p244, %p245
    %p247 = scmp.ne.s32.totalorder %s236, %s239
    %p248 = scmp.eq.s32.totalorder %s22, 1
    %p249 = por %p247, %p248
    %p250 = scmp.ne.s32.totalorder %s239, %s240
    %p251 = scmp.eq.s32.totalorder %s22, 0
    %p252 = por %p250, %p251
    %p253 = scmp.ne.s32.totalorder %s239, %s240
    %p254 = scmp.eq.s32.totalorder %s23, 1
    %p255 = por %p253, %p254
    %p257 = scmp.ne.s32.totalorder %s240, %s256
    %p258 = scmp.eq.s32.totalorder %s23, 0
    %p259 = por %p257, %p258
    %s260 = ssub.s32 %s17, %s24
    %p261 = scmp.eq.s32.totalorder %s260, 0
    %s263 = sadd.s32 %s262, 1
    %s264 = scalar_select %p261, %s262, %s263
    %p267 = pneg %p261
    %p268 = scmp.eq.s32.totalorder %s17, 1
    %p269 = por %p267, %p268
    %p270 = scmp.ne.s32.totalorder %s262, %s265
    %p271 = scmp.eq.s32.totalorder %s17, 0
    %p272 = por %p270, %p271
    %p273 = scmp.ne.s32.totalorder %s262, %s265
    %p274 = scmp.eq.s32.totalorder %s22, 1
    %p275 = por %p273, %p274
    %p276 = scmp.ne.s32.totalorder %s265, %s266
    %p277 = scmp.eq.s32.totalorder %s22, 0
    %p278 = por %p276, %p277
    %p279 = scmp.ne.s32.totalorder %s265, %s266
    %p280 = scmp.eq.s32.totalorder %s23, 1
    %p281 = por %p279, %p280
    %p283 = scmp.ne.s32.totalorder %s266, %s282
    %p284 = scmp.eq.s32.totalorder %s23, 0
    %p285 = por %p283, %p284
    %p286 = scmp.le.s32.totalorder 1, %s17
    %p287 = scmp.lt.s32.totalorder %s17, 3
    %p288 = pnand %p286, %p287
    %p289 = pneg %p288
    // Predicated region
    $region9: #{ffm_forward.2} parent=5 // pred_check
      _
    $region10: #{ffm_forward.2} parent=5 // pred_check_branch
      %291 = sbr.rel (%p288) target = $region12
    $region11: #{ffm_forward.2} parent=5 // pred_region
      %s292 = ssub.s32 %s17, 1
      // Predicated region
      $region13: #{ffm_forward.2} parent=11 // pred_check
        %p293 = pneg %p142
      $region14: #{ffm_forward.2} parent=11 // pred_check_branch
        %295 = sbr.rel (%p293) target = $region16
      $region15: #{ffm_forward.2} parent=11 // pred_region
        _
      $region16: #{ffm_forward.2} parent=11 // pred_fallthru
        _
      // Predicated region
      $region17: #{ffm_forward.2} parent=11 // pred_check
        %p296 = pneg %p163
      $region18: #{ffm_forward.2} parent=11 // pred_check_branch
        %298 = sbr.rel (%p296) target = $region20
      $region19: #{ffm_forward.2} parent=11 // pred_region
        _
      $region20: #{ffm_forward.2} parent=11 // pred_fallthru
        _
      // Predicated region
      $region21: #{ffm_forward.2} parent=11 // pred_check
        %p299 = pneg %p184
      $region22: #{ffm_forward.2} parent=11 // pred_check_branch
        %301 = sbr.rel (%p299) target = $region24
      $region23: #{ffm_forward.2} parent=11 // pred_region
        _
      $region24: #{ffm_forward.2} parent=11 // pred_fallthru
        _
      // Predicated region
      $region25: #{ffm_forward.2} parent=11 // pred_check
        %p302 = pneg %p205
      $region26: #{ffm_forward.2} parent=11 // pred_check_branch
        %304 = sbr.rel (%p302) target = $region28
      $region27: #{ffm_forward.2} parent=11 // pred_region
        _
      $region28: #{ffm_forward.2} parent=11 // pred_fallthru
        _
      // Predicated region
      $region29: #{ffm_forward.2} parent=11 // pred_check
        %p305 = pneg %p226
      $region30: #{ffm_forward.2} parent=11 // pred_check_branch
        %307 = sbr.rel (%p305) target = $region32
      $region31: #{ffm_forward.2} parent=11 // pred_region
        _
      $region32: #{ffm_forward.2} parent=11 // pred_fallthru
        _
    $region12: #{ffm_forward.2} parent=5 // pred_fallthru
      _
    %p308 = scmp.lt.s32.totalorder %s17, 2
    // Predicated region
    $region33: #{ffm_forward.2} parent=5 // pred_check
      %p309 = pneg %p308
    $region34: #{ffm_forward.2} parent=5 // pred_check_branch
      %311 = sbr.rel (%p309) target = $region36
    $region35: #{ffm_forward.2} parent=5 // pred_region
      // Predicated region
      $region37: #{ffm_forward.2} parent=35 // pred_check
        %p312 = pneg %p37
      $region38: #{ffm_forward.2} parent=35 // pred_check_branch
        %314 = sbr.rel (%p312) target = $region40
      $region39: #{ffm_forward.2} parent=35 // pred_region
        %s315 = smul.u32 32, %s17
        %p316 = scmp.lt.s32.totalorder %s315, 63
        %s317 = scalar_select %p316, %s315, 63
        %s318 = smul.addr %s317, 4
        %s319 = scalar_lea.vmem %s0, %s318
        %s320 = smul.u32 32, %s17
      $region40: #{ffm_forward.2} parent=35 // pred_fallthru
        _
      // Predicated region
      $region41: #{ffm_forward.2} parent=35 // pred_check
        %p321 = pneg %p63
      $region42: #{ffm_forward.2} parent=35 // pred_check_branch
        %323 = sbr.rel (%p321) target = $region44
      $region43: #{ffm_forward.2} parent=35 // pred_region
        %s324 = smul.u32 32, %s17
        %p325 = scmp.lt.s32.totalorder %s324, 63
        %s326 = scalar_select %p325, %s324, 63
        %s327 = smul.addr %s326, 4
        %s328 = scalar_lea.vmem %s1, %s327
        %s329 = smul.u32 32, %s17
      $region44: #{ffm_forward.2} parent=35 // pred_fallthru
        _
      // Predicated region
      $region45: #{ffm_forward.2} parent=35 // pred_check
        %p330 = pneg %p89
      $region46: #{ffm_forward.2} parent=35 // pred_check_branch
        %332 = sbr.rel (%p330) target = $region48
      $region47: #{ffm_forward.2} parent=35 // pred_region
        %s333 = smul.u32 32, %s17
        %p334 = scmp.lt.s32.totalorder %s333, 63
        %s335 = scalar_select %p334, %s333, 63
        %s336 = smul.addr %s335, 4
        %s337 = scalar_lea.vmem %s2, %s336
        %s338 = smul.u32 32, %s17
      $region48: #{ffm_forward.2} parent=35 // pred_fallthru
        _
      // Predicated region
      $region49: #{ffm_forward.2} parent=35 // pred_check
        %p339 = pneg %p115
      $region50: #{ffm_forward.2} parent=35 // pred_check_branch
        %341 = sbr.rel (%p339) target = $region52
      $region51: #{ffm_forward.2} parent=35 // pred_region
        %s342 = smul.u32 32, %s17
        %p343 = scmp.lt.s32.totalorder %s342, 63
        %s344 = scalar_select %p343, %s342, 63
        %s345 = smul.addr %s344, 4
        %s346 = scalar_lea.vmem %s3, %s345
        %s347 = smul.u32 32, %s17
      $region52: #{ffm_forward.2} parent=35 // pred_fallthru
        _
    $region36: #{ffm_forward.2} parent=5 // pred_fallthru
      _
    %p348 = scmp.le.s32.totalorder 1, %s17
    %p349 = scmp.lt.s32.totalorder %s17, 3
    %p350 = pnand %p348, %p349
    %p351 = pneg %p350
    // Predicated region
    $region53: #{ffm_forward.2} parent=5 // pred_check
      _
    $region54: #{ffm_forward.2} parent=5 // pred_check_branch
      %353 = sbr.rel (%p350) target = $region56
    $region55: #{ffm_forward.2} parent=5 // pred_region
      %s354 = ssub.s32 %s17, 1
      %s355 = smul.u32 32, %s22
      %p356 = scmp.lt.s32.totalorder %s355, 63
      %s357 = scalar_select %p356, %s355, 63
      %s358 = smul.addr %s357, 4
      %s359 = scalar_lea.vmem %s0, %s358
      %p360 = pneg %p43
      %p361 = pneg %p40
      %s362 = smul.u32 32, %s22
      %p363 = scmp.lt.s32.totalorder %s362, 63
      %s364 = scalar_select %p363, %s362, 63
      %s365 = smul.addr %s364, 4
      %s366 = scalar_lea.vmem %s1, %s365
      %p367 = pneg %p69
      %p368 = pneg %p66
      %s369 = smul.u32 32, %s22
      %p370 = scmp.lt.s32.totalorder %s369, 63
      %s371 = scalar_select %p370, %s369, 63
      %s372 = smul.addr %s371, 4
      %s373 = scalar_lea.vmem %s2, %s372
      %p374 = pneg %p95
      %p375 = pneg %p92
      %s376 = smul.u32 32, %s22
      %p377 = scmp.lt.s32.totalorder %s376, 63
      %s378 = scalar_select %p377, %s376, 63
      %s379 = smul.addr %s378, 4
      %s380 = scalar_lea.vmem %s3, %s379
      %p381 = pneg %p121
      %p382 = pneg %p118
      %p383 = pneg %p142
      %p384 = pneg %p139
      %p385 = pneg %p163
      %p386 = pneg %p160
      %p387 = pneg %p184
      %p388 = pneg %p181
      %p389 = pneg %p205
      %p390 = pneg %p202
      %p391 = pneg %p226
      %p392 = pneg %p223
      %p393 = pneg %p252
      %p394 = pneg %p249
      %s395 = smul.u32 32, %s22
      %p396 = scmp.lt.s32.totalorder %s395, 63
      %s397 = scalar_select %p396, %s395, 63
      %s398 = smul.addr %s397, 2
      %s399 = smul.addr %s398, 4
      %s400 = scalar_lea.vmem %s9, %s399
      %p401 = pneg %p278
      %p402 = pneg %p275
      %p403 = scmp.lt.s32.totalorder %s22, 1
      %s404 = scalar_select %p403, %s22, 1
      %s405 = smul.addr %s404, 2
      %s406 = smul.addr %s405, 8
      %s407 = scalar_lea.vmem %s10, %s406
      %s408 = smul.u32 32, %s22
      %p409 = scmp.lt.s32.totalorder %s408, 63
      %s410 = scalar_select %p409, %s408, 63
      %s411 = smul.addr %s410, 4
      %s412 = scalar_lea.vmem %s0, %s411
      %s413 = smul.u32 32, %s22
      %s414 = smul.u32 32, %s22
      %p415 = scmp.lt.s32.totalorder %s414, 63
      %s416 = scalar_select %p415, %s414, 63
      %s417 = smul.addr %s416, 4
      %s418 = scalar_lea.vmem %s1, %s417
      %s419 = smul.u32 32, %s22
      %s420 = smul.u32 32, %s22
      %p421 = scmp.lt.s32.totalorder %s420, 63
      %s422 = scalar_select %p421, %s420, 63
      %s423 = smul.addr %s422, 4
      %s424 = scalar_lea.vmem %s2, %s423
      %s425 = smul.u32 32, %s22
      %s426 = smul.u32 32, %s22
      %p427 = scmp.lt.s32.totalorder %s426, 63
      %s428 = scalar_select %p427, %s426, 63
      %s429 = smul.addr %s428, 4
      %s430 = scalar_lea.vmem %s3, %s429
      %s431 = smul.u32 32, %s22
      %s432 = smul.u32 32, %s22
      %p433 = scmp.lt.s32.totalorder %s432, 63
      %s434 = scalar_select %p433, %s432, 63
      %s435 = smul.addr %s434, 2
      %s436 = smul.addr %s435, 4
      %s437 = scalar_lea.vmem %s9, %s436
      %s438 = smul.u32 32, %s22
      %p439 = scmp.lt.s32.totalorder %s22, 1
      %s440 = scalar_select %p439, %s22, 1
      %s441 = smul.addr %s440, 2
      %s442 = smul.addr %s441, 8
      %s443 = scalar_lea.vmem %s10, %s442
      %v445 = vld [vmem:[%s412] sm:$0xf]
      %v446 = vld [vmem:[%s412 + $0x4] sm:$0xf]
      %v447 = vld [vmem:[%s412 + $0x8] sm:$0xf]
      %v448 = vld [vmem:[%s412 + $0xc] sm:$0xf]
      %v449 = vld [vmem:[%s412 + $0x10] sm:$0xf]
      %v450 = vld [vmem:[%s412 + $0x14] sm:$0xf]
      %v451 = vld [vmem:[%s412 + $0x18] sm:$0xf]
      %v452 = vld [vmem:[%s412 + $0x1c] sm:$0xf]
      %v453 = vld [vmem:[%s412 + $0x20] sm:$0xf]
      %v454 = vld [vmem:[%s412 + $0x24] sm:$0xf]
      %v455 = vld [vmem:[%s412 + $0x28] sm:$0xf]
      %v456 = vld [vmem:[%s412 + $0x2c] sm:$0xf]
      %v457 = vld [vmem:[%s412 + $0x30] sm:$0xf]
      %v458 = vld [vmem:[%s412 + $0x34] sm:$0xf]
      %v459 = vld [vmem:[%s412 + $0x38] sm:$0xf]
      %v460 = vld [vmem:[%s412 + $0x3c] sm:$0xf]
      %v461 = vld [vmem:[%s412 + $0x40] sm:$0xf]
      %v462 = vld [vmem:[%s412 + $0x44] sm:$0xf]
      %v463 = vld [vmem:[%s412 + $0x48] sm:$0xf]
      %v464 = vld [vmem:[%s412 + $0x4c] sm:$0xf]
      %v465 = vld [vmem:[%s412 + $0x50] sm:$0xf]
      %v466 = vld [vmem:[%s412 + $0x54] sm:$0xf]
      %v467 = vld [vmem:[%s412 + $0x58] sm:$0xf]
      %v468 = vld [vmem:[%s412 + $0x5c] sm:$0xf]
      %v469 = vld [vmem:[%s412 + $0x60] sm:$0xf]
      %v470 = vld [vmem:[%s412 + $0x64] sm:$0xf]
      %v471 = vld [vmem:[%s412 + $0x68] sm:$0xf]
      %v472 = vld [vmem:[%s412 + $0x6c] sm:$0xf]
      %v473 = vld [vmem:[%s412 + $0x70] sm:$0xf]
      %v474 = vld [vmem:[%s412 + $0x74] sm:$0xf]
      %v475 = vld [vmem:[%s412 + $0x78] sm:$0xf]
      %v476 = vld [vmem:[%s412 + $0x7c] sm:$0xf]
      %v477 = vld [vmem:[%s4] sm:$0xff]
      %v478 = vld [vmem:[%s4 + $0x8] sm:$0xff]
      %v479 = vld [vmem:[%s4 + $0x10] sm:$0xff]
      %v480 = vld [vmem:[%s4 + $0x18] sm:$0xff]
      %v481 = vld [vmem:[%s4 + $0x20] sm:$0xff]
      %v482 = vld [vmem:[%s4 + $0x28] sm:$0xff]
      %v483 = vld [vmem:[%s4 + $0x30] sm:$0xff]
      %v484 = vld [vmem:[%s4 + $0x38] sm:$0xff]
      %v485 = vld [vmem:[%s418] sm:$0xf]
      %v486 = vld [vmem:[%s418 + $0x4] sm:$0xf]
      %v487 = vld [vmem:[%s418 + $0x8] sm:$0xf]
      %v488 = vld [vmem:[%s418 + $0xc] sm:$0xf]
      %v489 = vld [vmem:[%s418 + $0x10] sm:$0xf]
      %v490 = vld [vmem:[%s418 + $0x14] sm:$0xf]
      %v491 = vld [vmem:[%s418 + $0x18] sm:$0xf]
      %v492 = vld [vmem:[%s418 + $0x1c] sm:$0xf]
      %v493 = vld [vmem:[%s418 + $0x20] sm:$0xf]
      %v494 = vld [vmem:[%s418 + $0x24] sm:$0xf]
      %v495 = vld [vmem:[%s418 + $0x28] sm:$0xf]
      %v496 = vld [vmem:[%s418 + $0x2c] sm:$0xf]
      %v497 = vld [vmem:[%s418 + $0x30] sm:$0xf]
      %v498 = vld [vmem:[%s418 + $0x34] sm:$0xf]
      %v499 = vld [vmem:[%s418 + $0x38] sm:$0xf]
      %v500 = vld [vmem:[%s418 + $0x3c] sm:$0xf]
      %v501 = vld [vmem:[%s418 + $0x40] sm:$0xf]
      %v502 = vld [vmem:[%s418 + $0x44] sm:$0xf]
      %v503 = vld [vmem:[%s418 + $0x48] sm:$0xf]
      %v504 = vld [vmem:[%s418 + $0x4c] sm:$0xf]
      %v505 = vld [vmem:[%s418 + $0x50] sm:$0xf]
      %v506 = vld [vmem:[%s418 + $0x54] sm:$0xf]
      %v507 = vld [vmem:[%s418 + $0x58] sm:$0xf]
      %v508 = vld [vmem:[%s418 + $0x5c] sm:$0xf]
      %v509 = vld [vmem:[%s418 + $0x60] sm:$0xf]
      %v510 = vld [vmem:[%s418 + $0x64] sm:$0xf]
      %v511 = vld [vmem:[%s418 + $0x68] sm:$0xf]
      %v512 = vld [vmem:[%s418 + $0x6c] sm:$0xf]
      %v513 = vld [vmem:[%s418 + $0x70] sm:$0xf]
      %v514 = vld [vmem:[%s418 + $0x74] sm:$0xf]
      %v515 = vld [vmem:[%s418 + $0x78] sm:$0xf]
      %v516 = vld [vmem:[%s418 + $0x7c] sm:$0xf]
      %v517 = vld [vmem:[%s5] sm:$0xff]
      %v518 = vld [vmem:[%s5 + $0x8] sm:$0xff]
      %v519 = vld [vmem:[%s5 + $0x10] sm:$0xff]
      %v520 = vld [vmem:[%s5 + $0x18] sm:$0xff]
      %v521 = vld [vmem:[%s5 + $0x20] sm:$0xff]
      %v522 = vld [vmem:[%s5 + $0x28] sm:$0xff]
      %v523 = vld [vmem:[%s5 + $0x30] sm:$0xff]
      %v524 = vld [vmem:[%s5 + $0x38] sm:$0xff]
      %v557 = vunpack.c.l.b16 %v485
      %v558 = vunpack.c.l.b16 %v486
      %v559 = vunpack.c.l.b16 %v487
      %v560 = vunpack.c.l.b16 %v488
      %v561 = vunpack.c.l.b16 %v489
      %v562 = vunpack.c.l.b16 %v490
      %v563 = vunpack.c.l.b16 %v491
      %v564 = vunpack.c.l.b16 %v492
      %v565 = vunpack.c.l.b16 %v493
      %v566 = vunpack.c.l.b16 %v494
      %v567 = vunpack.c.l.b16 %v495
      %v568 = vunpack.c.l.b16 %v496
      %v569 = vunpack.c.l.b16 %v497
      %v570 = vunpack.c.l.b16 %v498
      %v571 = vunpack.c.l.b16 %v499
      %v572 = vunpack.c.l.b16 %v500
      %v573 = vunpack.c.l.b16 %v501
      %v574 = vunpack.c.l.b16 %v502
      %v575 = vunpack.c.l.b16 %v503
      %v576 = vunpack.c.l.b16 %v504
      %v577 = vunpack.c.l.b16 %v505
      %v578 = vunpack.c.l.b16 %v506
      %v579 = vunpack.c.l.b16 %v507
      %v580 = vunpack.c.l.b16 %v508
      %v581 = vunpack.c.l.b16 %v509
      %v582 = vunpack.c.l.b16 %v510
      %v583 = vunpack.c.l.b16 %v511
      %v584 = vunpack.c.l.b16 %v512
      %v585 = vunpack.c.l.b16 %v513
      %v586 = vunpack.c.l.b16 %v514
      %v587 = vunpack.c.l.b16 %v515
      %v588 = vunpack.c.l.b16 %v516
      %v589 = vpack.c.b16 %v558, %v557
      %v590 = vpack.c.b16 %v560, %v559
      %v591 = vpack.c.b16 %v562, %v561
      %v592 = vpack.c.b16 %v564, %v563
      %v593 = vpack.c.b16 %v566, %v565
      %v594 = vpack.c.b16 %v568, %v567
      %v595 = vpack.c.b16 %v570, %v569
      %v596 = vpack.c.b16 %v572, %v571
      %v597 = vpack.c.b16 %v574, %v573
      %v598 = vpack.c.b16 %v576, %v575
      %v599 = vpack.c.b16 %v578, %v577
      %v600 = vpack.c.b16 %v580, %v579
      %v601 = vpack.c.b16 %v582, %v581
      %v602 = vpack.c.b16 %v584, %v583
      %v603 = vpack.c.b16 %v586, %v585
      %v604 = vpack.c.b16 %v588, %v587
      %v613 = vunpack.c.l.b16 %v517
      %v614 = vunpack.c.h.b16 %v517
      %v615 = vunpack.c.l.b16 %v518
      %v616 = vunpack.c.h.b16 %v518
      %v617 = vunpack.c.l.b16 %v519
      %v618 = vunpack.c.h.b16 %v519
      %v619 = vunpack.c.l.b16 %v520
      %v620 = vunpack.c.h.b16 %v520
      %v621 = vunpack.c.l.b16 %v521
      %v622 = vunpack.c.h.b16 %v521
      %v623 = vunpack.c.l.b16 %v522
      %v624 = vunpack.c.h.b16 %v522
      %v625 = vunpack.c.l.b16 %v523
      %v626 = vunpack.c.h.b16 %v523
      %v627 = vunpack.c.l.b16 %v524
      %v628 = vunpack.c.h.b16 %v524
      %v629 = vpack.c.b16 %v615, %v613
      %v630 = vpack.c.b16 %v616, %v614
      %v631 = vpack.c.b16 %v619, %v617
      %v632 = vpack.c.b16 %v620, %v618
      %v633 = vpack.c.b16 %v623, %v621
      %v634 = vpack.c.b16 %v624, %v622
      %v635 = vpack.c.b16 %v627, %v625
      %v636 = vpack.c.b16 %v628, %v626
      %vm645 = vcmask 523264
      %v647 = vsel %vm645, %v589, 0
      %v650 = vsel %vm645, %v590, 0
      %v653 = vsel %vm645, %v591, 0
      %v656 = vsel %vm645, %v592, 0
      %v659 = vsel %vm645, %v593, 0
      %v662 = vsel %vm645, %v594, 0
      %v665 = vsel %vm645, %v595, 0
      %v668 = vsel %vm645, %v596, 0
      %v671 = vsel %vm645, %v597, 0
      %v674 = vsel %vm645, %v598, 0
      %v677 = vsel %vm645, %v599, 0
      %v680 = vsel %vm645, %v600, 0
      %v683 = vsel %vm645, %v601, 0
      %v686 = vsel %vm645, %v602, 0
      %v689 = vsel %vm645, %v603, 0
      %v692 = vsel %vm645, %v604, 0
      %694 = vmatprep.subr.bf16.mxu0 %v630
      %695 = vmatpush1.bf16.msra.mxu0 %v629
      %696 = vmatprep.subr.bf16.mxu0 %v632
      %697 = vmatpush1.bf16.msra.mxu0 %v631
      %698 = vmatprep.subr.bf16.mxu0 %v634
      %699 = vmatpush1.bf16.msra.mxu0 %v633
      %700 = vmatprep.subr.bf16.mxu0 %v636
      %701 = vmatpush1.bf16.msra.mxu0 %v635
      %702 = vmatprep.subr.bf16.mxu0 0
      %703 = vmatpush1.bf16.msra.mxu0 0
      %704 = vmatprep.subr.bf16.mxu0 0
      %705 = vmatpush1.bf16.msra.mxu0 0
      %706 = vmatprep.subr.bf16.mxu0 0
      %707 = vmatpush1.bf16.msra.mxu0 0
      %708 = vmatprep.subr.bf16.mxu0 0
      %709 = vmatpush1.bf16.msra.mxu0 0
      %710 = vmatprep.subr.bf16.mxu0 0
      %711 = vmatpush1.bf16.msra.mxu0 0
      %712 = vmatprep.subr.bf16.mxu0 0
      %713 = vmatpush1.bf16.msra.mxu0 0
      %714 = vmatprep.subr.bf16.mxu0 0
      %715 = vmatpush1.bf16.msra.mxu0 0
      %716 = vmatprep.subr.bf16.mxu0 0
      %717 = vmatpush1.bf16.msra.mxu0 0
      %718 = vmatprep.subr.bf16.mxu0 0
      %719 = vmatpush1.bf16.msra.mxu0 0
      %720 = vmatprep.subr.bf16.mxu0 0
      %721 = vmatpush1.bf16.msra.mxu0 0
      %722 = vmatprep.subr.bf16.mxu0 0
      %723 = vmatpush1.bf16.msra.mxu0 0
      %724 = vmatprep.subr.bf16.mxu0 0
      %725 = vmatpush1.bf16.msra.mxu0 0
      %726 = vmatprep.mubr.bf16.mxu0 0
      %727 = vmatmul.mubr.bf16.gmra.mrb[0].mxu0 %v647
      %v728 = vpop.f32.mrb[0].mxu0
      %v729 = vadd.f32 0.0, %v728
      %v730 = vpop.f32.mrb[0].mxu0
      %v731 = vadd.f32 0.0, %v730
      %v732 = vpop.f32.mrb[0].mxu0
      %v733 = vadd.f32 0.0, %v732
      %v734 = vpop.f32.mrb[0].mxu0
      %v735 = vadd.f32 0.0, %v734
      %736 = vmatprep.mubr.bf16.mxu0 0
      %737 = vmatmul.mubr.bf16.gmra.mrb[0].mxu0 %v650
      %v738 = vpop.f32.mrb[0].mxu0
      %v739 = vadd.f32 0.0, %v738
      %v740 = vpop.f32.mrb[0].mxu0
      %v741 = vadd.f32 0.0, %v740
      %v742 = vpop.f32.mrb[0].mxu0
      %v743 = vadd.f32 0.0, %v742
      %v744 = vpop.f32.mrb[0].mxu0
      %v745 = vadd.f32 0.0, %v744
      %746 = vmatprep.mubr.bf16.mxu0 0
      %747 = vmatmul.mubr.bf16.gmra.mrb[0].mxu0 %v653
      %v748 = vpop.f32.mrb[0].mxu0
      %v749 = vadd.f32 0.0, %v748
      %v750 = vpop.f32.mrb[0].mxu0
      %v751 = vadd.f32 0.0, %v750
      %v752 = vpop.f32.mrb[0].mxu0
      %v753 = vadd.f32 0.0, %v752
      %v754 = vpop.f32.mrb[0].mxu0
      %v755 = vadd.f32 0.0, %v754
      %756 = vmatprep.mubr.bf16.mxu0 0
      %757 = vmatmul.mubr.bf16.gmra.mrb[0].mxu0 %v656
      %v758 = vpop.f32.mrb[0].mxu0
      %v759 = vadd.f32 0.0, %v758
      %v760 = vpop.f32.mrb[0].mxu0
      %v761 = vadd.f32 0.0, %v760
      %v762 = vpop.f32.mrb[0].mxu0
      %v763 = vadd.f32 0.0, %v762
      %v764 = vpop.f32.mrb[0].mxu0
      %v765 = vadd.f32 0.0, %v764
      %766 = vmatprep.mubr.bf16.mxu0 0
      %767 = vmatmul.mubr.bf16.gmra.mrb[0].mxu0 %v659
      %v768 = vpop.f32.mrb[0].mxu0
      %v769 = vadd.f32 0.0, %v768
      %v770 = vpop.f32.mrb[0].mxu0
      %v771 = vadd.f32 0.0, %v770
      %v772 = vpop.f32.mrb[0].mxu0
      %v773 = vadd.f32 0.0, %v772
      %v774 = vpop.f32.mrb[0].mxu0
      %v775 = vadd.f32 0.0, %v774
      %776 = vmatprep.mubr.bf16.mxu0 0
      %777 = vmatmul.mubr.bf16.gmra.mrb[0].mxu0 %v662
      %v778 = vpop.f32.mrb[0].mxu0
      %v779 = vadd.f32 0.0, %v778
      %v780 = vpop.f32.mrb[0].mxu0
      %v781 = vadd.f32 0.0, %v780
      %v782 = vpop.f32.mrb[0].mxu0
      %v783 = vadd.f32 0.0, %v782
      %v784 = vpop.f32.mrb[0].mxu0
      %v785 = vadd.f32 0.0, %v784
      %786 = vmatprep.mubr.bf16.mxu0 0
      %787 = vmatmul.mubr.bf16.gmra.mrb[0].mxu0 %v665
      %v788 = vpop.f32.mrb[0].mxu0
      %v789 = vadd.f32 0.0, %v788
      %v790 = vpop.f32.mrb[0].mxu0
      %v791 = vadd.f32 0.0, %v790
      %v792 = vpop.f32.mrb[0].mxu0
      %v793 = vadd.f32 0.0, %v792
      %v794 = vpop.f32.mrb[0].mxu0
      %v795 = vadd.f32 0.0, %v794
      %796 = vmatprep.mubr.bf16.mxu0 0
      %797 = vmatmul.mubr.bf16.gmra.mrb[0].mxu0 %v668
      %v798 = vpop.f32.mrb[0].mxu0
      %v799 = vadd.f32 0.0, %v798
      %v800 = vpop.f32.mrb[0].mxu0
      %v801 = vadd.f32 0.0, %v800
      %v802 = vpop.f32.mrb[0].mxu0
      %v803 = vadd.f32 0.0, %v802
      %v804 = vpop.f32.mrb[0].mxu0
      %v805 = vadd.f32 0.0, %v804
      %806 = vmatprep.mubr.bf16.mxu0 0
      %807 = vmatmul.mubr.bf16.gmra.mrb[0].mxu0 %v671
      %v808 = vpop.f32.mrb[0].mxu0
      %v809 = vadd.f32 0.0, %v808
      %v810 = vpop.f32.mrb[0].mxu0
      %v811 = vadd.f32 0.0, %v810
      %v812 = vpop.f32.mrb[0].mxu0
      %v813 = vadd.f32 0.0, %v812
      %v814 = vpop.f32.mrb[0].mxu0
      %v815 = vadd.f32 0.0, %v814
      %816 = vmatprep.mubr.bf16.mxu0 0
      %817 = vmatmul.mubr.bf16.gmra.mrb[0].mxu0 %v674
      %v818 = vpop.f32.mrb[0].mxu0
      %v819 = vadd.f32 0.0, %v818
      %v820 = vpop.f32.mrb[0].mxu0
      %v821 = vadd.f32 0.0, %v820
      %v822 = vpop.f32.mrb[0].mxu0
      %v823 = vadd.f32 0.0, %v822
      %v824 = vpop.f32.mrb[0].mxu0
      %v825 = vadd.f32 0.0, %v824
      %826 = vmatprep.mubr.bf16.mxu0 0
      %827 = vmatmul.mubr.bf16.gmra.mrb[0].mxu0 %v677
      %v828 = vpop.f32.mrb[0].mxu0
      %v829 = vadd.f32 0.0, %v828
      %v830 = vpop.f32.mrb[0].mxu0
      %v831 = vadd.f32 0.0, %v830
      %v832 = vpop.f32.mrb[0].mxu0
      %v833 = vadd.f32 0.0, %v832
      %v834 = vpop.f32.mrb[0].mxu0
      %v835 = vadd.f32 0.0, %v834
      %836 = vmatprep.mubr.bf16.mxu0 0
      %837 = vmatmul.mubr.bf16.gmra.mrb[0].mxu0 %v680
      %v838 = vpop.f32.mrb[0].mxu0
      %v839 = vadd.f32 0.0, %v838
      %v840 = vpop.f32.mrb[0].mxu0
      %v841 = vadd.f32 0.0, %v840
      %v842 = vpop.f32.mrb[0].mxu0
      %v843 = vadd.f32 0.0, %v842
      %v844 = vpop.f32.mrb[0].mxu0
      %v845 = vadd.f32 0.0, %v844
      %846 = vmatprep.mubr.bf16.mxu0 0
      %847 = vmatmul.mubr.bf16.gmra.mrb[0].mxu0 %v683
      %v848 = vpop.f32.mrb[0].mxu0
      %v849 = vadd.f32 0.0, %v848
      %v850 = vpop.f32.mrb[0].mxu0
      %v851 = vadd.f32 0.0, %v850
      %v852 = vpop.f32.mrb[0].mxu0
      %v853 = vadd.f32 0.0, %v852
      %v854 = vpop.f32.mrb[0].mxu0
      %v855 = vadd.f32 0.0, %v854
      %856 = vmatprep.mubr.bf16.mxu0 0
      %857 = vmatmul.mubr.bf16.gmra.mrb[0].mxu0 %v686
      %v858 = vpop.f32.mrb[0].mxu0
      %v859 = vadd.f32 0.0, %v858
      %v860 = vpop.f32.mrb[0].mxu0
      %v861 = vadd.f32 0.0, %v860
      %v862 = vpop.f32.mrb[0].mxu0
      %v863 = vadd.f32 0.0, %v862
      %v864 = vpop.f32.mrb[0].mxu0
      %v865 = vadd.f32 0.0, %v864
      %866 = vmatprep.mubr.bf16.mxu0 0
      %867 = vmatmul.mubr.bf16.gmra.mrb[0].mxu0 %v689
      %v868 = vpop.f32.mrb[0].mxu0
      %v869 = vadd.f32 0.0, %v868
      %v870 = vpop.f32.mrb[0].mxu0
      %v871 = vadd.f32 0.0, %v870
      %v872 = vpop.f32.mrb[0].mxu0
      %v873 = vadd.f32 0.0, %v872
      %v874 = vpop.f32.mrb[0].mxu0
      %v875 = vadd.f32 0.0, %v874
      %876 = vmatprep.mubr.bf16.mxu0 0
      %877 = vmatmul.mubr.bf16.gmra.mrb[0].mxu0 %v692
      %v878 = vpop.f32.mrb[0].mxu0
      %v879 = vadd.f32 0.0, %v878
      %v880 = vpop.f32.mrb[0].mxu0
      %v881 = vadd.f32 0.0, %v880
      %v882 = vpop.f32.mrb[0].mxu0
      %v883 = vadd.f32 0.0, %v882
      %v884 = vpop.f32.mrb[0].mxu0
      %v885 = vadd.f32 0.0, %v884
      %886 = vdwg.mxu0
      %v919 = vunpack.c.l.b16 %v445
      %v920 = vunpack.c.l.b16 %v446
      %v921 = vunpack.c.l.b16 %v447
      %v922 = vunpack.c.l.b16 %v448
      %v923 = vunpack.c.l.b16 %v449
      %v924 = vunpack.c.l.b16 %v450
      %v925 = vunpack.c.l.b16 %v451
      %v926 = vunpack.c.l.b16 %v452
      %v927 = vunpack.c.l.b16 %v453
      %v928 = vunpack.c.l.b16 %v454
      %v929 = vunpack.c.l.b16 %v455
      %v930 = vunpack.c.l.b16 %v456
      %v931 = vunpack.c.l.b16 %v457
      %v932 = vunpack.c.l.b16 %v458
      %v933 = vunpack.c.l.b16 %v459
      %v934 = vunpack.c.l.b16 %v460
      %v935 = vunpack.c.l.b16 %v461
      %v936 = vunpack.c.l.b16 %v462
      %v937 = vunpack.c.l.b16 %v463
      %v938 = vunpack.c.l.b16 %v464
      %v939 = vunpack.c.l.b16 %v465
      %v940 = vunpack.c.l.b16 %v466
      %v941 = vunpack.c.l.b16 %v467
      %v942 = vunpack.c.l.b16 %v468
      %v943 = vunpack.c.l.b16 %v469
      %v944 = vunpack.c.l.b16 %v470
      %v945 = vunpack.c.l.b16 %v471
      %v946 = vunpack.c.l.b16 %v472
      %v947 = vunpack.c.l.b16 %v473
      %v948 = vunpack.c.l.b16 %v474
      %v949 = vunpack.c.l.b16 %v475
      %v950 = vunpack.c.l.b16 %v476
      %v951 = vpack.c.b16 %v920, %v919
      %v952 = vpack.c.b16 %v922, %v921
      %v953 = vpack.c.b16 %v924, %v923
      %v954 = vpack.c.b16 %v926, %v925
      %v955 = vpack.c.b16 %v928, %v927
      %v956 = vpack.c.b16 %v930, %v929
      %v957 = vpack.c.b16 %v932, %v931
      %v958 = vpack.c.b16 %v934, %v933
      %v959 = vpack.c.b16 %v936, %v935
      %v960 = vpack.c.b16 %v938, %v937
      %v961 = vpack.c.b16 %v940, %v939
      %v962 = vpack.c.b16 %v942, %v941
      %v963 = vpack.c.b16 %v944, %v943
      %v964 = vpack.c.b16 %v946, %v945
      %v965 = vpack.c.b16 %v948, %v947
      %v966 = vpack.c.b16 %v950, %v949
      %v975 = vunpack.c.l.b16 %v477
      %v976 = vunpack.c.h.b16 %v477
      %v977 = vunpack.c.l.b16 %v478
      %v978 = vunpack.c.h.b16 %v478
      %v979 = vunpack.c.l.b16 %v479
      %v980 = vunpack.c.h.b16 %v479
      %v981 = vunpack.c.l.b16 %v480
      %v982 = vunpack.c.h.b16 %v480
      %v983 = vunpack.c.l.b16 %v481
      %v984 = vunpack.c.h.b16 %v481
      %v985 = vunpack.c.l.b16 %v482
      %v986 = vunpack.c.h.b16 %v482
      %v987 = vunpack.c.l.b16 %v483
      %v988 = vunpack.c.h.b16 %v483
      %v989 = vunpack.c.l.b16 %v484
      %v990 = vunpack.c.h.b16 %v484
      %v991 = vpack.c.b16 %v977, %v975
      %v992 = vpack.c.b16 %v978, %v976
      %v993 = vpack.c.b16 %v981, %v979
      %v994 = vpack.c.b16 %v982, %v980
      %v995 = vpack.c.b16 %v985, %v983
      %v996 = vpack.c.b16 %v986, %v984
      %v997 = vpack.c.b16 %v989, %v987
      %v998 = vpack.c.b16 %v990, %v988
      %v1008 = vsel %vm645, %v951, 0
      %v1011 = vsel %vm645, %v952, 0
      %v1014 = vsel %vm645, %v953, 0
      %v1017 = vsel %vm645, %v954, 0
      %v1020 = vsel %vm645, %v955, 0
      %v1023 = vsel %vm645, %v956, 0
      %v1026 = vsel %vm645, %v957, 0
      %v1029 = vsel %vm645, %v958, 0
      %v1032 = vsel %vm645, %v959, 0
      %v1035 = vsel %vm645, %v960, 0
      %v1038 = vsel %vm645, %v961, 0
      %v1041 = vsel %vm645, %v962, 0
      %v1044 = vsel %vm645, %v963, 0
      %v1047 = vsel %vm645, %v964, 0
      %v1050 = vsel %vm645, %v965, 0
      %v1053 = vsel %vm645, %v966, 0
      %1055 = vmatprep.subr.bf16.mxu0 %v992
      %1056 = vmatpush1.bf16.msra.mxu0 %v991
      %1057 = vmatprep.subr.bf16.mxu0 %v994
      %1058 = vmatpush1.bf16.msra.mxu0 %v993
      %1059 = vmatprep.subr.bf16.mxu0 %v996
      %1060 = vmatpush1.bf16.msra.mxu0 %v995
      %1061 = vmatprep.subr.bf16.mxu0 %v998
      %1062 = vmatpush1.bf16.msra.mxu0 %v997
      %1063 = vmatprep.subr.bf16.mxu0 0
      %1064 = vmatpush1.bf16.msra.mxu0 0
      %1065 = vmatprep.subr.bf16.mxu0 0
      %1066 = vmatpush1.bf16.msra.mxu0 0
      %1067 = vmatprep.subr.bf16.mxu0 0
      %1068 = vmatpush1.bf16.msra.mxu0 0
      %1069 = vmatprep.subr.bf16.mxu0 0
      %1070 = vmatpush1.bf16.msra.mxu0 0
      %1071 = vmatprep.subr.bf16.mxu0 0
      %1072 = vmatpush1.bf16.msra.mxu0 0
      %1073 = vmatprep.subr.bf16.mxu0 0
      %1074 = vmatpush1.bf16.msra.mxu0 0
      %1075 = vmatprep.subr.bf16.mxu0 0
      %1076 = vmatpush1.bf16.msra.mxu0 0
      %1077 = vmatprep.subr.bf16.mxu0 0
      %1078 = vmatpush1.bf16.msra.mxu0 0
      %1079 = vmatprep.subr.bf16.mxu0 0
      %1080 = vmatpush1.bf16.msra.mxu0 0
      %1081 = vmatprep.subr.bf16.mxu0 0
      %1082 = vmatpush1.bf16.msra.mxu0 0
      %1083 = vmatprep.subr.bf16.mxu0 0
      %1084 = vmatpush1.bf16.msra.mxu0 0
      %1085 = vmatprep.subr.bf16.mxu0 0
      %1086 = vmatpush1.bf16.msra.mxu0 0
      %1087 = vmatprep.mubr.bf16.mxu0 0
      %1088 = vmatmul.mubr.bf16.gmra.mrb[0].mxu0 %v1008
      %v1089 = vpop.f32.mrb[0].mxu0
      %v1090 = vadd.f32 %v729, %v1089
      %v1091 = vpop.f32.mrb[0].mxu0
      %v1092 = vadd.f32 %v731, %v1091
      %v1093 = vpop.f32.mrb[0].mxu0
      %v1094 = vadd.f32 %v733, %v1093
      %v1095 = vpop.f32.mrb[0].mxu0
      %v1096 = vadd.f32 %v735, %v1095
      %1097 = vmatprep.mubr.bf16.mxu0 0
      %1098 = vmatmul.mubr.bf16.gmra.mrb[0].mxu0 %v1011
      %v1099 = vpop.f32.mrb[0].mxu0
      %v1100 = vadd.f32 %v739, %v1099
      %v1101 = vpop.f32.mrb[0].mxu0
      %v1102 = vadd.f32 %v741, %v1101
      %v1103 = vpop.f32.mrb[0].mxu0
      %v1104 = vadd.f32 %v743, %v1103
      %v1105 = vpop.f32.mrb[0].mxu0
      %v1106 = vadd.f32 %v745, %v1105
      %1107 = vmatprep.mubr.bf16.mxu0 0
      %1108 = vmatmul.mubr.bf16.gmra.mrb[0].mxu0 %v1014
      %v1109 = vpop.f32.mrb[0].mxu0
      %v1110 = vadd.f32 %v749, %v1109
      %v1111 = vpop.f32.mrb[0].mxu0
      %v1112 = vadd.f32 %v751, %v1111
      %v1113 = vpop.f32.mrb[0].mxu0
      %v1114 = vadd.f32 %v753, %v1113
      %v1115 = vpop.f32.mrb[0].mxu0
      %v1116 = vadd.f32 %v755, %v1115
      %1117 = vmatprep.mubr.bf16.mxu0 0
      %1118 = vmatmul.mubr.bf16.gmra.mrb[0].mxu0 %v1017
      %v1119 = vpop.f32.mrb[0].mxu0
      %v1120 = vadd.f32 %v759, %v1119
      %v1121 = vpop.f32.mrb[0].mxu0
      %v1122 = vadd.f32 %v761, %v1121
      %v1123 = vpop.f32.mrb[0].mxu0
      %v1124 = vadd.f32 %v763, %v1123
      %v1125 = vpop.f32.mrb[0].mxu0
      %v1126 = vadd.f32 %v765, %v1125
      %1127 = vmatprep.mubr.bf16.mxu0 0
      %1128 = vmatmul.mubr.bf16.gmra.mrb[0].mxu0 %v1020
      %v1129 = vpop.f32.mrb[0].mxu0
      %v1130 = vadd.f32 %v769, %v1129
      %v1131 = vpop.f32.mrb[0].mxu0
      %v1132 = vadd.f32 %v771, %v1131
      %v1133 = vpop.f32.mrb[0].mxu0
      %v1134 = vadd.f32 %v773, %v1133
      %v1135 = vpop.f32.mrb[0].mxu0
      %v1136 = vadd.f32 %v775, %v1135
      %1137 = vmatprep.mubr.bf16.mxu0 0
      %1138 = vmatmul.mubr.bf16.gmra.mrb[0].mxu0 %v1023
      %v1139 = vpop.f32.mrb[0].mxu0
      %v1140 = vadd.f32 %v779, %v1139
      %v1141 = vpop.f32.mrb[0].mxu0
      %v1142 = vadd.f32 %v781, %v1141
      %v1143 = vpop.f32.mrb[0].mxu0
      %v1144 = vadd.f32 %v783, %v1143
      %v1145 = vpop.f32.mrb[0].mxu0
      %v1146 = vadd.f32 %v785, %v1145
      %1147 = vmatprep.mubr.bf16.mxu0 0
      %1148 = vmatmul.mubr.bf16.gmra.mrb[0].mxu0 %v1026
      %v1149 = vpop.f32.mrb[0].mxu0
      %v1150 = vadd.f32 %v789, %v1149
      %v1151 = vpop.f32.mrb[0].mxu0
      %v1152 = vadd.f32 %v791, %v1151
      %v1153 = vpop.f32.mrb[0].mxu0
      %v1154 = vadd.f32 %v793, %v1153
      %v1155 = vpop.f32.mrb[0].mxu0
      %v1156 = vadd.f32 %v795, %v1155
      %1157 = vmatprep.mubr.bf16.mxu0 0
      %1158 = vmatmul.mubr.bf16.gmra.mrb[0].mxu0 %v1029
      %v1159 = vpop.f32.mrb[0].mxu0
      %v1160 = vadd.f32 %v799, %v1159
      %v1161 = vpop.f32.mrb[0].mxu0
      %v1162 = vadd.f32 %v801, %v1161
      %v1163 = vpop.f32.mrb[0].mxu0
      %v1164 = vadd.f32 %v803, %v1163
      %v1165 = vpop.f32.mrb[0].mxu0
      %v1166 = vadd.f32 %v805, %v1165
      %1167 = vmatprep.mubr.bf16.mxu0 0
      %1168 = vmatmul.mubr.bf16.gmra.mrb[0].mxu0 %v1032
      %v1169 = vpop.f32.mrb[0].mxu0
      %v1170 = vadd.f32 %v809, %v1169
      %v1171 = vpop.f32.mrb[0].mxu0
      %v1172 = vadd.f32 %v811, %v1171
      %v1173 = vpop.f32.mrb[0].mxu0
      %v1174 = vadd.f32 %v813, %v1173
      %v1175 = vpop.f32.mrb[0].mxu0
      %v1176 = vadd.f32 %v815, %v1175
      %1177 = vmatprep.mubr.bf16.mxu0 0
      %1178 = vmatmul.mubr.bf16.gmra.mrb[0].mxu0 %v1035
      %v1179 = vpop.f32.mrb[0].mxu0
      %v1180 = vadd.f32 %v819, %v1179
      %v1181 = vpop.f32.mrb[0].mxu0
      %v1182 = vadd.f32 %v821, %v1181
      %v1183 = vpop.f32.mrb[0].mxu0
      %v1184 = vadd.f32 %v823, %v1183
      %v1185 = vpop.f32.mrb[0].mxu0
      %v1186 = vadd.f32 %v825, %v1185
      %1187 = vmatprep.mubr.bf16.mxu0 0
      %1188 = vmatmul.mubr.bf16.gmra.mrb[0].mxu0 %v1038
      %v1189 = vpop.f32.mrb[0].mxu0
      %v1190 = vadd.f32 %v829, %v1189
      %v1191 = vpop.f32.mrb[0].mxu0
      %v1192 = vadd.f32 %v831, %v1191
      %v1193 = vpop.f32.mrb[0].mxu0
      %v1194 = vadd.f32 %v833, %v1193
      %v1195 = vpop.f32.mrb[0].mxu0
      %v1196 = vadd.f32 %v835, %v1195
      %1197 = vmatprep.mubr.bf16.mxu0 0
      %1198 = vmatmul.mubr.bf16.gmra.mrb[0].mxu0 %v1041
      %v1199 = vpop.f32.mrb[0].mxu0
      %v1200 = vadd.f32 %v839, %v1199
      %v1201 = vpop.f32.mrb[0].mxu0
      %v1202 = vadd.f32 %v841, %v1201
      %v1203 = vpop.f32.mrb[0].mxu0
      %v1204 = vadd.f32 %v843, %v1203
      %v1205 = vpop.f32.mrb[0].mxu0
      %v1206 = vadd.f32 %v845, %v1205
      %1207 = vmatprep.mubr.bf16.mxu0 0
      %1208 = vmatmul.mubr.bf16.gmra.mrb[0].mxu0 %v1044
      %v1209 = vpop.f32.mrb[0].mxu0
      %v1210 = vadd.f32 %v849, %v1209
      %v1211 = vpop.f32.mrb[0].mxu0
      %v1212 = vadd.f32 %v851, %v1211
      %v1213 = vpop.f32.mrb[0].mxu0
      %v1214 = vadd.f32 %v853, %v1213
      %v1215 = vpop.f32.mrb[0].mxu0
      %v1216 = vadd.f32 %v855, %v1215
      %1217 = vmatprep.mubr.bf16.mxu0 0
      %1218 = vmatmul.mubr.bf16.gmra.mrb[0].mxu0 %v1047
      %v1219 = vpop.f32.mrb[0].mxu0
      %v1220 = vadd.f32 %v859, %v1219
      %v1221 = vpop.f32.mrb[0].mxu0
      %v1222 = vadd.f32 %v861, %v1221
      %v1223 = vpop.f32.mrb[0].mxu0
      %v1224 = vadd.f32 %v863, %v1223
      %v1225 = vpop.f32.mrb[0].mxu0
      %v1226 = vadd.f32 %v865, %v1225
      %1227 = vmatprep.mubr.bf16.mxu0 0
      %1228 = vmatmul.mubr.bf16.gmra.mrb[0].mxu0 %v1050
      %v1229 = vpop.f32.mrb[0].mxu0
      %v1230 = vadd.f32 %v869, %v1229
      %v1231 = vpop.f32.mrb[0].mxu0
      %v1232 = vadd.f32 %v871, %v1231
      %v1233 = vpop.f32.mrb[0].mxu0
      %v1234 = vadd.f32 %v873, %v1233
      %v1235 = vpop.f32.mrb[0].mxu0
      %v1236 = vadd.f32 %v875, %v1235
      %1237 = vmatprep.mubr.bf16.mxu0 0
      %1238 = vmatmul.mubr.bf16.gmra.mrb[0].mxu0 %v1053
      %v1239 = vpop.f32.mrb[0].mxu0
      %v1240 = vadd.f32 %v879, %v1239
      %v1241 = vpop.f32.mrb[0].mxu0
      %v1242 = vadd.f32 %v881, %v1241
      %v1243 = vpop.f32.mrb[0].mxu0
      %v1244 = vadd.f32 %v883, %v1243
      %v1245 = vpop.f32.mrb[0].mxu0
      %v1246 = vadd.f32 %v885, %v1245
      %1247 = vdwg.mxu0
      %v1248 = vld [vmem:[%s424] sm:$0xf]
      %v1249 = vld [vmem:[%s424 + $0x4] sm:$0xf]
      %v1250 = vld [vmem:[%s424 + $0x8] sm:$0xf]
      %v1251 = vld [vmem:[%s424 + $0xc] sm:$0xf]
      %v1252 = vld [vmem:[%s424 + $0x10] sm:$0xf]
      %v1253 = vld [vmem:[%s424 + $0x14] sm:$0xf]
      %v1254 = vld [vmem:[%s424 + $0x18] sm:$0xf]
      %v1255 = vld [vmem:[%s424 + $0x1c] sm:$0xf]
      %v1256 = vld [vmem:[%s424 + $0x20] sm:$0xf]
      %v1257 = vld [vmem:[%s424 + $0x24] sm:$0xf]
      %v1258 = vld [vmem:[%s424 + $0x28] sm:$0xf]
      %v1259 = vld [vmem:[%s424 + $0x2c] sm:$0xf]
      %v1260 = vld [vmem:[%s424 + $0x30] sm:$0xf]
      %v1261 = vld [vmem:[%s424 + $0x34] sm:$0xf]
      %v1262 = vld [vmem:[%s424 + $0x38] sm:$0xf]
      %v1263 = vld [vmem:[%s424 + $0x3c] sm:$0xf]
      %v1264 = vld [vmem:[%s424 + $0x40] sm:$0xf]
      %v1265 = vld [vmem:[%s424 + $0x44] sm:$0xf]
      %v1266 = vld [vmem:[%s424 + $0x48] sm:$0xf]
      %v1267 = vld [vmem:[%s424 + $0x4c] sm:$0xf]
      %v1268 = vld [vmem:[%s424 + $0x50] sm:$0xf]
      %v1269 = vld [vmem:[%s424 + $0x54] sm:$0xf]
      %v1270 = vld [vmem:[%s424 + $0x58] sm:$0xf]
      %v1271 = vld [vmem:[%s424 + $0x5c] sm:$0xf]
      %v1272 = vld [vmem:[%s424 + $0x60] sm:$0xf]
      %v1273 = vld [vmem:[%s424 + $0x64] sm:$0xf]
      %v1274 = vld [vmem:[%s424 + $0x68] sm:$0xf]
      %v1275 = vld [vmem:[%s424 + $0x6c] sm:$0xf]
      %v1276 = vld [vmem:[%s424 + $0x70] sm:$0xf]
      %v1277 = vld [vmem:[%s424 + $0x74] sm:$0xf]
      %v1278 = vld [vmem:[%s424 + $0x78] sm:$0xf]
      %v1279 = vld [vmem:[%s424 + $0x7c] sm:$0xf]
      %v1280 = vld [vmem:[%s6] sm:$0xff]
      %v1281 = vld [vmem:[%s6 + $0x8] sm:$0xff]
      %v1282 = vld [vmem:[%s6 + $0x10] sm:$0xff]
      %v1283 = vld [vmem:[%s6 + $0x18] sm:$0xff]
      %v1284 = vld [vmem:[%s6 + $0x20] sm:$0xff]
      %v1285 = vld [vmem:[%s6 + $0x28] sm:$0xff]
      %v1286 = vld [vmem:[%s6 + $0x30] sm:$0xff]
      %v1287 = vld [vmem:[%s6 + $0x38] sm:$0xff]
      %v1320 = vunpack.c.l.b16 %v1248
      %v1321 = vunpack.c.l.b16 %v1249
      %v1322 = vunpack.c.l.b16 %v1250
      %v1323 = vunpack.c.l.b16 %v1251
      %v1324 = vunpack.c.l.b16 %v1252
      %v1325 = vunpack.c.l.b16 %v1253
      %v1326 = vunpack.c.l.b16 %v1254
      %v1327 = vunpack.c.l.b16 %v1255
      %v1328 = vunpack.c.l.b16 %v1256
      %v1329 = vunpack.c.l.b16 %v1257
      %v1330 = vunpack.c.l.b16 %v1258
      %v1331 = vunpack.c.l.b16 %v1259
      %v1332 = vunpack.c.l.b16 %v1260
      %v1333 = vunpack.c.l.b16 %v1261
      %v1334 = vunpack.c.l.b16 %v1262
      %v1335 = vunpack.c.l.b16 %v1263
      %v1336 = vunpack.c.l.b16 %v1264
      %v1337 = vunpack.c.l.b16 %v1265
      %v1338 = vunpack.c.l.b16 %v1266
      %v1339 = vunpack.c.l.b16 %v1267
      %v1340 = vunpack.c.l.b16 %v1268
      %v1341 = vunpack.c.l.b16 %v1269
      %v1342 = vunpack.c.l.b16 %v1270
      %v1343 = vunpack.c.l.b16 %v1271
      %v1344 = vunpack.c.l.b16 %v1272
      %v1345 = vunpack.c.l.b16 %v1273
      %v1346 = vunpack.c.l.b16 %v1274
      %v1347 = vunpack.c.l.b16 %v1275
      %v1348 = vunpack.c.l.b16 %v1276
      %v1349 = vunpack.c.l.b16 %v1277
      %v1350 = vunpack.c.l.b16 %v1278
      %v1351 = vunpack.c.l.b16 %v1279
      %v1352 = vpack.c.b16 %v1321, %v1320
      %v1353 = vpack.c.b16 %v1323, %v1322
      %v1354 = vpack.c.b16 %v1325, %v1324
      %v1355 = vpack.c.b16 %v1327, %v1326
      %v1356 = vpack.c.b16 %v1329, %v1328
      %v1357 = vpack.c.b16 %v1331, %v1330
      %v1358 = vpack.c.b16 %v1333, %v1332
      %v1359 = vpack.c.b16 %v1335, %v1334
      %v1360 = vpack.c.b16 %v1337, %v1336
      %v1361 = vpack.c.b16 %v1339, %v1338
      %v1362 = vpack.c.b16 %v1341, %v1340
      %v1363 = vpack.c.b16 %v1343, %v1342
      %v1364 = vpack.c.b16 %v1345, %v1344
      %v1365 = vpack.c.b16 %v1347, %v1346
      %v1366 = vpack.c.b16 %v1349, %v1348
      %v1367 = vpack.c.b16 %v1351, %v1350
      %v1376 = vunpack.c.l.b16 %v1280
      %v1377 = vunpack.c.h.b16 %v1280
      %v1378 = vunpack.c.l.b16 %v1281
      %v1379 = vunpack.c.h.b16 %v1281
      %v1380 = vunpack.c.l.b16 %v1282
      %v1381 = vunpack.c.h.b16 %v1282
      %v1382 = vunpack.c.l.b16 %v1283
      %v1383 = vunpack.c.h.b16 %v1283
      %v1384 = vunpack.c.l.b16 %v1284
      %v1385 = vunpack.c.h.b16 %v1284
      %v1386 = vunpack.c.l.b16 %v1285
      %v1387 = vunpack.c.h.b16 %v1285
      %v1388 = vunpack.c.l.b16 %v1286
      %v1389 = vunpack.c.h.b16 %v1286
      %v1390 = vunpack.c.l.b16 %v1287
      %v1391 = vunpack.c.h.b16 %v1287
      %v1392 = vpack.c.b16 %v1378, %v1376
      %v1393 = vpack.c.b16 %v1379, %v1377
      %v1394 = vpack.c.b16 %v1382, %v1380
      %v1395 = vpack.c.b16 %v1383, %v1381
      %v1396 = vpack.c.b16 %v1386, %v1384
      %v1397 = vpack.c.b16 %v1387, %v1385
      %v1398 = vpack.c.b16 %v1390, %v1388
      %v1399 = vpack.c.b16 %v1391, %v1389
      %v1409 = vsel %vm645, %v1352, 0
      %v1412 = vsel %vm645, %v1353, 0
      %v1415 = vsel %vm645, %v1354, 0
      %v1418 = vsel %vm645, %v1355, 0
      %v1421 = vsel %vm645, %v1356, 0
      %v1424 = vsel %vm645, %v1357, 0
      %v1427 = vsel %vm645, %v1358, 0
      %v1430 = vsel %vm645, %v1359, 0
      %v1433 = vsel %vm645, %v1360, 0
      %v1436 = vsel %vm645, %v1361, 0
      %v1439 = vsel %vm645, %v1362, 0
      %v1442 = vsel %vm645, %v1363, 0
      %v1445 = vsel %vm645, %v1364, 0
      %v1448 = vsel %vm645, %v1365, 0
      %v1451 = vsel %vm645, %v1366, 0
      %v1454 = vsel %vm645, %v1367, 0
      %1456 = vmatprep.subr.bf16.mxu0 %v1393
      %1457 = vmatpush1.bf16.msra.mxu0 %v1392
      %1458 = vmatprep.subr.bf16.mxu0 %v1395
      %1459 = vmatpush1.bf16.msra.mxu0 %v1394
      %1460 = vmatprep.subr.bf16.mxu0 %v1397
      %1461 = vmatpush1.bf16.msra.mxu0 %v1396
      %1462 = vmatprep.subr.bf16.mxu0 %v1399
      %1463 = vmatpush1.bf16.msra.mxu0 %v1398
      %1464 = vmatprep.subr.bf16.mxu0 0
      %1465 = vmatpush1.bf16.msra.mxu0 0
      %1466 = vmatprep.subr.bf16.mxu0 0
      %1467 = vmatpush1.bf16.msra.mxu0 0
      %1468 = vmatprep.subr.bf16.mxu0 0
      %1469 = vmatpush1.bf16.msra.mxu0 0
      %1470 = vmatprep.subr.bf16.mxu0 0
      %1471 = vmatpush1.bf16.msra.mxu0 0
      %1472 = vmatprep.subr.bf16.mxu0 0
      %1473 = vmatpush1.bf16.msra.mxu0 0
      %1474 = vmatprep.subr.bf16.mxu0 0
      %1475 = vmatpush1.bf16.msra.mxu0 0
      %1476 = vmatprep.subr.bf16.mxu0 0
      %1477 = vmatpush1.bf16.msra.mxu0 0
      %1478 = vmatprep.subr.bf16.mxu0 0
      %1479 = vmatpush1.bf16.msra.mxu0 0
      %1480 = vmatprep.subr.bf16.mxu0 0
      %1481 = vmatpush1.bf16.msra.mxu0 0
      %1482 = vmatprep.subr.bf16.mxu0 0
      %1483 = vmatpush1.bf16.msra.mxu0 0
      %1484 = vmatprep.subr.bf16.mxu0 0
      %1485 = vmatpush1.bf16.msra.mxu0 0
      %1486 = vmatprep.subr.bf16.mxu0 0
      %1487 = vmatpush1.bf16.msra.mxu0 0
      %1488 = vmatprep.mubr.bf16.mxu0 0
      %1489 = vmatmul.mubr.bf16.gmra.mrb[0].mxu0 %v1409
      %v1490 = vpop.f32.mrb[0].mxu0
      %v1491 = vadd.f32 0.0, %v1490
      %v1492 = vpop.f32.mrb[0].mxu0
      %v1493 = vadd.f32 0.0, %v1492
      %v1494 = vpop.f32.mrb[0].mxu0
      %v1495 = vadd.f32 0.0, %v1494
      %v1496 = vpop.f32.mrb[0].mxu0
      %v1497 = vadd.f32 0.0, %v1496
      %1498 = vmatprep.mubr.bf16.mxu0 0
      %1499 = vmatmul.mubr.bf16.gmra.mrb[0].mxu0 %v1412
      %v1500 = vpop.f32.mrb[0].mxu0
      %v1501 = vadd.f32 0.0, %v1500
      %v1502 = vpop.f32.mrb[0].mxu0
      %v1503 = vadd.f32 0.0, %v1502
      %v1504 = vpop.f32.mrb[0].mxu0
      %v1505 = vadd.f32 0.0, %v1504
      %v1506 = vpop.f32.mrb[0].mxu0
      %v1507 = vadd.f32 0.0, %v1506
      %1508 = vmatprep.mubr.bf16.mxu0 0
      %1509 = vmatmul.mubr.bf16.gmra.mrb[0].mxu0 %v1415
      %v1510 = vpop.f32.mrb[0].mxu0
      %v1511 = vadd.f32 0.0, %v1510
      %v1512 = vpop.f32.mrb[0].mxu0
      %v1513 = vadd.f32 0.0, %v1512
      %v1514 = vpop.f32.mrb[0].mxu0
      %v1515 = vadd.f32 0.0, %v1514
      %v1516 = vpop.f32.mrb[0].mxu0
      %v1517 = vadd.f32 0.0, %v1516
      %1518 = vmatprep.mubr.bf16.mxu0 0
      %1519 = vmatmul.mubr.bf16.gmra.mrb[0].mxu0 %v1418
      %v1520 = vpop.f32.mrb[0].mxu0
      %v1521 = vadd.f32 0.0, %v1520
      %v1522 = vpop.f32.mrb[0].mxu0
      %v1523 = vadd.f32 0.0, %v1522
      %v1524 = vpop.f32.mrb[0].mxu0
      %v1525 = vadd.f32 0.0, %v1524
      %v1526 = vpop.f32.mrb[0].mxu0
      %v1527 = vadd.f32 0.0, %v1526
      %1528 = vmatprep.mubr.bf16.mxu0 0
      %1529 = vmatmul.mubr.bf16.gmra.mrb[0].mxu0 %v1421
      %v1530 = vpop.f32.mrb[0].mxu0
      %v1531 = vadd.f32 0.0, %v1530
      %v1532 = vpop.f32.mrb[0].mxu0
      %v1533 = vadd.f32 0.0, %v1532
      %v1534 = vpop.f32.mrb[0].mxu0
      %v1535 = vadd.f32 0.0, %v1534
      %v1536 = vpop.f32.mrb[0].mxu0
      %v1537 = vadd.f32 0.0, %v1536
      %1538 = vmatprep.mubr.bf16.mxu0 0
      %1539 = vmatmul.mubr.bf16.gmra.mrb[0].mxu0 %v1424
      %v1540 = vpop.f32.mrb[0].mxu0
      %v1541 = vadd.f32 0.0, %v1540
      %v1542 = vpop.f32.mrb[0].mxu0
      %v1543 = vadd.f32 0.0, %v1542
      %v1544 = vpop.f32.mrb[0].mxu0
      %v1545 = vadd.f32 0.0, %v1544
      %v1546 = vpop.f32.mrb[0].mxu0
      %v1547 = vadd.f32 0.0, %v1546
      %1548 = vmatprep.mubr.bf16.mxu0 0
      %1549 = vmatmul.mubr.bf16.gmra.mrb[0].mxu0 %v1427
      %v1550 = vpop.f32.mrb[0].mxu0
      %v1551 = vadd.f32 0.0, %v1550
      %v1552 = vpop.f32.mrb[0].mxu0
      %v1553 = vadd.f32 0.0, %v1552
      %v1554 = vpop.f32.mrb[0].mxu0
      %v1555 = vadd.f32 0.0, %v1554
      %v1556 = vpop.f32.mrb[0].mxu0
      %v1557 = vadd.f32 0.0, %v1556
      %1558 = vmatprep.mubr.bf16.mxu0 0
      %1559 = vmatmul.mubr.bf16.gmra.mrb[0].mxu0 %v1430
      %v1560 = vpop.f32.mrb[0].mxu0
      %v1561 = vadd.f32 0.0, %v1560
      %v1562 = vpop.f32.mrb[0].mxu0
      %v1563 = vadd.f32 0.0, %v1562
      %v1564 = vpop.f32.mrb[0].mxu0
      %v1565 = vadd.f32 0.0, %v1564
      %v1566 = vpop.f32.mrb[0].mxu0
      %v1567 = vadd.f32 0.0, %v1566
      %1568 = vmatprep.mubr.bf16.mxu0 0
      %1569 = vmatmul.mubr.bf16.gmra.mrb[0].mxu0 %v1433
      %v1570 = vpop.f32.mrb[0].mxu0
      %v1571 = vadd.f32 0.0, %v1570
      %v1572 = vpop.f32.mrb[0].mxu0
      %v1573 = vadd.f32 0.0, %v1572
      %v1574 = vpop.f32.mrb[0].mxu0
      %v1575 = vadd.f32 0.0, %v1574
      %v1576 = vpop.f32.mrb[0].mxu0
      %v1577 = vadd.f32 0.0, %v1576
      %1578 = vmatprep.mubr.bf16.mxu0 0
      %1579 = vmatmul.mubr.bf16.gmra.mrb[0].mxu0 %v1436
      %v1580 = vpop.f32.mrb[0].mxu0
      %v1581 = vadd.f32 0.0, %v1580
      %v1582 = vpop.f32.mrb[0].mxu0
      %v1583 = vadd.f32 0.0, %v1582
      %v1584 = vpop.f32.mrb[0].mxu0
      %v1585 = vadd.f32 0.0, %v1584
      %v1586 = vpop.f32.mrb[0].mxu0
      %v1587 = vadd.f32 0.0, %v1586
      %1588 = vmatprep.mubr.bf16.mxu0 0
      %1589 = vmatmul.mubr.bf16.gmra.mrb[0].mxu0 %v1439
      %v1590 = vpop.f32.mrb[0].mxu0
      %v1591 = vadd.f32 0.0, %v1590
      %v1592 = vpop.f32.mrb[0].mxu0
      %v1593 = vadd.f32 0.0, %v1592
      %v1594 = vpop.f32.mrb[0].mxu0
      %v1595 = vadd.f32 0.0, %v1594
      %v1596 = vpop.f32.mrb[0].mxu0
      %v1597 = vadd.f32 0.0, %v1596
      %1598 = vmatprep.mubr.bf16.mxu0 0
      %1599 = vmatmul.mubr.bf16.gmra.mrb[0].mxu0 %v1442
      %v1600 = vpop.f32.mrb[0].mxu0
      %v1601 = vadd.f32 0.0, %v1600
      %v1602 = vpop.f32.mrb[0].mxu0
      %v1603 = vadd.f32 0.0, %v1602
      %v1604 = vpop.f32.mrb[0].mxu0
      %v1605 = vadd.f32 0.0, %v1604
      %v1606 = vpop.f32.mrb[0].mxu0
      %v1607 = vadd.f32 0.0, %v1606
      %1608 = vmatprep.mubr.bf16.mxu0 0
      %1609 = vmatmul.mubr.bf16.gmra.mrb[0].mxu0 %v1445
      %v1610 = vpop.f32.mrb[0].mxu0
      %v1611 = vadd.f32 0.0, %v1610
      %v1612 = vpop.f32.mrb[0].mxu0
      %v1613 = vadd.f32 0.0, %v1612
      %v1614 = vpop.f32.mrb[0].mxu0
      %v1615 = vadd.f32 0.0, %v1614
      %v1616 = vpop.f32.mrb[0].mxu0
      %v1617 = vadd.f32 0.0, %v1616
      %1618 = vmatprep.mubr.bf16.mxu0 0
      %1619 = vmatmul.mubr.bf16.gmra.mrb[0].mxu0 %v1448
      %v1620 = vpop.f32.mrb[0].mxu0
      %v1621 = vadd.f32 0.0, %v1620
      %v1622 = vpop.f32.mrb[0].mxu0
      %v1623 = vadd.f32 0.0, %v1622
      %v1624 = vpop.f32.mrb[0].mxu0
      %v1625 = vadd.f32 0.0, %v1624
      %v1626 = vpop.f32.mrb[0].mxu0
      %v1627 = vadd.f32 0.0, %v1626
      %1628 = vmatprep.mubr.bf16.mxu0 0
      %1629 = vmatmul.mubr.bf16.gmra.mrb[0].mxu0 %v1451
      %v1630 = vpop.f32.mrb[0].mxu0
      %v1631 = vadd.f32 0.0, %v1630
      %v1632 = vpop.f32.mrb[0].mxu0
      %v1633 = vadd.f32 0.0, %v1632
      %v1634 = vpop.f32.mrb[0].mxu0
      %v1635 = vadd.f32 0.0, %v1634
      %v1636 = vpop.f32.mrb[0].mxu0
      %v1637 = vadd.f32 0.0, %v1636
      %1638 = vmatprep.mubr.bf16.mxu0 0
      %1639 = vmatmul.mubr.bf16.gmra.mrb[0].mxu0 %v1454
      %v1640 = vpop.f32.mrb[0].mxu0
      %v1641 = vadd.f32 0.0, %v1640
      %v1642 = vpop.f32.mrb[0].mxu0
      %v1643 = vadd.f32 0.0, %v1642
      %v1644 = vpop.f32.mrb[0].mxu0
      %v1645 = vadd.f32 0.0, %v1644
      %v1646 = vpop.f32.mrb[0].mxu0
      %v1647 = vadd.f32 0.0, %v1646
      %1648 = vdwg.mxu0
      %v1649 = vadd.f32 %v1090, %v1491
      %v1650 = vadd.f32 %v1092, %v1493
      %v1651 = vadd.f32 %v1094, %v1495
      %v1652 = vadd.f32 %v1096, %v1497
      %v1653 = vadd.f32 %v1100, %v1501
      %v1654 = vadd.f32 %v1102, %v1503
      %v1655 = vadd.f32 %v1104, %v1505
      %v1656 = vadd.f32 %v1106, %v1507
      %v1657 = vadd.f32 %v1110, %v1511
      %v1658 = vadd.f32 %v1112, %v1513
      %v1659 = vadd.f32 %v1114, %v1515
      %v1660 = vadd.f32 %v1116, %v1517
      %v1661 = vadd.f32 %v1120, %v1521
      %v1662 = vadd.f32 %v1122, %v1523
      %v1663 = vadd.f32 %v1124, %v1525
      %v1664 = vadd.f32 %v1126, %v1527
      %v1665 = vadd.f32 %v1130, %v1531
      %v1666 = vadd.f32 %v1132, %v1533
      %v1667 = vadd.f32 %v1134, %v1535
      %v1668 = vadd.f32 %v1136, %v1537
      %v1669 = vadd.f32 %v1140, %v1541
      %v1670 = vadd.f32 %v1142, %v1543
      %v1671 = vadd.f32 %v1144, %v1545
      %v1672 = vadd.f32 %v1146, %v1547
      %v1673 = vadd.f32 %v1150, %v1551
      %v1674 = vadd.f32 %v1152, %v1553
      %v1675 = vadd.f32 %v1154, %v1555
      %v1676 = vadd.f32 %v1156, %v1557
      %v1677 = vadd.f32 %v1160, %v1561
      %v1678 = vadd.f32 %v1162, %v1563
      %v1679 = vadd.f32 %v1164, %v1565
      %v1680 = vadd.f32 %v1166, %v1567
      %v1681 = vadd.f32 %v1170, %v1571
      %v1682 = vadd.f32 %v1172, %v1573
      %v1683 = vadd.f32 %v1174, %v1575
      %v1684 = vadd.f32 %v1176, %v1577
      %v1685 = vadd.f32 %v1180, %v1581
      %v1686 = vadd.f32 %v1182, %v1583
      %v1687 = vadd.f32 %v1184, %v1585
      %v1688 = vadd.f32 %v1186, %v1587
      %v1689 = vadd.f32 %v1190, %v1591
      %v1690 = vadd.f32 %v1192, %v1593
      %v1691 = vadd.f32 %v1194, %v1595
      %v1692 = vadd.f32 %v1196, %v1597
      %v1693 = vadd.f32 %v1200, %v1601
      %v1694 = vadd.f32 %v1202, %v1603
      %v1695 = vadd.f32 %v1204, %v1605
      %v1696 = vadd.f32 %v1206, %v1607
      %v1697 = vadd.f32 %v1210, %v1611
      %v1698 = vadd.f32 %v1212, %v1613
      %v1699 = vadd.f32 %v1214, %v1615
      %v1700 = vadd.f32 %v1216, %v1617
      %v1701 = vadd.f32 %v1220, %v1621
      %v1702 = vadd.f32 %v1222, %v1623
      %v1703 = vadd.f32 %v1224, %v1625
      %v1704 = vadd.f32 %v1226, %v1627
      %v1705 = vadd.f32 %v1230, %v1631
      %v1706 = vadd.f32 %v1232, %v1633
      %v1707 = vadd.f32 %v1234, %v1635
      %v1708 = vadd.f32 %v1236, %v1637
      %v1709 = vadd.f32 %v1240, %v1641
      %v1710 = vadd.f32 %v1242, %v1643
      %v1711 = vadd.f32 %v1244, %v1645
      %v1712 = vadd.f32 %v1246, %v1647
      %v1713 = vld [vmem:[%s430] sm:$0xf]
      %v1714 = vld [vmem:[%s430 + $0x4] sm:$0xf]
      %v1715 = vld [vmem:[%s430 + $0x8] sm:$0xf]
      %v1716 = vld [vmem:[%s430 + $0xc] sm:$0xf]
      %v1717 = vld [vmem:[%s430 + $0x10] sm:$0xf]
      %v1718 = vld [vmem:[%s430 + $0x14] sm:$0xf]
      %v1719 = vld [vmem:[%s430 + $0x18] sm:$0xf]
      %v1720 = vld [vmem:[%s430 + $0x1c] sm:$0xf]
      %v1721 = vld [vmem:[%s430 + $0x20] sm:$0xf]
      %v1722 = vld [vmem:[%s430 + $0x24] sm:$0xf]
      %v1723 = vld [vmem:[%s430 + $0x28] sm:$0xf]
      %v1724 = vld [vmem:[%s430 + $0x2c] sm:$0xf]
      %v1725 = vld [vmem:[%s430 + $0x30] sm:$0xf]
      %v1726 = vld [vmem:[%s430 + $0x34] sm:$0xf]
      %v1727 = vld [vmem:[%s430 + $0x38] sm:$0xf]
      %v1728 = vld [vmem:[%s430 + $0x3c] sm:$0xf]
      %v1729 = vld [vmem:[%s430 + $0x40] sm:$0xf]
      %v1730 = vld [vmem:[%s430 + $0x44] sm:$0xf]
      %v1731 = vld [vmem:[%s430 + $0x48] sm:$0xf]
      %v1732 = vld [vmem:[%s430 + $0x4c] sm:$0xf]
      %v1733 = vld [vmem:[%s430 + $0x50] sm:$0xf]
      %v1734 = vld [vmem:[%s430 + $0x54] sm:$0xf]
      %v1735 = vld [vmem:[%s430 + $0x58] sm:$0xf]
      %v1736 = vld [vmem:[%s430 + $0x5c] sm:$0xf]
      %v1737 = vld [vmem:[%s430 + $0x60] sm:$0xf]
      %v1738 = vld [vmem:[%s430 + $0x64] sm:$0xf]
      %v1739 = vld [vmem:[%s430 + $0x68] sm:$0xf]
      %v1740 = vld [vmem:[%s430 + $0x6c] sm:$0xf]
      %v1741 = vld [vmem:[%s430 + $0x70] sm:$0xf]
      %v1742 = vld [vmem:[%s430 + $0x74] sm:$0xf]
      %v1743 = vld [vmem:[%s430 + $0x78] sm:$0xf]
      %v1744 = vld [vmem:[%s430 + $0x7c] sm:$0xf]
      %v1745 = vld [vmem:[%s7] sm:$0xff]
      %v1746 = vld [vmem:[%s7 + $0x8] sm:$0xff]
      %v1747 = vld [vmem:[%s7 + $0x10] sm:$0xff]
      %v1748 = vld [vmem:[%s7 + $0x18] sm:$0xff]
      %v1749 = vld [vmem:[%s7 + $0x20] sm:$0xff]
      %v1750 = vld [vmem:[%s7 + $0x28] sm:$0xff]
      %v1751 = vld [vmem:[%s7 + $0x30] sm:$0xff]
      %v1752 = vld [vmem:[%s7 + $0x38] sm:$0xff]
      %v1785 = vunpack.c.l.b16 %v1713
      %v1786 = vunpack.c.l.b16 %v1714
      %v1787 = vunpack.c.l.b16 %v1715
      %v1788 = vunpack.c.l.b16 %v1716
      %v1789 = vunpack.c.l.b16 %v1717
      %v1790 = vunpack.c.l.b16 %v1718
      %v1791 = vunpack.c.l.b16 %v1719
      %v1792 = vunpack.c.l.b16 %v1720
      %v1793 = vunpack.c.l.b16 %v1721
      %v1794 = vunpack.c.l.b16 %v1722
      %v1795 = vunpack.c.l.b16 %v1723
      %v1796 = vunpack.c.l.b16 %v1724
      %v1797 = vunpack.c.l.b16 %v1725
      %v1798 = vunpack.c.l.b16 %v1726
      %v1799 = vunpack.c.l.b16 %v1727
      %v1800 = vunpack.c.l.b16 %v1728
      %v1801 = vunpack.c.l.b16 %v1729
      %v1802 = vunpack.c.l.b16 %v1730
      %v1803 = vunpack.c.l.b16 %v1731
      %v1804 = vunpack.c.l.b16 %v1732
      %v1805 = vunpack.c.l.b16 %v1733
      %v1806 = vunpack.c.l.b16 %v1734
      %v1807 = vunpack.c.l.b16 %v1735
      %v1808 = vunpack.c.l.b16 %v1736
      %v1809 = vunpack.c.l.b16 %v1737
      %v1810 = vunpack.c.l.b16 %v1738
      %v1811 = vunpack.c.l.b16 %v1739
      %v1812 = vunpack.c.l.b16 %v1740
      %v1813 = vunpack.c.l.b16 %v1741
      %v1814 = vunpack.c.l.b16 %v1742
      %v1815 = vunpack.c.l.b16 %v1743
      %v1816 = vunpack.c.l.b16 %v1744
      %v1817 = vpack.c.b16 %v1786, %v1785
      %v1818 = vpack.c.b16 %v1788, %v1787
      %v1819 = vpack.c.b16 %v1790, %v1789
      %v1820 = vpack.c.b16 %v1792, %v1791
      %v1821 = vpack.c.b16 %v1794, %v1793
      %v1822 = vpack.c.b16 %v1796, %v1795
      %v1823 = vpack.c.b16 %v1798, %v1797
      %v1824 = vpack.c.b16 %v1800, %v1799
      %v1825 = vpack.c.b16 %v1802, %v1801
      %v1826 = vpack.c.b16 %v1804, %v1803
      %v1827 = vpack.c.b16 %v1806, %v1805
      %v1828 = vpack.c.b16 %v1808, %v1807
      %v1829 = vpack.c.b16 %v1810, %v1809
      %v1830 = vpack.c.b16 %v1812, %v1811
      %v1831 = vpack.c.b16 %v1814, %v1813
      %v1832 = vpack.c.b16 %v1816, %v1815
      %v1841 = vunpack.c.l.b16 %v1745
      %v1842 = vunpack.c.h.b16 %v1745
      %v1843 = vunpack.c.l.b16 %v1746
      %v1844 = vunpack.c.h.b16 %v1746
      %v1845 = vunpack.c.l.b16 %v1747
      %v1846 = vunpack.c.h.b16 %v1747
      %v1847 = vunpack.c.l.b16 %v1748
      %v1848 = vunpack.c.h.b16 %v1748
      %v1849 = vunpack.c.l.b16 %v1749
      %v1850 = vunpack.c.h.b16 %v1749
      %v1851 = vunpack.c.l.b16 %v1750
      %v1852 = vunpack.c.h.b16 %v1750
      %v1853 = vunpack.c.l.b16 %v1751
      %v1854 = vunpack.c.h.b16 %v1751
      %v1855 = vunpack.c.l.b16 %v1752
      %v1856 = vunpack.c.h.b16 %v1752
      %v1857 = vpack.c.b16 %v1843, %v1841
      %v1858 = vpack.c.b16 %v1844, %v1842
      %v1859 = vpack.c.b16 %v1847, %v1845
      %v1860 = vpack.c.b16 %v1848, %v1846
      %v1861 = vpack.c.b16 %v1851, %v1849
      %v1862 = vpack.c.b16 %v1852, %v1850
      %v1863 = vpack.c.b16 %v1855, %v1853
      %v1864 = vpack.c.b16 %v1856, %v1854
      %v1874 = vsel %vm645, %v1817, 0
      %v1877 = vsel %vm645, %v1818, 0
      %v1880 = vsel %vm645, %v1819, 0
      %v1883 = vsel %vm645, %v1820, 0
      %v1886 = vsel %vm645, %v1821, 0
      %v1889 = vsel %vm645, %v1822, 0
      %v1892 = vsel %vm645, %v1823, 0
      %v1895 = vsel %vm645, %v1824, 0
      %v1898 = vsel %vm645, %v1825, 0
      %v1901 = vsel %vm645, %v1826, 0
      %v1904 = vsel %vm645, %v1827, 0
      %v1907 = vsel %vm645, %v1828, 0
      %v1910 = vsel %vm645, %v1829, 0
      %v1913 = vsel %vm645, %v1830, 0
      %v1916 = vsel %vm645, %v1831, 0
      %v1919 = vsel %vm645, %v1832, 0
      %1921 = vmatprep.subr.bf16.mxu0 %v1858
      %1922 = vmatpush1.bf16.msra.mxu0 %v1857
      %1923 = vmatprep.subr.bf16.mxu0 %v1860
      %1924 = vmatpush1.bf16.msra.mxu0 %v1859
      %1925 = vmatprep.subr.bf16.mxu0 %v1862
      %1926 = vmatpush1.bf16.msra.mxu0 %v1861
      %1927 = vmatprep.subr.bf16.mxu0 %v1864
      %1928 = vmatpush1.bf16.msra.mxu0 %v1863
      %1929 = vmatprep.subr.bf16.mxu0 0
      %1930 = vmatpush1.bf16.msra.mxu0 0
      %1931 = vmatprep.subr.bf16.mxu0 0
      %1932 = vmatpush1.bf16.msra.mxu0 0
      %1933 = vmatprep.subr.bf16.mxu0 0
      %1934 = vmatpush1.bf16.msra.mxu0 0
      %1935 = vmatprep.subr.bf16.mxu0 0
      %1936 = vmatpush1.bf16.msra.mxu0 0
      %1937 = vmatprep.subr.bf16.mxu0 0
      %1938 = vmatpush1.bf16.msra.mxu0 0
      %1939 = vmatprep.subr.bf16.mxu0 0
      %1940 = vmatpush1.bf16.msra.mxu0 0
      %1941 = vmatprep.subr.bf16.mxu0 0
      %1942 = vmatpush1.bf16.msra.mxu0 0
      %1943 = vmatprep.subr.bf16.mxu0 0
      %1944 = vmatpush1.bf16.msra.mxu0 0
      %1945 = vmatprep.subr.bf16.mxu0 0
      %1946 = vmatpush1.bf16.msra.mxu0 0
      %1947 = vmatprep.subr.bf16.mxu0 0
      %1948 = vmatpush1.bf16.msra.mxu0 0
      %1949 = vmatprep.subr.bf16.mxu0 0
      %1950 = vmatpush1.bf16.msra.mxu0 0
      %1951 = vmatprep.subr.bf16.mxu0 0
      %1952 = vmatpush1.bf16.msra.mxu0 0
      %1953 = vmatprep.mubr.bf16.mxu0 0
      %1954 = vmatmul.mubr.bf16.gmra.mrb[0].mxu0 %v1874
      %v1955 = vpop.f32.mrb[0].mxu0
      %v1956 = vadd.f32 0.0, %v1955
      %v1957 = vpop.f32.mrb[0].mxu0
      %v1958 = vadd.f32 0.0, %v1957
      %v1959 = vpop.f32.mrb[0].mxu0
      %v1960 = vadd.f32 0.0, %v1959
      %v1961 = vpop.f32.mrb[0].mxu0
      %v1962 = vadd.f32 0.0, %v1961
      %1963 = vmatprep.mubr.bf16.mxu0 0
      %1964 = vmatmul.mubr.bf16.gmra.mrb[0].mxu0 %v1877
      %v1965 = vpop.f32.mrb[0].mxu0
      %v1966 = vadd.f32 0.0, %v1965
      %v1967 = vpop.f32.mrb[0].mxu0
      %v1968 = vadd.f32 0.0, %v1967
      %v1969 = vpop.f32.mrb[0].mxu0
      %v1970 = vadd.f32 0.0, %v1969
      %v1971 = vpop.f32.mrb[0].mxu0
      %v1972 = vadd.f32 0.0, %v1971
      %1973 = vmatprep.mubr.bf16.mxu0 0
      %1974 = vmatmul.mubr.bf16.gmra.mrb[0].mxu0 %v1880
      %v1975 = vpop.f32.mrb[0].mxu0
      %v1976 = vadd.f32 0.0, %v1975
      %v1977 = vpop.f32.mrb[0].mxu0
      %v1978 = vadd.f32 0.0, %v1977
      %v1979 = vpop.f32.mrb[0].mxu0
      %v1980 = vadd.f32 0.0, %v1979
      %v1981 = vpop.f32.mrb[0].mxu0
      %v1982 = vadd.f32 0.0, %v1981
      %1983 = vmatprep.mubr.bf16.mxu0 0
      %1984 = vmatmul.mubr.bf16.gmra.mrb[0].mxu0 %v1883
      %v1985 = vpop.f32.mrb[0].mxu0
      %v1986 = vadd.f32 0.0, %v1985
      %v1987 = vpop.f32.mrb[0].mxu0
      %v1988 = vadd.f32 0.0, %v1987
      %v1989 = vpop.f32.mrb[0].mxu0
      %v1990 = vadd.f32 0.0, %v1989
      %v1991 = vpop.f32.mrb[0].mxu0
      %v1992 = vadd.f32 0.0, %v1991
      %1993 = vmatprep.mubr.bf16.mxu0 0
      %1994 = vmatmul.mubr.bf16.gmra.mrb[0].mxu0 %v1886
      %v1995 = vpop.f32.mrb[0].mxu0
      %v1996 = vadd.f32 0.0, %v1995
      %v1997 = vpop.f32.mrb[0].mxu0
      %v1998 = vadd.f32 0.0, %v1997
      %v1999 = vpop.f32.mrb[0].mxu0
      %v2000 = vadd.f32 0.0, %v1999
      %v2001 = vpop.f32.mrb[0].mxu0
      %v2002 = vadd.f32 0.0, %v2001
      %2003 = vmatprep.mubr.bf16.mxu0 0
      %2004 = vmatmul.mubr.bf16.gmra.mrb[0].mxu0 %v1889
      %v2005 = vpop.f32.mrb[0].mxu0
      %v2006 = vadd.f32 0.0, %v2005
      %v2007 = vpop.f32.mrb[0].mxu0
      %v2008 = vadd.f32 0.0, %v2007
      %v2009 = vpop.f32.mrb[0].mxu0
      %v2010 = vadd.f32 0.0, %v2009
      %v2011 = vpop.f32.mrb[0].mxu0
      %v2012 = vadd.f32 0.0, %v2011
      %2013 = vmatprep.mubr.bf16.mxu0 0
      %2014 = vmatmul.mubr.bf16.gmra.mrb[0].mxu0 %v1892
      %v2015 = vpop.f32.mrb[0].mxu0
      %v2016 = vadd.f32 0.0, %v2015
      %v2017 = vpop.f32.mrb[0].mxu0
      %v2018 = vadd.f32 0.0, %v2017
      %v2019 = vpop.f32.mrb[0].mxu0
      %v2020 = vadd.f32 0.0, %v2019
      %v2021 = vpop.f32.mrb[0].mxu0
      %v2022 = vadd.f32 0.0, %v2021
      %2023 = vmatprep.mubr.bf16.mxu0 0
      %2024 = vmatmul.mubr.bf16.gmra.mrb[0].mxu0 %v1895
      %v2025 = vpop.f32.mrb[0].mxu0
      %v2026 = vadd.f32 0.0, %v2025
      %v2027 = vpop.f32.mrb[0].mxu0
      %v2028 = vadd.f32 0.0, %v2027
      %v2029 = vpop.f32.mrb[0].mxu0
      %v2030 = vadd.f32 0.0, %v2029
      %v2031 = vpop.f32.mrb[0].mxu0
      %v2032 = vadd.f32 0.0, %v2031
      %2033 = vmatprep.mubr.bf16.mxu0 0
      %2034 = vmatmul.mubr.bf16.gmra.mrb[0].mxu0 %v1898
      %v2035 = vpop.f32.mrb[0].mxu0
      %v2036 = vadd.f32 0.0, %v2035
      %v2037 = vpop.f32.mrb[0].mxu0
      %v2038 = vadd.f32 0.0, %v2037
      %v2039 = vpop.f32.mrb[0].mxu0
      %v2040 = vadd.f32 0.0, %v2039
      %v2041 = vpop.f32.mrb[0].mxu0
      %v2042 = vadd.f32 0.0, %v2041
      %2043 = vmatprep.mubr.bf16.mxu0 0
      %2044 = vmatmul.mubr.bf16.gmra.mrb[0].mxu0 %v1901
      %v2045 = vpop.f32.mrb[0].mxu0
      %v2046 = vadd.f32 0.0, %v2045
      %v2047 = vpop.f32.mrb[0].mxu0
      %v2048 = vadd.f32 0.0, %v2047
      %v2049 = vpop.f32.mrb[0].mxu0
      %v2050 = vadd.f32 0.0, %v2049
      %v2051 = vpop.f32.mrb[0].mxu0
      %v2052 = vadd.f32 0.0, %v2051
      %2053 = vmatprep.mubr.bf16.mxu0 0
      %2054 = vmatmul.mubr.bf16.gmra.mrb[0].mxu0 %v1904
      %v2055 = vpop.f32.mrb[0].mxu0
      %v2056 = vadd.f32 0.0, %v2055
      %v2057 = vpop.f32.mrb[0].mxu0
      %v2058 = vadd.f32 0.0, %v2057
      %v2059 = vpop.f32.mrb[0].mxu0
      %v2060 = vadd.f32 0.0, %v2059
      %v2061 = vpop.f32.mrb[0].mxu0
      %v2062 = vadd.f32 0.0, %v2061
      %2063 = vmatprep.mubr.bf16.mxu0 0
      %2064 = vmatmul.mubr.bf16.gmra.mrb[0].mxu0 %v1907
      %v2065 = vpop.f32.mrb[0].mxu0
      %v2066 = vadd.f32 0.0, %v2065
      %v2067 = vpop.f32.mrb[0].mxu0
      %v2068 = vadd.f32 0.0, %v2067
      %v2069 = vpop.f32.mrb[0].mxu0
      %v2070 = vadd.f32 0.0, %v2069
      %v2071 = vpop.f32.mrb[0].mxu0
      %v2072 = vadd.f32 0.0, %v2071
      %2073 = vmatprep.mubr.bf16.mxu0 0
      %2074 = vmatmul.mubr.bf16.gmra.mrb[0].mxu0 %v1910
      %v2075 = vpop.f32.mrb[0].mxu0
      %v2076 = vadd.f32 0.0, %v2075
      %v2077 = vpop.f32.mrb[0].mxu0
      %v2078 = vadd.f32 0.0, %v2077
      %v2079 = vpop.f32.mrb[0].mxu0
      %v2080 = vadd.f32 0.0, %v2079
      %v2081 = vpop.f32.mrb[0].mxu0
      %v2082 = vadd.f32 0.0, %v2081
      %2083 = vmatprep.mubr.bf16.mxu0 0
      %2084 = vmatmul.mubr.bf16.gmra.mrb[0].mxu0 %v1913
      %v2085 = vpop.f32.mrb[0].mxu0
      %v2086 = vadd.f32 0.0, %v2085
      %v2087 = vpop.f32.mrb[0].mxu0
      %v2088 = vadd.f32 0.0, %v2087
      %v2089 = vpop.f32.mrb[0].mxu0
      %v2090 = vadd.f32 0.0, %v2089
      %v2091 = vpop.f32.mrb[0].mxu0
      %v2092 = vadd.f32 0.0, %v2091
      %2093 = vmatprep.mubr.bf16.mxu0 0
      %2094 = vmatmul.mubr.bf16.gmra.mrb[0].mxu0 %v1916
      %v2095 = vpop.f32.mrb[0].mxu0
      %v2096 = vadd.f32 0.0, %v2095
      %v2097 = vpop.f32.mrb[0].mxu0
      %v2098 = vadd.f32 0.0, %v2097
      %v2099 = vpop.f32.mrb[0].mxu0
      %v2100 = vadd.f32 0.0, %v2099
      %v2101 = vpop.f32.mrb[0].mxu0
      %v2102 = vadd.f32 0.0, %v2101
      %2103 = vmatprep.mubr.bf16.mxu0 0
      %2104 = vmatmul.mubr.bf16.gmra.mrb[0].mxu0 %v1919
      %v2105 = vpop.f32.mrb[0].mxu0
      %v2106 = vadd.f32 0.0, %v2105
      %v2107 = vpop.f32.mrb[0].mxu0
      %v2108 = vadd.f32 0.0, %v2107
      %v2109 = vpop.f32.mrb[0].mxu0
      %v2110 = vadd.f32 0.0, %v2109
      %v2111 = vpop.f32.mrb[0].mxu0
      %v2112 = vadd.f32 0.0, %v2111
      %2113 = vdwg.mxu0
      %v2114 = vadd.f32 %v1649, %v1956
      %v2115 = vadd.f32 %v1650, %v1958
      %v2116 = vadd.f32 %v1651, %v1960
      %v2117 = vadd.f32 %v1652, %v1962
      %v2118 = vadd.f32 %v1653, %v1966
      %v2119 = vadd.f32 %v1654, %v1968
      %v2120 = vadd.f32 %v1655, %v1970
      %v2121 = vadd.f32 %v1656, %v1972
      %v2122 = vadd.f32 %v1657, %v1976
      %v2123 = vadd.f32 %v1658, %v1978
      %v2124 = vadd.f32 %v1659, %v1980
      %v2125 = vadd.f32 %v1660, %v1982
      %v2126 = vadd.f32 %v1661, %v1986
      %v2127 = vadd.f32 %v1662, %v1988
      %v2128 = vadd.f32 %v1663, %v1990
      %v2129 = vadd.f32 %v1664, %v1992
      %v2130 = vadd.f32 %v1665, %v1996
      %v2131 = vadd.f32 %v1666, %v1998
      %v2132 = vadd.f32 %v1667, %v2000
      %v2133 = vadd.f32 %v1668, %v2002
      %v2134 = vadd.f32 %v1669, %v2006
      %v2135 = vadd.f32 %v1670, %v2008
      %v2136 = vadd.f32 %v1671, %v2010
      %v2137 = vadd.f32 %v1672, %v2012
      %v2138 = vadd.f32 %v1673, %v2016
      %v2139 = vadd.f32 %v1674, %v2018
      %v2140 = vadd.f32 %v1675, %v2020
      %v2141 = vadd.f32 %v1676, %v2022
      %v2142 = vadd.f32 %v1677, %v2026
      %v2143 = vadd.f32 %v1678, %v2028
      %v2144 = vadd.f32 %v1679, %v2030
      %v2145 = vadd.f32 %v1680, %v2032
      %v2146 = vadd.f32 %v1681, %v2036
      %v2147 = vadd.f32 %v1682, %v2038
      %v2148 = vadd.f32 %v1683, %v2040
      %v2149 = vadd.f32 %v1684, %v2042
      %v2150 = vadd.f32 %v1685, %v2046
      %v2151 = vadd.f32 %v1686, %v2048
      %v2152 = vadd.f32 %v1687, %v2050
      %v2153 = vadd.f32 %v1688, %v2052
      %v2154 = vadd.f32 %v1689, %v2056
      %v2155 = vadd.f32 %v1690, %v2058
      %v2156 = vadd.f32 %v1691, %v2060
      %v2157 = vadd.f32 %v1692, %v2062
      %v2158 = vadd.f32 %v1693, %v2066
      %v2159 = vadd.f32 %v1694, %v2068
      %v2160 = vadd.f32 %v1695, %v2070
      %v2161 = vadd.f32 %v1696, %v2072
      %v2162 = vadd.f32 %v1697, %v2076
      %v2163 = vadd.f32 %v1698, %v2078
      %v2164 = vadd.f32 %v1699, %v2080
      %v2165 = vadd.f32 %v1700, %v2082
      %v2166 = vadd.f32 %v1701, %v2086
      %v2167 = vadd.f32 %v1702, %v2088
      %v2168 = vadd.f32 %v1703, %v2090
      %v2169 = vadd.f32 %v1704, %v2092
      %v2170 = vadd.f32 %v1705, %v2096
      %v2171 = vadd.f32 %v1706, %v2098
      %v2172 = vadd.f32 %v1707, %v2100
      %v2173 = vadd.f32 %v1708, %v2102
      %v2174 = vadd.f32 %v1709, %v2106
      %v2175 = vadd.f32 %v1710, %v2108
      %v2176 = vadd.f32 %v1711, %v2110
      %v2177 = vadd.f32 %v1712, %v2112
      %v2178 = vld [vmem:[%s8] sm:$0x3]
      %v2180 = vlaneseq
      %v2181 = vshrl.u32 %v2180, 7
      %v2182 = vsub.s32 0, %v2181
      %v2183 = vrot.slane %v2178, %v2182
      %v2184 = vlaneseq
      %v2185 = vshrl.u32 %v2184, 7
      %v2186 = vsub.s32 1, %v2185
      %v2187 = vrot.slane %v2178, %v2186
      %v2190 = vadd.f32 %v2114, %v2183
      %v2191 = vadd.f32 %v2115, %v2187
      %v2192 = vadd.f32 %v2116, %v2183
      %v2193 = vadd.f32 %v2117, %v2187
      %v2194 = vadd.f32 %v2118, %v2183
      %v2195 = vadd.f32 %v2119, %v2187
      %v2196 = vadd.f32 %v2120, %v2183
      %v2197 = vadd.f32 %v2121, %v2187
      %v2198 = vadd.f32 %v2122, %v2183
      %v2199 = vadd.f32 %v2123, %v2187
      %v2200 = vadd.f32 %v2124, %v2183
      %v2201 = vadd.f32 %v2125, %v2187
      %v2202 = vadd.f32 %v2126, %v2183
      %v2203 = vadd.f32 %v2127, %v2187
      %v2204 = vadd.f32 %v2128, %v2183
      %v2205 = vadd.f32 %v2129, %v2187
      %v2206 = vadd.f32 %v2130, %v2183
      %v2207 = vadd.f32 %v2131, %v2187
      %v2208 = vadd.f32 %v2132, %v2183
      %v2209 = vadd.f32 %v2133, %v2187
      %v2210 = vadd.f32 %v2134, %v2183
      %v2211 = vadd.f32 %v2135, %v2187
      %v2212 = vadd.f32 %v2136, %v2183
      %v2213 = vadd.f32 %v2137, %v2187
      %v2214 = vadd.f32 %v2138, %v2183
      %v2215 = vadd.f32 %v2139, %v2187
      %v2216 = vadd.f32 %v2140, %v2183
      %v2217 = vadd.f32 %v2141, %v2187
      %v2218 = vadd.f32 %v2142, %v2183
      %v2219 = vadd.f32 %v2143, %v2187
      %v2220 = vadd.f32 %v2144, %v2183
      %v2221 = vadd.f32 %v2145, %v2187
      %v2222 = vadd.f32 %v2146, %v2183
      %v2223 = vadd.f32 %v2147, %v2187
      %v2224 = vadd.f32 %v2148, %v2183
      %v2225 = vadd.f32 %v2149, %v2187
      %v2226 = vadd.f32 %v2150, %v2183
      %v2227 = vadd.f32 %v2151, %v2187
      %v2228 = vadd.f32 %v2152, %v2183
      %v2229 = vadd.f32 %v2153, %v2187
      %v2230 = vadd.f32 %v2154, %v2183
      %v2231 = vadd.f32 %v2155, %v2187
      %v2232 = vadd.f32 %v2156, %v2183
      %v2233 = vadd.f32 %v2157, %v2187
      %v2234 = vadd.f32 %v2158, %v2183
      %v2235 = vadd.f32 %v2159, %v2187
      %v2236 = vadd.f32 %v2160, %v2183
      %v2237 = vadd.f32 %v2161, %v2187
      %v2238 = vadd.f32 %v2162, %v2183
      %v2239 = vadd.f32 %v2163, %v2187
      %v2240 = vadd.f32 %v2164, %v2183
      %v2241 = vadd.f32 %v2165, %v2187
      %v2242 = vadd.f32 %v2166, %v2183
      %v2243 = vadd.f32 %v2167, %v2187
      %v2244 = vadd.f32 %v2168, %v2183
      %v2245 = vadd.f32 %v2169, %v2187
      %v2246 = vadd.f32 %v2170, %v2183
      %v2247 = vadd.f32 %v2171, %v2187
      %v2248 = vadd.f32 %v2172, %v2183
      %v2249 = vadd.f32 %v2173, %v2187
      %v2250 = vadd.f32 %v2174, %v2183
      %v2251 = vadd.f32 %v2175, %v2187
      %v2252 = vadd.f32 %v2176, %v2183
      %v2253 = vadd.f32 %v2177, %v2187
      %v2254 = vmax.f32 %v2190, 0.0
      %v2255 = vmax.f32 %v2191, 0.0
      %v2256 = vmax.f32 %v2192, 0.0
      %v2257 = vmax.f32 %v2193, 0.0
      %v2258 = vmax.f32 %v2194, 0.0
      %v2259 = vmax.f32 %v2195, 0.0
      %v2260 = vmax.f32 %v2196, 0.0
      %v2261 = vmax.f32 %v2197, 0.0
      %v2262 = vmax.f32 %v2198, 0.0
      %v2263 = vmax.f32 %v2199, 0.0
      %v2264 = vmax.f32 %v2200, 0.0
      %v2265 = vmax.f32 %v2201, 0.0
      %v2266 = vmax.f32 %v2202, 0.0
      %v2267 = vmax.f32 %v2203, 0.0
      %v2268 = vmax.f32 %v2204, 0.0
      %v2269 = vmax.f32 %v2205, 0.0
      %v2270 = vmax.f32 %v2206, 0.0
      %v2271 = vmax.f32 %v2207, 0.0
      %v2272 = vmax.f32 %v2208, 0.0
      %v2273 = vmax.f32 %v2209, 0.0
      %v2274 = vmax.f32 %v2210, 0.0
      %v2275 = vmax.f32 %v2211, 0.0
      %v2276 = vmax.f32 %v2212, 0.0
      %v2277 = vmax.f32 %v2213, 0.0
      %v2278 = vmax.f32 %v2214, 0.0
      %v2279 = vmax.f32 %v2215, 0.0
      %v2280 = vmax.f32 %v2216, 0.0
      %v2281 = vmax.f32 %v2217, 0.0
      %v2282 = vmax.f32 %v2218, 0.0
      %v2283 = vmax.f32 %v2219, 0.0
      %v2284 = vmax.f32 %v2220, 0.0
      %v2285 = vmax.f32 %v2221, 0.0
      %v2286 = vmax.f32 %v2222, 0.0
      %v2287 = vmax.f32 %v2223, 0.0
      %v2288 = vmax.f32 %v2224, 0.0
      %v2289 = vmax.f32 %v2225, 0.0
      %v2290 = vmax.f32 %v2226, 0.0
      %v2291 = vmax.f32 %v2227, 0.0
      %v2292 = vmax.f32 %v2228, 0.0
      %v2293 = vmax.f32 %v2229, 0.0
      %v2294 = vmax.f32 %v2230, 0.0
      %v2295 = vmax.f32 %v2231, 0.0
      %v2296 = vmax.f32 %v2232, 0.0
      %v2297 = vmax.f32 %v2233, 0.0
      %v2298 = vmax.f32 %v2234, 0.0
      %v2299 = vmax.f32 %v2235, 0.0
      %v2300 = vmax.f32 %v2236, 0.0
      %v2301 = vmax.f32 %v2237, 0.0
      %v2302 = vmax.f32 %v2238, 0.0
      %v2303 = vmax.f32 %v2239, 0.0
      %v2304 = vmax.f32 %v2240, 0.0
      %v2305 = vmax.f32 %v2241, 0.0
      %v2306 = vmax.f32 %v2242, 0.0
      %v2307 = vmax.f32 %v2243, 0.0
      %v2308 = vmax.f32 %v2244, 0.0
      %v2309 = vmax.f32 %v2245, 0.0
      %v2310 = vmax.f32 %v2246, 0.0
      %v2311 = vmax.f32 %v2247, 0.0
      %v2312 = vmax.f32 %v2248, 0.0
      %v2313 = vmax.f32 %v2249, 0.0
      %v2314 = vmax.f32 %v2250, 0.0
      %v2315 = vmax.f32 %v2251, 0.0
      %v2316 = vmax.f32 %v2252, 0.0
      %v2317 = vmax.f32 %v2253, 0.0
      %v2318 = vpack.c.bf16 %v2256, %v2254
      %v2319 = vpack.c.bf16 %v2257, %v2255
      %v2320 = vpack.c.bf16 %v2260, %v2258
      %v2321 = vpack.c.bf16 %v2261, %v2259
      %v2322 = vpack.c.bf16 %v2264, %v2262
      %v2323 = vpack.c.bf16 %v2265, %v2263
      %v2324 = vpack.c.bf16 %v2268, %v2266
      %v2325 = vpack.c.bf16 %v2269, %v2267
      %v2326 = vpack.c.bf16 %v2272, %v2270
      %v2327 = vpack.c.bf16 %v2273, %v2271
      %v2328 = vpack.c.bf16 %v2276, %v2274
      %v2329 = vpack.c.bf16 %v2277, %v2275
      %v2330 = vpack.c.bf16 %v2280, %v2278
      %v2331 = vpack.c.bf16 %v2281, %v2279
      %v2332 = vpack.c.bf16 %v2284, %v2282
      %v2333 = vpack.c.bf16 %v2285, %v2283
      %v2334 = vpack.c.bf16 %v2288, %v2286
      %v2335 = vpack.c.bf16 %v2289, %v2287
      %v2336 = vpack.c.bf16 %v2292, %v2290
      %v2337 = vpack.c.bf16 %v2293, %v2291
      %v2338 = vpack.c.bf16 %v2296, %v2294
      %v2339 = vpack.c.bf16 %v2297, %v2295
      %v2340 = vpack.c.bf16 %v2300, %v2298
      %v2341 = vpack.c.bf16 %v2301, %v2299
      %v2342 = vpack.c.bf16 %v2304, %v2302
      %v2343 = vpack.c.bf16 %v2305, %v2303
      %v2344 = vpack.c.bf16 %v2308, %v2306
      %v2345 = vpack.c.bf16 %v2309, %v2307
      %v2346 = vpack.c.bf16 %v2312, %v2310
      %v2347 = vpack.c.bf16 %v2313, %v2311
      %v2348 = vpack.c.bf16 %v2316, %v2314
      %v2349 = vpack.c.bf16 %v2317, %v2315
      %v2382 = vunpack.c.l.b16 %v2318
      %v2383 = vunpack.c.l.b16 %v2319
      %v2384 = vunpack.c.h.b16 %v2318
      %v2385 = vunpack.c.h.b16 %v2319
      %v2386 = vunpack.c.l.b16 %v2320
      %v2387 = vunpack.c.l.b16 %v2321
      %v2388 = vunpack.c.h.b16 %v2320
      %v2389 = vunpack.c.h.b16 %v2321
      %v2390 = vunpack.c.l.b16 %v2322
      %v2391 = vunpack.c.l.b16 %v2323
      %v2392 = vunpack.c.h.b16 %v2322
      %v2393 = vunpack.c.h.b16 %v2323
      %v2394 = vunpack.c.l.b16 %v2324
      %v2395 = vunpack.c.l.b16 %v2325
      %v2396 = vunpack.c.h.b16 %v2324
      %v2397 = vunpack.c.h.b16 %v2325
      %v2398 = vunpack.c.l.b16 %v2326
      %v2399 = vunpack.c.l.b16 %v2327
      %v2400 = vunpack.c.h.b16 %v2326
      %v2401 = vunpack.c.h.b16 %v2327
      %v2402 = vunpack.c.l.b16 %v2328
      %v2403 = vunpack.c.l.b16 %v2329
      %v2404 = vunpack.c.h.b16 %v2328
      %v2405 = vunpack.c.h.b16 %v2329
      %v2406 = vunpack.c.l.b16 %v2330
      %v2407 = vunpack.c.l.b16 %v2331
      %v2408 = vunpack.c.h.b16 %v2330
      %v2409 = vunpack.c.h.b16 %v2331
      %v2410 = vunpack.c.l.b16 %v2332
      %v2411 = vunpack.c.l.b16 %v2333
      %v2412 = vunpack.c.h.b16 %v2332
      %v2413 = vunpack.c.h.b16 %v2333
      %v2414 = vunpack.c.l.b16 %v2334
      %v2415 = vunpack.c.l.b16 %v2335
      %v2416 = vunpack.c.h.b16 %v2334
      %v2417 = vunpack.c.h.b16 %v2335
      %v2418 = vunpack.c.l.b16 %v2336
      %v2419 = vunpack.c.l.b16 %v2337
      %v2420 = vunpack.c.h.b16 %v2336
      %v2421 = vunpack.c.h.b16 %v2337
      %v2422 = vunpack.c.l.b16 %v2338
      %v2423 = vunpack.c.l.b16 %v2339
      %v2424 = vunpack.c.h.b16 %v2338
      %v2425 = vunpack.c.h.b16 %v2339
      %v2426 = vunpack.c.l.b16 %v2340
      %v2427 = vunpack.c.l.b16 %v2341
      %v2428 = vunpack.c.h.b16 %v2340
      %v2429 = vunpack.c.h.b16 %v2341
      %v2430 = vunpack.c.l.b16 %v2342
      %v2431 = vunpack.c.l.b16 %v2343
      %v2432 = vunpack.c.h.b16 %v2342
      %v2433 = vunpack.c.h.b16 %v2343
      %v2434 = vunpack.c.l.b16 %v2344
      %v2435 = vunpack.c.l.b16 %v2345
      %v2436 = vunpack.c.h.b16 %v2344
      %v2437 = vunpack.c.h.b16 %v2345
      %v2438 = vunpack.c.l.b16 %v2346
      %v2439 = vunpack.c.l.b16 %v2347
      %v2440 = vunpack.c.h.b16 %v2346
      %v2441 = vunpack.c.h.b16 %v2347
      %v2442 = vunpack.c.l.b16 %v2348
      %v2443 = vunpack.c.l.b16 %v2349
      %v2444 = vunpack.c.h.b16 %v2348
      %v2445 = vunpack.c.h.b16 %v2349
      %v2446 = vpack.c.b16 %v2383, %v2382
      %v2447 = vpack.c.b16 %v2385, %v2384
      %v2448 = vpack.c.b16 %v2387, %v2386
      %v2449 = vpack.c.b16 %v2389, %v2388
      %v2450 = vpack.c.b16 %v2391, %v2390
      %v2451 = vpack.c.b16 %v2393, %v2392
      %v2452 = vpack.c.b16 %v2395, %v2394
      %v2453 = vpack.c.b16 %v2397, %v2396
      %v2454 = vpack.c.b16 %v2399, %v2398
      %v2455 = vpack.c.b16 %v2401, %v2400
      %v2456 = vpack.c.b16 %v2403, %v2402
      %v2457 = vpack.c.b16 %v2405, %v2404
      %v2458 = vpack.c.b16 %v2407, %v2406
      %v2459 = vpack.c.b16 %v2409, %v2408
      %v2460 = vpack.c.b16 %v2411, %v2410
      %v2461 = vpack.c.b16 %v2413, %v2412
      %v2462 = vpack.c.b16 %v2415, %v2414
      %v2463 = vpack.c.b16 %v2417, %v2416
      %v2464 = vpack.c.b16 %v2419, %v2418
      %v2465 = vpack.c.b16 %v2421, %v2420
      %v2466 = vpack.c.b16 %v2423, %v2422
      %v2467 = vpack.c.b16 %v2425, %v2424
      %v2468 = vpack.c.b16 %v2427, %v2426
      %v2469 = vpack.c.b16 %v2429, %v2428
      %v2470 = vpack.c.b16 %v2431, %v2430
      %v2471 = vpack.c.b16 %v2433, %v2432
      %v2472 = vpack.c.b16 %v2435, %v2434
      %v2473 = vpack.c.b16 %v2437, %v2436
      %v2474 = vpack.c.b16 %v2439, %v2438
      %v2475 = vpack.c.b16 %v2441, %v2440
      %v2476 = vpack.c.b16 %v2443, %v2442
      %v2477 = vpack.c.b16 %v2445, %v2444
      %2510 = vst [vmem:[%s437] sm:$0xff] %v2446
      %2511 = vst [vmem:[%s437 + $0x8] sm:$0xff] %v2447
      %2512 = vst [vmem:[%s437 + $0x10] sm:$0xff] %v2448
      %2513 = vst [vmem:[%s437 + $0x18] sm:$0xff] %v2449
      %2514 = vst [vmem:[%s437 + $0x20] sm:$0xff] %v2450
      %2515 = vst [vmem:[%s437 + $0x28] sm:$0xff] %v2451
      %2516 = vst [vmem:[%s437 + $0x30] sm:$0xff] %v2452
      %2517 = vst [vmem:[%s437 + $0x38] sm:$0xff] %v2453
      %2518 = vst [vmem:[%s437 + $0x40] sm:$0xff] %v2454
      %2519 = vst [vmem:[%s437 + $0x48] sm:$0xff] %v2455
      %2520 = vst [vmem:[%s437 + $0x50] sm:$0xff] %v2456
      %2521 = vst [vmem:[%s437 + $0x58] sm:$0xff] %v2457
      %2522 = vst [vmem:[%s437 + $0x60] sm:$0xff] %v2458
      %2523 = vst [vmem:[%s437 + $0x68] sm:$0xff] %v2459
      %2524 = vst [vmem:[%s437 + $0x70] sm:$0xff] %v2460
      %2525 = vst [vmem:[%s437 + $0x78] sm:$0xff] %v2461
      %2526 = vst [vmem:[%s437 + $0x80] sm:$0xff] %v2462
      %2527 = vst [vmem:[%s437 + $0x88] sm:$0xff] %v2463
      %2528 = vst [vmem:[%s437 + $0x90] sm:$0xff] %v2464
      %2529 = vst [vmem:[%s437 + $0x98] sm:$0xff] %v2465
      %2530 = vst [vmem:[%s437 + $0xa0] sm:$0xff] %v2466
      %2531 = vst [vmem:[%s437 + $0xa8] sm:$0xff] %v2467
      %2532 = vst [vmem:[%s437 + $0xb0] sm:$0xff] %v2468
      %2533 = vst [vmem:[%s437 + $0xb8] sm:$0xff] %v2469
      %2534 = vst [vmem:[%s437 + $0xc0] sm:$0xff] %v2470
      %2535 = vst [vmem:[%s437 + $0xc8] sm:$0xff] %v2471
      %2536 = vst [vmem:[%s437 + $0xd0] sm:$0xff] %v2472
      %2537 = vst [vmem:[%s437 + $0xd8] sm:$0xff] %v2473
      %2538 = vst [vmem:[%s437 + $0xe0] sm:$0xff] %v2474
      %2539 = vst [vmem:[%s437 + $0xe8] sm:$0xff] %v2475
      %2540 = vst [vmem:[%s437 + $0xf0] sm:$0xff] %v2476
      %2541 = vst [vmem:[%s437 + $0xf8] sm:$0xff] %v2477
      %v2542 = vadd.f32 %v2254, %v2256
      %v2543 = vadd.f32 %v2542, %v2258
      %v2544 = vadd.f32 %v2543, %v2260
      %v2545 = vadd.f32 %v2544, %v2262
      %v2546 = vadd.f32 %v2545, %v2264
      %v2547 = vadd.f32 %v2546, %v2266
      %v2548 = vadd.f32 %v2547, %v2268
      %v2549 = vadd.f32 %v2548, %v2270
      %v2550 = vadd.f32 %v2549, %v2272
      %v2551 = vadd.f32 %v2550, %v2274
      %v2552 = vadd.f32 %v2551, %v2276
      %v2553 = vadd.f32 %v2552, %v2278
      %v2554 = vadd.f32 %v2553, %v2280
      %v2555 = vadd.f32 %v2554, %v2282
      %v2556 = vadd.f32 %v2555, %v2284
      %v2557 = vadd.f32 %v2556, %v2286
      %v2558 = vadd.f32 %v2557, %v2288
      %v2559 = vadd.f32 %v2558, %v2290
      %v2560 = vadd.f32 %v2559, %v2292
      %v2561 = vadd.f32 %v2560, %v2294
      %v2562 = vadd.f32 %v2561, %v2296
      %v2563 = vadd.f32 %v2562, %v2298
      %v2564 = vadd.f32 %v2563, %v2300
      %v2565 = vadd.f32 %v2564, %v2302
      %v2566 = vadd.f32 %v2565, %v2304
      %v2567 = vadd.f32 %v2566, %v2306
      %v2568 = vadd.f32 %v2567, %v2308
      %v2569 = vadd.f32 %v2568, %v2310
      %v2570 = vadd.f32 %v2569, %v2312
      %v2571 = vadd.f32 %v2570, %v2314
      %v2572 = vadd.f32 %v2571, %v2316
      %v2573 = vrot.slane %v2572, 4
      %v2574 = vadd.f32 %v2572, %v2573
      %v2575 = vrot.slane %v2574, 2
      %v2576 = vadd.f32 %v2574, %v2575
      %v2577 = vrot.slane %v2576, 1
      %v2578 = vadd.f32 %v2576, %v2577
      %v2579 = vadd.f32 %v2255, %v2257
      %v2580 = vadd.f32 %v2579, %v2259
      %v2581 = vadd.f32 %v2580, %v2261
      %v2582 = vadd.f32 %v2581, %v2263
      %v2583 = vadd.f32 %v2582, %v2265
      %v2584 = vadd.f32 %v2583, %v2267
      %v2585 = vadd.f32 %v2584, %v2269
      %v2586 = vadd.f32 %v2585, %v2271
      %v2587 = vadd.f32 %v2586, %v2273
      %v2588 = vadd.f32 %v2587, %v2275
      %v2589 = vadd.f32 %v2588, %v2277
      %v2590 = vadd.f32 %v2589, %v2279
      %v2591 = vadd.f32 %v2590, %v2281
      %v2592 = vadd.f32 %v2591, %v2283
      %v2593 = vadd.f32 %v2592, %v2285
      %v2594 = vadd.f32 %v2593, %v2287
      %v2595 = vadd.f32 %v2594, %v2289
      %v2596 = vadd.f32 %v2595, %v2291
      %v2597 = vadd.f32 %v2596, %v2293
      %v2598 = vadd.f32 %v2597, %v2295
      %v2599 = vadd.f32 %v2598, %v2297
      %v2600 = vadd.f32 %v2599, %v2299
      %v2601 = vadd.f32 %v2600, %v2301
      %v2602 = vadd.f32 %v2601, %v2303
      %v2603 = vadd.f32 %v2602, %v2305
      %v2604 = vadd.f32 %v2603, %v2307
      %v2605 = vadd.f32 %v2604, %v2309
      %v2606 = vadd.f32 %v2605, %v2311
      %v2607 = vadd.f32 %v2606, %v2313
      %v2608 = vadd.f32 %v2607, %v2315
      %v2609 = vadd.f32 %v2608, %v2317
      %v2610 = vrot.slane %v2609, 4
      %v2611 = vadd.f32 %v2609, %v2610
      %v2612 = vrot.slane %v2611, 2
      %v2613 = vadd.f32 %v2611, %v2612
      %v2614 = vrot.slane %v2613, 1
      %v2615 = vadd.f32 %v2613, %v2614
      %2616 = vst [vmem:[%s443] sm:$0xff] %v2578
      %2617 = vst [vmem:[%s443 + $0x8] sm:$0xff] %v2615
      %s2618 = smul.u32 32, %s22
      %p2619 = scmp.lt.s32.totalorder %s2618, 63
      %s2620 = scalar_select %p2619, %s2618, 63
      %s2621 = smul.addr %s2620, 2
      %s2622 = smul.addr %s2621, 4
      %s2623 = scalar_lea.vmem %s9, %s2622
      %p2624 = scmp.lt.s32.totalorder %s22, 1
      %s2625 = scalar_select %p2624, %s22, 1
      %s2626 = smul.addr %s2625, 2
      %s2627 = smul.addr %s2626, 8
      %s2628 = scalar_lea.vmem %s10, %s2627
      // Predicated region
      $region57: #{ffm_forward.2} parent=55 // pred_check
        %p2629 = pneg %p249
      $region58: #{ffm_forward.2} parent=55 // pred_check_branch
        %2631 = sbr.rel (%p2629) target = $region60
      $region59: #{ffm_forward.2} parent=55 // pred_region
        %s2632 = smul.u32 32, %s22
      $region60: #{ffm_forward.2} parent=55 // pred_fallthru
        _
      // Predicated region
      $region61: #{ffm_forward.2} parent=55 // pred_check
        %p2633 = pneg %p275
      $region62: #{ffm_forward.2} parent=55 // pred_check_branch
        %2635 = sbr.rel (%p2633) target = $region64
      $region63: #{ffm_forward.2} parent=55 // pred_region
        _
      $region64: #{ffm_forward.2} parent=55 // pred_fallthru
        _
    $region56: #{ffm_forward.2} parent=5 // pred_fallthru
      _
    %p2636 = scmp.le.s32.totalorder 2, %s17
    // Predicated region
    $region65: #{ffm_forward.2} parent=5 // pred_check
      %p2637 = pneg %p2636
    $region66: #{ffm_forward.2} parent=5 // pred_check_branch
      %2639 = sbr.rel (%p2637) target = $region68
    $region67: #{ffm_forward.2} parent=5 // pred_region
      %s2640 = ssub.s32 %s17, 2
      // Predicated region
      $region69: #{ffm_forward.2} parent=67 // pred_check
        %p2641 = pneg %p255
      $region70: #{ffm_forward.2} parent=67 // pred_check_branch
        %2643 = sbr.rel (%p2641) target = $region72
      $region71: #{ffm_forward.2} parent=67 // pred_region
        %s2644 = smul.u32 32, %s23
        %p2645 = scmp.lt.s32.totalorder %s2644, 63
        %s2646 = scalar_select %p2645, %s2644, 63
        %s2647 = smul.addr %s2646, 2
        %s2648 = smul.addr %s2647, 4
        %s2649 = scalar_lea.vmem %s9, %s2648
      $region72: #{ffm_forward.2} parent=67 // pred_fallthru
        _
      // Predicated region
      $region73: #{ffm_forward.2} parent=67 // pred_check
        %p2650 = pneg %p281
      $region74: #{ffm_forward.2} parent=67 // pred_check_branch
        %2652 = sbr.rel (%p2650) target = $region76
      $region75: #{ffm_forward.2} parent=67 // pred_region
        %p2653 = scmp.lt.s32.totalorder %s23, 1
        %s2654 = scalar_select %p2653, %s23, 1
        %s2655 = smul.addr %s2654, 2
        %s2656 = smul.addr %s2655, 8
        %s2657 = scalar_lea.vmem %s10, %s2656
      $region76: #{ffm_forward.2} parent=67 // pred_fallthru
        _
    $region68: #{ffm_forward.2} parent=5 // pred_fallthru
      _
  $region6: #{ffm_forward.2} parent=0 // loop_footer
    %s21 = sadd.s32 1, %s17
  $region7: #{ffm_forward.2} parent=0 // loop_footer_branch
    %16 = sbr.rel target = $region3
  $region8: #{ffm_forward.2} parent=0 // loop_exit
    _

</llo_original>
